<compile_context>
chip_gen: v7x
topology: tpu7x:2x2x1
jax: 0.10.0
libtpu: 0.0.40
codegen_flags: <defaults>
</compile_context>

<pallas_src>
import numpy as np
import jax
import jax.numpy as jnp
from jax import lax
from jax.experimental import pallas as pl
from jax.experimental.pallas import tpu as pltpu

_HIGHEST = jax.lax.Precision.HIGHEST


# ----------------------------- in-kernel math ------------------------------

def _softplus(x):
    # numerically-stable softplus == torch.nn.functional.softplus
    return jnp.log1p(jnp.exp(-jnp.abs(x))) + jnp.maximum(x, 0.0)


def _leaky_relu(x, slope=0.01):   # nn.LeakyReLU() default negative_slope
    return jnp.where(x > 0, x, slope * x)


def _relu(x):
    return jnp.maximum(x, 0.0)


def _sigmoid(x):
    # keep exact form (pl.reciprocal(approx=True) would break 1e-5 allclose)
    return 1.0 / (1.0 + jnp.exp(-x))


def _make_kernel(cfg):
    """Kernel body for a fixed static config."""
    mlp = cfg["mlp_size"]
    gmf = cfg["gmf_size"]
    num_pixels = cfg["num_pixels"]
    num_frames = cfg["num_frames"]
    mlp_specs = cfg["mlp_specs"]      # (row_off, fan_in, fan_out) per layer
    neu_spec = cfg["neu_spec"]
    thr_specs = cfg["thr_specs"]
    mlp_last = cfg["mlp_last"]
    out_rows_padded = cfg["out_rows_padded"]

    def matmul(a, b):
        return jnp.dot(a, b, preferred_element_type=jnp.float32,
                       precision=_HIGHEST)

    def linear(W, h, spec):
        r, fi, fo = spec
        # torch weight stored as (out, in) rows; bias in column `fi`.
        return matmul(W[r:r + fo, 0:fi], h) + W[r:r + fo, fi:fi + 1]

    def kernel(pix_ref, frm_ref, tgt_ref, u_ref, v_ref, w_ref, out_ref):
        tb = pix_ref.shape[1]
        W = w_ref[...]                                    # packed weight slab

        # --- fused embedding gather: lane-dense one-hot matmul on the MXU ---
        onehot_p = (lax.broadcasted_iota(jnp.int32, (num_pixels, tb), 0)
                    == pix_ref[...]).astype(jnp.float32)  # (num_pixels, TB)
        onehot_f = (lax.broadcasted_iota(jnp.int32, (num_frames, tb), 0)
                    == frm_ref[...]).astype(jnp.float32)  # (num_frames, TB)
        u_g = matmul(u_ref[...], onehot_p)                # (mlp+gmf, TB)
        v_g = matmul(v_ref[...], onehot_f)                # (mlp+gmf, TB)

        mlp_u = _softplus(u_g[0:mlp, :])
        mlp_v = _softplus(v_g[0:mlp, :])
        gmf_x = (_softplus(u_g[mlp:mlp + gmf, :])
                 * _softplus(v_g[mlp:mlp + gmf, :]))

        # --- MLP branch: torch cat([mlp_u, mlp_v]) folded into a split matmul
        r0, fi0, fo0 = mlp_specs[0]
        h = _leaky_relu(matmul(W[r0:r0 + fo0, 0:mlp], mlp_u)
                        + matmul(W[r0:r0 + fo0, mlp:2 * mlp], mlp_v)
                        + W[r0:r0 + fo0, fi0:fi0 + 1])
        for spec in mlp_specs[1:]:
            h = _leaky_relu(linear(W, h, spec))

        # --- neu_mf: Linear(cat([mlp_out, gmf]), 1) + Sigmoid (split matmul)
        rn, fin, fon = neu_spec
        neu = _sigmoid(matmul(W[rn:rn + fon, 0:mlp_last], h)
                       + matmul(W[rn:rn + fon, mlp_last:mlp_last + gmf], gmf_x)
                       + W[rn:rn + fon, fin:fin + 1])     # (1, TB)

        # --- threshold MLP on (target - neu): Linear + ReLU chain -----------
        s = tgt_ref[...] - neu
        for spec in thr_specs:
            s = _relu(linear(W, s, spec))

        # --- single unmasked 8-row store: row 0 = neu, rows 1: = s ----------
        pieces = [neu, s]
        pad_rows = out_rows_padded - 1 - s.shape[0]
        if pad_rows > 0:
            pieces.append(jnp.zeros((pad_rows, tb), jnp.float32))
        out_ref[...] = jnp.concatenate(pieces, axis=0)

    return kernel


# --------------------------- parameter packing ------------------------------

def _pack_weights(params):
    """Pack every Linear (W, b) into one slab with 8-aligned row offsets."""
    layers = (list(params["mlp_wb"])
              + [(params["neu_w"], params["neu_b"])]
              + list(params["thr_wb"]))
    fis = [int(w.shape[0]) for w, _ in layers]
    fos = [int(w.shape[1]) for w, _ in layers]
    specs, r = [], 0
    for fi, fo in zip(fis, fos):
        specs.append((r, fi, fo))
        r = ((r + fo + 7) // 8) * 8           # 8-align next layer's rows
    R, C = r, max(fis) + 1                    # bias lives in the last used col
    slab = np.zeros((R, C), np.float32)
    for (w, b), (ro, fi, fo) in zip(layers, specs):
        slab[ro:ro + fo, 0:fi] = np.asarray(w, np.float32).T   # (out, in)
        slab[ro:ro + fo, fi] = np.asarray(b, np.float32)
    n_mlp = len(params["mlp_wb"])
    return jnp.asarray(slab), specs[:n_mlp], specs[n_mlp], specs[n_mlp + 1:]


def pack_nnmf_params(params):
    """One-time prep: weight slab + transposed/packed embedding tables."""
    mlp, gmf = params["mlp_size"], params["gmf_size"]
    # TODO(synk): mlp_size==0 / gmf_size==0 branches of the torch forward are
    #             not implemented in this kernel (this config uses both).
    assert mlp > 0 and gmf > 0
    w_slab, mlp_specs, neu_spec, thr_specs = _pack_weights(params)
    # (mlp+gmf, num_pixels) and (mlp+gmf, num_frames) VMEM-resident slabs.
    u_slab = jnp.concatenate([params["mlp_u"], params["gmf_u"]],
                             axis=1).T.astype(jnp.float32)
    v_slab = jnp.concatenate([params["mlp_v"], params["gmf_v"]],
                             axis=1).T.astype(jnp.float32)
    t_last = int(params["thr_wb"][-1][0].shape[1])
    cfg = dict(
        mlp_size=mlp, gmf_size=gmf,
        num_pixels=int(u_slab.shape[1]), num_frames=int(v_slab.shape[1]),
        mlp_specs=tuple(mlp_specs), neu_spec=neu_spec,
        thr_specs=tuple(thr_specs),
        mlp_last=int(params["mlp_wb"][-1][0].shape[1]),
        t_last=t_last,
        out_rows_padded=((1 + t_last + 7) // 8) * 8,
    )
    return dict(cfg=cfg, w_slab=w_slab, u_slab=u_slab, v_slab=v_slab)


# ------------------------------ host wrapper -------------------------------

def _default_block_b(B):
    """Chip-aware batch block: 2 blocks only where there are 2 TensorCores."""
    try:
        kind = jax.devices()[0].device_kind.lower()
    except Exception:
        kind = ""
    if "v7" in kind and B % 256 == 0:
        return B // 2          # two lane-dense "parallel" blocks -> both TCs
    return B                   # single grid step on 1-TC chips (v5e / v6e)


def nnmf_forward(packed, pixel, frame, target, block_b=None,
                 return_fused=False):
    cfg = packed["cfg"]
    B = int(pixel.shape[0])
    if block_b is None:
        block_b = _default_block_b(B)
    if B % block_b != 0 or (block_b != B and block_b % 128 != 0):
        block_b = B            # fall back to one full-batch (lane-safe) block

    E = cfg["mlp_size"] + cfg["gmf_size"]
    NP, NF = cfg["num_pixels"], cfg["num_frames"]
    R, C = (int(d) for d in packed["w_slab"].shape)
    out_rows = cfg["out_rows_padded"]

    pixel2d = pixel.reshape(1, B).astype(jnp.int32)
    frame2d = frame.reshape(1, B).astype(jnp.int32)
    target2d = target.reshape(1, B).astype(jnp.float32)

    kernel = _make_kernel(cfg)

    out = pl.pallas_call(
        kernel,
        out_shape=jax.ShapeDtypeStruct((out_rows, B), jnp.float32),
        grid_spec=pltpu.PrefetchScalarGridSpec(
            num_scalar_prefetch=0,
            grid=(B // block_b,),
            in_specs=[
                pl.BlockSpec((1, block_b), lambda i: (0, i)),   # pixel idx
                pl.BlockSpec((1, block_b), lambda i: (0, i)),   # frame idx
                pl.BlockSpec((1, block_b), lambda i: (0, i)),   # target
                pl.BlockSpec((E, NP), lambda i: (0, 0)),        # u tables
                pl.BlockSpec((E, NF), lambda i: (0, 0)),        # v tables
                pl.BlockSpec((R, C), lambda i: (0, 0)),         # weight slab
            ],
            out_specs=pl.BlockSpec((out_rows, block_b), lambda i: (0, i)),
        ),
        compiler_params=pltpu.CompilerParams(
            dimension_semantics=("parallel",)),
    )(pixel2d, frame2d, target2d,
      packed["u_slab"], packed["v_slab"], packed["w_slab"])

    if return_fused:
        return out                      # (out_rows, B) batch-on-lanes slab
    out_t = out[:1 + cfg["t_last"], :].T          # one small transpose
    return out_t[:, 0:1], out_t[:, 1:]            # (B,1), (B,t_last)


# --------------------------- deterministic params --------------------------

def init_params(key, num_pixels, num_frames, gmf_size, mlp_size,
                mlp_layers, threshold_layers):
    def softminus(y):   # inverse of softplus, matches torch set_matrix init
        return jnp.log(jnp.expm1(y))

    keys = iter(jax.random.split(key, 64))

    def emb(rows, dim):
        return softminus(0.5 + 0.01 * jax.random.normal(
            next(keys), (rows, dim), jnp.float32))

    def linear(fan_in, fan_out):
        w = jax.random.normal(next(keys), (fan_in, fan_out),
                              jnp.float32) / np.sqrt(fan_in)
        b = 0.01 * jax.random.normal(next(keys), (fan_out,), jnp.float32)
        return w, b

    params = dict(gmf_size=gmf_size, mlp_size=mlp_size)
    params["gmf_u"] = emb(num_pixels, gmf_size)
    params["gmf_v"] = emb(num_frames, gmf_size)
    params["mlp_u"] = emb(num_pixels, mlp_size)
    params["mlp_v"] = emb(num_frames, mlp_size)

    dims = [2 * mlp_size] + list(mlp_layers)
    params["mlp_wb"] = [linear(dims[j], dims[j + 1])
                        for j in range(len(mlp_layers))]
    neu_in = mlp_layers[-1] * (mlp_size > 0) + gmf_size
    params["neu_w"], params["neu_b"] = linear(neu_in, 1)
    tdims = [1] + list(threshold_layers)
    params["thr_wb"] = [linear(tdims[j], tdims[j + 1])
                        for j in range(len(threshold_layers))]
    return params


# ------------------------------ pure-JAX ref --------------------------------

def nnmf_forward_ref(params, pixel, frame, target):
    sp = jax.nn.softplus
    h = jnp.concatenate([sp(params["mlp_u"][pixel]),
                         sp(params["mlp_v"][frame])], axis=1)
    for w, b in params["mlp_wb"]:
        h = jax.nn.leaky_relu(h @ w + b, 0.01)
    gmf = sp(params["gmf_u"][pixel]) * sp(params["gmf_v"][frame])
    neu_in = jnp.concatenate([h, gmf], axis=1)
    neu_out = jax.nn.sigmoid(neu_in @ params["neu_w"] + params["neu_b"])
    s = target.reshape(-1, 1) - neu_out
    for w, b in params["thr_wb"]:
        s = jax.nn.relu(s @ w + b)
    return neu_out, s


# ----------------------------------- main -----------------------------------

if __name__ == "__main__":
    key = jax.random.PRNGKey(0)
    kp, k1, k2, k3 = jax.random.split(key, 4)

    # small NNMF config: gmf_size=8, mlp_size=8, mlp_layers=[16, 8],
    # threshold_layers=[4, 4]; matrix is 256 pixels x 32 frames; batch=256.
    num_pixels, num_frames = 256, 32
    gmf_size, mlp_size = 8, 8
    mlp_layers = [16, 8]
    threshold_layers = [4, 4]
    B = 256

    params = init_params(kp, num_pixels, num_frames, gmf_size, mlp_size,
                         mlp_layers, threshold_layers)
    packed = pack_nnmf_params(params)          # one-time prep, reused per call

    pixel = jax.random.randint(k1, (B,), 0, num_pixels, dtype=jnp.int32)
    frame = jax.random.randint(k2, (B,), 0, num_frames, dtype=jnp.int32)
    target = jax.random.uniform(k3, (B, 1), jnp.float32)

    neu_out, s_out = nnmf_forward(packed, pixel, frame, target)
    jax.block_until_ready((neu_out, s_out))

    ref_neu, ref_s = nnmf_forward_ref(params, pixel, frame, target)
    assert neu_out.shape == (B, 1) and s_out.shape == (B, threshold_layers[-1])
    assert jnp.allclose(neu_out, ref_neu, atol=1e-5, rtol=1e-5)
    assert jnp.allclose(s_out, ref_s, atol=1e-5, rtol=1e-5)

    print("KERNEL_OK")
</pallas_src>

<mosaic_0001>
module attributes {stable_mosaic.version = 11 : i64} {
  func.func @kernel(%arg0: i32, %arg1: memref<1x256xi32, #tpu.memory_space<vmem>>, %arg2: memref<1x256xi32, #tpu.memory_space<vmem>>, %arg3: memref<1x256xf32, #tpu.memory_space<vmem>>, %arg4: memref<16x256xf32, #tpu.memory_space<vmem>>, %arg5: memref<16x32xf32, #tpu.memory_space<vmem>>, %arg6: memref<48x17xf32, #tpu.memory_space<vmem>>, %arg7: memref<8x256xf32, #tpu.memory_space<vmem>>) attributes {dimension_semantics = [#tpu.dimension_semantics<parallel>], iteration_bounds = array<i64: 1>, scalar_prefetch = 0 : i64, scratch_operands = 0 : i64, tpu.core_type = #tpu.core_type<tc>, window_params = [{transform_indices = @transform_0, window_bounds = array<i64: 1, 256>}, {transform_indices = @transform_1, window_bounds = array<i64: 1, 256>}, {transform_indices = @transform_2, window_bounds = array<i64: 1, 256>}, {pipeline_mode = #tpu.pipeline_mode<synchronous>, transform_indices = @transform_3, window_bounds = array<i64: 16, 256>}, {pipeline_mode = #tpu.pipeline_mode<synchronous>, transform_indices = @transform_4, window_bounds = array<i64: 16, 32>}, {pipeline_mode = #tpu.pipeline_mode<synchronous>, transform_indices = @transform_5, window_bounds = array<i64: 48, 17>}, {transform_indices = @transform_6, window_bounds = array<i64: 8, 256>}]} {
    %c0 = arith.constant 0 : index
    %c0_0 = arith.constant 0 : index
    %0 = vector.load %arg6[%c0, %c0_0] : memref<48x17xf32, #tpu.memory_space<vmem>>, vector<48x17xf32>
    %1 = tpu.iota {dimensions = array<i32: 0>} : vector<256x256xi32>
    %c0_1 = arith.constant 0 : index
    %c0_2 = arith.constant 0 : index
    %2 = vector.load %arg1[%c0_1, %c0_2] : memref<1x256xi32, #tpu.memory_space<vmem>>, vector<1x256xi32>
    %3 = vector.broadcast %2 : vector<1x256xi32> to vector<256x256xi32>
    %4 = arith.cmpi eq, %1, %3 : vector<256x256xi32>
    %5 = arith.extui %4 : vector<256x256xi1> to vector<256x256xi32>
    %6 = arith.sitofp %5 : vector<256x256xi32> to vector<256x256xf32>
    %7 = tpu.iota {dimensions = array<i32: 0>} : vector<32x256xi32>
    %c0_3 = arith.constant 0 : index
    %c0_4 = arith.constant 0 : index
    %8 = vector.load %arg2[%c0_3, %c0_4] : memref<1x256xi32, #tpu.memory_space<vmem>>, vector<1x256xi32>
    %9 = vector.broadcast %8 : vector<1x256xi32> to vector<32x256xi32>
    %10 = arith.cmpi eq, %7, %9 : vector<32x256xi32>
    %11 = arith.extui %10 : vector<32x256xi1> to vector<32x256xi32>
    %12 = arith.sitofp %11 : vector<32x256xi32> to vector<32x256xf32>
    %c0_5 = arith.constant 0 : index
    %c0_6 = arith.constant 0 : index
    %13 = vector.load %arg4[%c0_5, %c0_6] : memref<16x256xf32, #tpu.memory_space<vmem>>, vector<16x256xf32>
    %cst = arith.constant dense<0.000000e+00> : vector<16x256xf32>
    %14 = tpu.matmul %13, %6, %cst {dimension_numbers = #tpu.dot_dimension_numbers<[1], [0], [0], [1], [0, 0, 1, 1], [], []>, precision = #tpu.contract_precision<fp32>} : vector<16x256xf32>, vector<256x256xf32>, vector<16x256xf32> -> vector<16x256xf32>
    %c0_7 = arith.constant 0 : index
    %c0_8 = arith.constant 0 : index
    %15 = vector.load %arg5[%c0_7, %c0_8] : memref<16x32xf32, #tpu.memory_space<vmem>>, vector<16x32xf32>
    %cst_9 = arith.constant dense<0.000000e+00> : vector<16x256xf32>
    %16 = tpu.matmul %15, %12, %cst_9 {dimension_numbers = #tpu.dot_dimension_numbers<[1], [0], [0], [1], [0, 0, 1, 1], [], []>, precision = #tpu.contract_precision<fp32>} : vector<16x32xf32>, vector<32x256xf32>, vector<16x256xf32> -> vector<16x256xf32>
    %17 = vector.extract_strided_slice %14 {offsets = [0, 0], sizes = [8, 256], strides = [1, 1]} : vector<16x256xf32> to vector<8x256xf32>
    %18 = math.absf %17 : vector<8x256xf32>
    %cst_10 = arith.constant 0.000000e+00 : f32
    %19 = vector.broadcast %cst_10 : f32 to vector<8x256xf32>
    %20 = arith.subf %19, %18 : vector<8x256xf32>
    %21 = math.exp %20 : vector<8x256xf32>
    %22 = math.log1p %21 : vector<8x256xf32>
    %cst_11 = arith.constant 0.000000e+00 : f32
    %23 = vector.broadcast %cst_11 : f32 to vector<8x256xf32>
    %24 = arith.maximumf %17, %23 : vector<8x256xf32>
    %25 = arith.addf %22, %24 : vector<8x256xf32>
    %26 = vector.extract_strided_slice %16 {offsets = [0, 0], sizes = [8, 256], strides = [1, 1]} : vector<16x256xf32> to vector<8x256xf32>
    %27 = math.absf %26 : vector<8x256xf32>
    %cst_12 = arith.constant 0.000000e+00 : f32
    %28 = vector.broadcast %cst_12 : f32 to vector<8x256xf32>
    %29 = arith.subf %28, %27 : vector<8x256xf32>
    %30 = math.exp %29 : vector<8x256xf32>
    %31 = math.log1p %30 : vector<8x256xf32>
    %cst_13 = arith.constant 0.000000e+00 : f32
    %32 = vector.broadcast %cst_13 : f32 to vector<8x256xf32>
    %33 = arith.maximumf %26, %32 : vector<8x256xf32>
    %34 = arith.addf %31, %33 : vector<8x256xf32>
    %35 = vector.extract_strided_slice %14 {offsets = [8, 0], sizes = [8, 256], strides = [1, 1]} : vector<16x256xf32> to vector<8x256xf32>
    %36 = math.absf %35 : vector<8x256xf32>
    %cst_14 = arith.constant 0.000000e+00 : f32
    %37 = vector.broadcast %cst_14 : f32 to vector<8x256xf32>
    %38 = arith.subf %37, %36 : vector<8x256xf32>
    %39 = math.exp %38 : vector<8x256xf32>
    %40 = math.log1p %39 : vector<8x256xf32>
    %cst_15 = arith.constant 0.000000e+00 : f32
    %41 = vector.broadcast %cst_15 : f32 to vector<8x256xf32>
    %42 = arith.maximumf %35, %41 : vector<8x256xf32>
    %43 = arith.addf %40, %42 : vector<8x256xf32>
    %44 = vector.extract_strided_slice %16 {offsets = [8, 0], sizes = [8, 256], strides = [1, 1]} : vector<16x256xf32> to vector<8x256xf32>
    %45 = math.absf %44 : vector<8x256xf32>
    %cst_16 = arith.constant 0.000000e+00 : f32
    %46 = vector.broadcast %cst_16 : f32 to vector<8x256xf32>
    %47 = arith.subf %46, %45 : vector<8x256xf32>
    %48 = math.exp %47 : vector<8x256xf32>
    %49 = math.log1p %48 : vector<8x256xf32>
    %cst_17 = arith.constant 0.000000e+00 : f32
    %50 = vector.broadcast %cst_17 : f32 to vector<8x256xf32>
    %51 = arith.maximumf %44, %50 : vector<8x256xf32>
    %52 = arith.addf %49, %51 : vector<8x256xf32>
    %53 = arith.mulf %43, %52 : vector<8x256xf32>
    %54 = vector.extract_strided_slice %0 {offsets = [0, 0], sizes = [16, 8], strides = [1, 1]} : vector<48x17xf32> to vector<16x8xf32>
    %cst_18 = arith.constant dense<0.000000e+00> : vector<16x256xf32>
    %55 = tpu.matmul %54, %25, %cst_18 {dimension_numbers = #tpu.dot_dimension_numbers<[1], [0], [0], [1], [0, 0, 1, 1], [], []>, precision = #tpu.contract_precision<fp32>} : vector<16x8xf32>, vector<8x256xf32>, vector<16x256xf32> -> vector<16x256xf32>
    %56 = vector.extract_strided_slice %0 {offsets = [0, 8], sizes = [16, 8], strides = [1, 1]} : vector<48x17xf32> to vector<16x8xf32>
    %cst_19 = arith.constant dense<0.000000e+00> : vector<16x256xf32>
    %57 = tpu.matmul %56, %34, %cst_19 {dimension_numbers = #tpu.dot_dimension_numbers<[1], [0], [0], [1], [0, 0, 1, 1], [], []>, precision = #tpu.contract_precision<fp32>} : vector<16x8xf32>, vector<8x256xf32>, vector<16x256xf32> -> vector<16x256xf32>
    %58 = arith.addf %55, %57 : vector<16x256xf32>
    %59 = vector.extract_strided_slice %0 {offsets = [0, 16], sizes = [16, 1], strides = [1, 1]} : vector<48x17xf32> to vector<16x1xf32>
    %60 = vector.broadcast %59 : vector<16x1xf32> to vector<16x256xf32>
    %61 = arith.addf %58, %60 : vector<16x256xf32>
    %cst_20 = arith.constant 0.000000e+00 : f32
    %62 = vector.broadcast %cst_20 : f32 to vector<16x256xf32>
    %63 = arith.cmpf ogt, %61, %62 : vector<16x256xf32>
    %cst_21 = arith.constant 0.00999999977 : f32
    %64 = vector.broadcast %cst_21 : f32 to vector<16x256xf32>
    %65 = arith.mulf %64, %61 : vector<16x256xf32>
    %66 = arith.select %63, %61, %65 : vector<16x256xi1>, vector<16x256xf32>
    %67 = vector.extract_strided_slice %0 {offsets = [16, 0], sizes = [8, 16], strides = [1, 1]} : vector<48x17xf32> to vector<8x16xf32>
    %cst_22 = arith.constant dense<0.000000e+00> : vector<8x256xf32>
    %68 = tpu.matmul %67, %66, %cst_22 {dimension_numbers = #tpu.dot_dimension_numbers<[1], [0], [0], [1], [0, 0, 1, 1], [], []>, precision = #tpu.contract_precision<fp32>} : vector<8x16xf32>, vector<16x256xf32>, vector<8x256xf32> -> vector<8x256xf32>
    %69 = vector.extract_strided_slice %0 {offsets = [16, 16], sizes = [8, 1], strides = [1, 1]} : vector<48x17xf32> to vector<8x1xf32>
    %70 = vector.broadcast %69 : vector<8x1xf32> to vector<8x256xf32>
    %71 = arith.addf %68, %70 : vector<8x256xf32>
    %cst_23 = arith.constant 0.000000e+00 : f32
    %72 = vector.broadcast %cst_23 : f32 to vector<8x256xf32>
    %73 = arith.cmpf ogt, %71, %72 : vector<8x256xf32>
    %cst_24 = arith.constant 0.00999999977 : f32
    %74 = vector.broadcast %cst_24 : f32 to vector<8x256xf32>
    %75 = arith.mulf %74, %71 : vector<8x256xf32>
    %76 = arith.select %73, %71, %75 : vector<8x256xi1>, vector<8x256xf32>
    %77 = vector.extract_strided_slice %0 {offsets = [24, 0], sizes = [1, 8], strides = [1, 1]} : vector<48x17xf32> to vector<1x8xf32>
    %cst_25 = arith.constant dense<0.000000e+00> : vector<1x256xf32>
    %78 = tpu.matmul %77, %76, %cst_25 {dimension_numbers = #tpu.dot_dimension_numbers<[1], [0], [0], [1], [0, 0, 1, 1], [], []>, precision = #tpu.contract_precision<fp32>} : vector<1x8xf32>, vector<8x256xf32>, vector<1x256xf32> -> vector<1x256xf32>
    %79 = vector.extract_strided_slice %0 {offsets = [24, 8], sizes = [1, 8], strides = [1, 1]} : vector<48x17xf32> to vector<1x8xf32>
    %cst_26 = arith.constant dense<0.000000e+00> : vector<1x256xf32>
    %80 = tpu.matmul %79, %53, %cst_26 {dimension_numbers = #tpu.dot_dimension_numbers<[1], [0], [0], [1], [0, 0, 1, 1], [], []>, precision = #tpu.contract_precision<fp32>} : vector<1x8xf32>, vector<8x256xf32>, vector<1x256xf32> -> vector<1x256xf32>
    %81 = arith.addf %78, %80 : vector<1x256xf32>
    %82 = vector.extract_strided_slice %0 {offsets = [24, 16], sizes = [1, 1], strides = [1, 1]} : vector<48x17xf32> to vector<1x1xf32>
    %83 = vector.broadcast %82 : vector<1x1xf32> to vector<1x256xf32>
    %84 = arith.addf %81, %83 : vector<1x256xf32>
    %cst_27 = arith.constant 0.000000e+00 : f32
    %85 = vector.broadcast %cst_27 : f32 to vector<1x256xf32>
    %86 = arith.subf %85, %84 : vector<1x256xf32>
    %87 = math.exp %86 : vector<1x256xf32>
    %cst_28 = arith.constant 1.000000e+00 : f32
    %88 = vector.broadcast %cst_28 : f32 to vector<1x256xf32>
    %89 = arith.addf %88, %87 : vector<1x256xf32>
    %cst_29 = arith.constant 1.000000e+00 : f32
    %90 = vector.broadcast %cst_29 : f32 to vector<1x256xf32>
    %91 = arith.divf %90, %89 : vector<1x256xf32>
    %c0_30 = arith.constant 0 : index
    %c0_31 = arith.constant 0 : index
    %92 = vector.load %arg3[%c0_30, %c0_31] : memref<1x256xf32, #tpu.memory_space<vmem>>, vector<1x256xf32>
    %93 = arith.subf %92, %91 : vector<1x256xf32>
    %94 = vector.extract_strided_slice %0 {offsets = [32, 0], sizes = [4, 1], strides = [1, 1]} : vector<48x17xf32> to vector<4x1xf32>
    %cst_32 = arith.constant dense<0.000000e+00> : vector<4x256xf32>
    %95 = tpu.matmul %94, %93, %cst_32 {dimension_numbers = #tpu.dot_dimension_numbers<[1], [0], [0], [1], [0, 0, 1, 1], [], []>, precision = #tpu.contract_precision<fp32>} : vector<4x1xf32>, vector<1x256xf32>, vector<4x256xf32> -> vector<4x256xf32>
    %96 = vector.extract_strided_slice %0 {offsets = [32, 1], sizes = [4, 1], strides = [1, 1]} : vector<48x17xf32> to vector<4x1xf32>
    %97 = vector.broadcast %96 : vector<4x1xf32> to vector<4x256xf32>
    %98 = arith.addf %95, %97 : vector<4x256xf32>
    %cst_33 = arith.constant 0.000000e+00 : f32
    %99 = vector.broadcast %cst_33 : f32 to vector<4x256xf32>
    %100 = arith.maximumf %98, %99 : vector<4x256xf32>
    %101 = vector.extract_strided_slice %0 {offsets = [40, 0], sizes = [4, 4], strides = [1, 1]} : vector<48x17xf32> to vector<4x4xf32>
    %cst_34 = arith.constant dense<0.000000e+00> : vector<4x256xf32>
    %102 = tpu.matmul %101, %100, %cst_34 {dimension_numbers = #tpu.dot_dimension_numbers<[1], [0], [0], [1], [0, 0, 1, 1], [], []>, precision = #tpu.contract_precision<fp32>} : vector<4x4xf32>, vector<4x256xf32>, vector<4x256xf32> -> vector<4x256xf32>
    %103 = vector.extract_strided_slice %0 {offsets = [40, 4], sizes = [4, 1], strides = [1, 1]} : vector<48x17xf32> to vector<4x1xf32>
    %104 = vector.broadcast %103 : vector<4x1xf32> to vector<4x256xf32>
    %105 = arith.addf %102, %104 : vector<4x256xf32>
    %cst_35 = arith.constant 0.000000e+00 : f32
    %106 = vector.broadcast %cst_35 : f32 to vector<4x256xf32>
    %107 = arith.maximumf %105, %106 : vector<4x256xf32>
    %cst_36 = arith.constant 0.000000e+00 : f32
    %108 = vector.broadcast %cst_36 : f32 to vector<3x256xf32>
    %109 = tpu.concatenate %91, %107, %108 in 0 : vector<1x256xf32>, vector<4x256xf32>, vector<3x256xf32> -> vector<8x256xf32>
    %c0_37 = arith.constant 0 : index
    %c0_38 = arith.constant 0 : index
    %110 = vector.load %arg7[%c0_37, %c0_38] : memref<8x256xf32, #tpu.memory_space<vmem>>, vector<8x256xf32>
    tpu.vector_store %arg7[%c0_37, %c0_38], %109 {strides = array<i32>} : memref<8x256xf32, #tpu.memory_space<vmem>>, vector<8x256xf32>,
    return
  }
  func.func @transform_0(%arg0: i32) -> (i32, i32) {
    %c0_i32 = arith.constant 0 : i32
    %c0_i32_0 = arith.constant 0 : i32
    return %c0_i32, %arg0 : i32, i32
  }
  func.func @transform_1(%arg0: i32) -> (i32, i32) {
    %c0_i32 = arith.constant 0 : i32
    %c0_i32_0 = arith.constant 0 : i32
    return %c0_i32, %arg0 : i32, i32
  }
  func.func @transform_2(%arg0: i32) -> (i32, i32) {
    %c0_i32 = arith.constant 0 : i32
    %c0_i32_0 = arith.constant 0 : i32
    return %c0_i32, %arg0 : i32, i32
  }
  func.func @transform_3(%arg0: i32) -> (i32, i32) {
    %c0_i32 = arith.constant 0 : i32
    %c0_i32_0 = arith.constant 0 : i32
    %c0_i32_1 = arith.constant 0 : i32
    return %c0_i32, %c0_i32_0 : i32, i32
  }
  func.func @transform_4(%arg0: i32) -> (i32, i32) {
    %c0_i32 = arith.constant 0 : i32
    %c0_i32_0 = arith.constant 0 : i32
    %c0_i32_1 = arith.constant 0 : i32
    return %c0_i32, %c0_i32_0 : i32, i32
  }
  func.func @transform_5(%arg0: i32) -> (i32, i32) {
    %c0_i32 = arith.constant 0 : i32
    %c0_i32_0 = arith.constant 0 : i32
    %c0_i32_1 = arith.constant 0 : i32
    return %c0_i32, %c0_i32_0 : i32, i32
  }
  func.func @transform_6(%arg0: i32) -> (i32, i32) {
    %c0_i32 = arith.constant 0 : i32
    %c0_i32_0 = arith.constant 0 : i32
    return %c0_i32, %arg0 : i32, i32
  }
}

</mosaic_0001>

<llo_original>
// kernel: tpu_custom_call.1
$region0: #{tpu_custom_call.1}
  #allocation0 [shape = 'u32[]', space=smem, size = 0x4, offset = 0x4, fixed_abs, tag = 'smem constant byte address 0x4 - core index']
  #allocation1 [shape = 'u32[144,128]{1,0:T(1,128)}', space=vmem, size = 0x12000, scoped, tag = 'internal scratch']
  %s0 = inlined_call_operand.vmem [shape: s32[1,256], index: 0, kind: input, shape index: {}]
  %s1 = inlined_call_operand.vmem [shape: s32[1,256], index: 1, kind: input, shape index: {}]
  %s2 = inlined_call_operand.vmem [shape: f32[1,256], index: 2, kind: input, shape index: {}]
  %s3 = inlined_call_operand.vmem [shape: f32[16,256], index: 3, kind: input, shape index: {}]
  %s4 = inlined_call_operand.vmem [shape: f32[16,32], index: 4, kind: input, shape index: {}]
  %s5 = inlined_call_operand.vmem [shape: f32[48,17], index: 5, kind: input, shape index: {}]
  %s6 = inlined_call_operand.hbm [shape: f32[8,256], index: 6, kind: output, shape index: {}]
  %s7 = sld [smem:[#allocation0]]
  $region34: #{tpu_custom_call.1} parent=0
    _
  %s9 = ssub.s32 1, %s7
  %s10 = scalar_select 0, %s9, %s7
  $region1: #{tpu_custom_call.1} parent=0
    #allocation2 [shape = 'u8[8192]{0}', space=vmem, size = 0x2000, scoped, tag = 'output window, operand 0, single buffered']
    #allocation3 [shape = 's32[1]{0}', space=sflag, size = 0x4, scoped, tag = 'scoped memory for tpu_custom_call.1']
    %11 = vsyncpa [#allocation3], 0
    // Predicated region
    $region2: #{tpu_custom_call.1} parent=1 // pred_check
      _
    $region3: #{tpu_custom_call.1} parent=1 // pred_check_branch
      %13 = sbr.rel (0) target = $region5
    $region4: #{tpu_custom_call.1} parent=1 // pred_region
      _
    $region5: #{tpu_custom_call.1} parent=1 // pred_fallthru
      _
    // Predicated region
    $region6: #{tpu_custom_call.1} parent=1 // pred_check
      _
    $region7: #{tpu_custom_call.1} parent=1 // pred_check_branch
      %15 = sbr.rel (0) target = $region9
    $region8: #{tpu_custom_call.1} parent=1 // pred_region
      _
    $region9: #{tpu_custom_call.1} parent=1 // pred_fallthru
      _
    // Predicated region
    $region10: #{tpu_custom_call.1} parent=1 // pred_check
      _
    $region11: #{tpu_custom_call.1} parent=1 // pred_check_branch
      %17 = sbr.rel (0) target = $region13
    $region12: #{tpu_custom_call.1} parent=1 // pred_region
      _
    $region13: #{tpu_custom_call.1} parent=1 // pred_fallthru
      _
    // Predicated region
    $region14: #{tpu_custom_call.1} parent=1 // pred_check
      _
    $region15: #{tpu_custom_call.1} parent=1 // pred_check_branch
      %19 = sbr.rel (0) target = $region17
    $region16: #{tpu_custom_call.1} parent=1 // pred_region
      _
    $region17: #{tpu_custom_call.1} parent=1 // pred_fallthru
      _
    // Predicated region
    $region18: #{tpu_custom_call.1} parent=1 // pred_check
      _
    $region19: #{tpu_custom_call.1} parent=1 // pred_check_branch
      %21 = sbr.rel (0) target = $region21
    $region20: #{tpu_custom_call.1} parent=1 // pred_region
      _
    $region21: #{tpu_custom_call.1} parent=1 // pred_fallthru
      _
    // Predicated region
    $region22: #{tpu_custom_call.1} parent=1 // pred_check
      _
    $region23: #{tpu_custom_call.1} parent=1 // pred_check_branch
      %23 = sbr.rel (0) target = $region25
    $region24: #{tpu_custom_call.1} parent=1 // pred_region
      _
    $region25: #{tpu_custom_call.1} parent=1 // pred_fallthru
      _
    %v24 = vld [vmem:[%s5] sm:$0xff]
    %v25 = vld [vmem:[%s5 + $0x8] sm:$0xff]
    %v26 = vld [vmem:[%s5 + $0x10] sm:$0xff]
    %v27 = vld [vmem:[%s5 + $0x18] sm:$0xff]
    %v28 = vld [vmem:[%s5 + $0x20] sm:$0xff]
    %v29 = vld [vmem:[%s5 + $0x28] sm:$0xff]
    %v30 = vlaneseq
    %v31 = vshrl.u32 %v30, 7
    %v32 = vadd.s32 %v31, 8
    %v33 = vadd.s32 %v31, 16
    %v34 = vadd.s32 %v31, 24
    %v35 = vadd.s32 %v31, 32
    %v36 = vadd.s32 %v31, 40
    %v37 = vadd.s32 %v31, 48
    %v38 = vadd.s32 %v31, 56
    %v39 = vadd.s32 %v31, 64
    %v40 = vadd.s32 %v31, 72
    %v41 = vadd.s32 %v31, 80
    %v42 = vadd.s32 %v31, 88
    %v43 = vadd.s32 %v31, 96
    %v44 = vadd.s32 %v31, 104
    %v45 = vadd.s32 %v31, 112
    %v46 = vadd.s32 %v31, 120
    %v47 = vadd.s32 %v31, 128
    %v48 = vadd.s32 %v31, 136
    %v49 = vadd.s32 %v31, 144
    %v50 = vadd.s32 %v31, 152
    %v51 = vadd.s32 %v31, 160
    %v52 = vadd.s32 %v31, 168
    %v53 = vadd.s32 %v31, 176
    %v54 = vadd.s32 %v31, 184
    %v55 = vadd.s32 %v31, 192
    %v56 = vadd.s32 %v31, 200
    %v57 = vadd.s32 %v31, 208
    %v58 = vadd.s32 %v31, 216
    %v59 = vadd.s32 %v31, 224
    %v60 = vadd.s32 %v31, 232
    %v61 = vadd.s32 %v31, 240
    %v62 = vadd.s32 %v31, 248
    %v63 = vld [vmem:[%s0] sm:$0x3]
    %v64 = vlaneseq
    %v65 = vshrl.u32 %v64, 7
    %v66 = vsub.s32 0, %v65
    %v67 = vrot.slane %v63, %v66
    %v68 = vlaneseq
    %v69 = vshrl.u32 %v68, 7
    %v70 = vsub.s32 1, %v69
    %v71 = vrot.slane %v63, %v70
    %vm72 = vcmp.eq.s32.totalorder %v31, %v67
    %vm73 = vcmp.eq.s32.totalorder %v31, %v71
    %vm74 = vcmp.eq.s32.totalorder %v32, %v67
    %vm75 = vcmp.eq.s32.totalorder %v32, %v71
    %vm76 = vcmp.eq.s32.totalorder %v33, %v67
    %vm77 = vcmp.eq.s32.totalorder %v33, %v71
    %vm78 = vcmp.eq.s32.totalorder %v34, %v67
    %vm79 = vcmp.eq.s32.totalorder %v34, %v71
    %vm80 = vcmp.eq.s32.totalorder %v35, %v67
    %vm81 = vcmp.eq.s32.totalorder %v35, %v71
    %vm82 = vcmp.eq.s32.totalorder %v36, %v67
    %vm83 = vcmp.eq.s32.totalorder %v36, %v71
    %vm84 = vcmp.eq.s32.totalorder %v37, %v67
    %vm85 = vcmp.eq.s32.totalorder %v37, %v71
    %vm86 = vcmp.eq.s32.totalorder %v38, %v67
    %vm87 = vcmp.eq.s32.totalorder %v38, %v71
    %vm88 = vcmp.eq.s32.totalorder %v39, %v67
    %vm89 = vcmp.eq.s32.totalorder %v39, %v71
    %vm90 = vcmp.eq.s32.totalorder %v40, %v67
    %vm91 = vcmp.eq.s32.totalorder %v40, %v71
    %vm92 = vcmp.eq.s32.totalorder %v41, %v67
    %vm93 = vcmp.eq.s32.totalorder %v41, %v71
    %vm94 = vcmp.eq.s32.totalorder %v42, %v67
    %vm95 = vcmp.eq.s32.totalorder %v42, %v71
    %vm96 = vcmp.eq.s32.totalorder %v43, %v67
    %vm97 = vcmp.eq.s32.totalorder %v43, %v71
    %vm98 = vcmp.eq.s32.totalorder %v44, %v67
    %vm99 = vcmp.eq.s32.totalorder %v44, %v71
    %vm100 = vcmp.eq.s32.totalorder %v45, %v67
    %vm101 = vcmp.eq.s32.totalorder %v45, %v71
    %vm102 = vcmp.eq.s32.totalorder %v46, %v67
    %vm103 = vcmp.eq.s32.totalorder %v46, %v71
    %vm104 = vcmp.eq.s32.totalorder %v47, %v67
    %vm105 = vcmp.eq.s32.totalorder %v47, %v71
    %vm106 = vcmp.eq.s32.totalorder %v48, %v67
    %vm107 = vcmp.eq.s32.totalorder %v48, %v71
    %vm108 = vcmp.eq.s32.totalorder %v49, %v67
    %vm109 = vcmp.eq.s32.totalorder %v49, %v71
    %vm110 = vcmp.eq.s32.totalorder %v50, %v67
    %vm111 = vcmp.eq.s32.totalorder %v50, %v71
    %vm112 = vcmp.eq.s32.totalorder %v51, %v67
    %vm113 = vcmp.eq.s32.totalorder %v51, %v71
    %vm114 = vcmp.eq.s32.totalorder %v52, %v67
    %vm115 = vcmp.eq.s32.totalorder %v52, %v71
    %vm116 = vcmp.eq.s32.totalorder %v53, %v67
    %vm117 = vcmp.eq.s32.totalorder %v53, %v71
    %vm118 = vcmp.eq.s32.totalorder %v54, %v67
    %vm119 = vcmp.eq.s32.totalorder %v54, %v71
    %vm120 = vcmp.eq.s32.totalorder %v55, %v67
    %vm121 = vcmp.eq.s32.totalorder %v55, %v71
    %vm122 = vcmp.eq.s32.totalorder %v56, %v67
    %vm123 = vcmp.eq.s32.totalorder %v56, %v71
    %vm124 = vcmp.eq.s32.totalorder %v57, %v67
    %vm125 = vcmp.eq.s32.totalorder %v57, %v71
    %vm126 = vcmp.eq.s32.totalorder %v58, %v67
    %vm127 = vcmp.eq.s32.totalorder %v58, %v71
    %vm128 = vcmp.eq.s32.totalorder %v59, %v67
    %vm129 = vcmp.eq.s32.totalorder %v59, %v71
    %vm130 = vcmp.eq.s32.totalorder %v60, %v67
    %vm131 = vcmp.eq.s32.totalorder %v60, %v71
    %vm132 = vcmp.eq.s32.totalorder %v61, %v67
    %vm133 = vcmp.eq.s32.totalorder %v61, %v71
    %vm134 = vcmp.eq.s32.totalorder %v62, %v67
    %vm135 = vcmp.eq.s32.totalorder %v62, %v71
    %v136 = vsel %vm72, 1, 0
    %v137 = vsel %vm73, 1, 0
    %v138 = vsel %vm74, 1, 0
    %v139 = vsel %vm75, 1, 0
    %v140 = vsel %vm76, 1, 0
    %v141 = vsel %vm77, 1, 0
    %v142 = vsel %vm78, 1, 0
    %v143 = vsel %vm79, 1, 0
    %v144 = vsel %vm80, 1, 0
    %v145 = vsel %vm81, 1, 0
    %v146 = vsel %vm82, 1, 0
    %v147 = vsel %vm83, 1, 0
    %v148 = vsel %vm84, 1, 0
    %v149 = vsel %vm85, 1, 0
    %v150 = vsel %vm86, 1, 0
    %v151 = vsel %vm87, 1, 0
    %v152 = vsel %vm88, 1, 0
    %v153 = vsel %vm89, 1, 0
    %v154 = vsel %vm90, 1, 0
    %v155 = vsel %vm91, 1, 0
    %v156 = vsel %vm92, 1, 0
    %v157 = vsel %vm93, 1, 0
    %v158 = vsel %vm94, 1, 0
    %v159 = vsel %vm95, 1, 0
    %v160 = vsel %vm96, 1, 0
    %v161 = vsel %vm97, 1, 0
    %v162 = vsel %vm98, 1, 0
    %v163 = vsel %vm99, 1, 0
    %v164 = vsel %vm100, 1, 0
    %v165 = vsel %vm101, 1, 0
    %v166 = vsel %vm102, 1, 0
    %v167 = vsel %vm103, 1, 0
    %v168 = vsel %vm104, 1, 0
    %v169 = vsel %vm105, 1, 0
    %v170 = vsel %vm106, 1, 0
    %v171 = vsel %vm107, 1, 0
    %v172 = vsel %vm108, 1, 0
    %v173 = vsel %vm109, 1, 0
    %v174 = vsel %vm110, 1, 0
    %v175 = vsel %vm111, 1, 0
    %v176 = vsel %vm112, 1, 0
    %v177 = vsel %vm113, 1, 0
    %v178 = vsel %vm114, 1, 0
    %v179 = vsel %vm115, 1, 0
    %v180 = vsel %vm116, 1, 0
    %v181 = vsel %vm117, 1, 0
    %v182 = vsel %vm118, 1, 0
    %v183 = vsel %vm119, 1, 0
    %v184 = vsel %vm120, 1, 0
    %v185 = vsel %vm121, 1, 0
    %v186 = vsel %vm122, 1, 0
    %v187 = vsel %vm123, 1, 0
    %v188 = vsel %vm124, 1, 0
    %v189 = vsel %vm125, 1, 0
    %v190 = vsel %vm126, 1, 0
    %v191 = vsel %vm127, 1, 0
    %v192 = vsel %vm128, 1, 0
    %v193 = vsel %vm129, 1, 0
    %v194 = vsel %vm130, 1, 0
    %v195 = vsel %vm131, 1, 0
    %v196 = vsel %vm132, 1, 0
    %v197 = vsel %vm133, 1, 0
    %v198 = vsel %vm134, 1, 0
    %v199 = vsel %vm135, 1, 0
    %v200 = vcvt.s32.f32 %v136
    %v201 = vcvt.s32.f32 %v137
    %v202 = vcvt.s32.f32 %v138
    %v203 = vcvt.s32.f32 %v139
    %v204 = vcvt.s32.f32 %v140
    %v205 = vcvt.s32.f32 %v141
    %v206 = vcvt.s32.f32 %v142
    %v207 = vcvt.s32.f32 %v143
    %v208 = vcvt.s32.f32 %v144
    %v209 = vcvt.s32.f32 %v145
    %v210 = vcvt.s32.f32 %v146
    %v211 = vcvt.s32.f32 %v147
    %v212 = vcvt.s32.f32 %v148
    %v213 = vcvt.s32.f32 %v149
    %v214 = vcvt.s32.f32 %v150
    %v215 = vcvt.s32.f32 %v151
    %v216 = vcvt.s32.f32 %v152
    %v217 = vcvt.s32.f32 %v153
    %v218 = vcvt.s32.f32 %v154
    %v219 = vcvt.s32.f32 %v155
    %v220 = vcvt.s32.f32 %v156
    %v221 = vcvt.s32.f32 %v157
    %v222 = vcvt.s32.f32 %v158
    %v223 = vcvt.s32.f32 %v159
    %v224 = vcvt.s32.f32 %v160
    %v225 = vcvt.s32.f32 %v161
    %v226 = vcvt.s32.f32 %v162
    %v227 = vcvt.s32.f32 %v163
    %v228 = vcvt.s32.f32 %v164
    %v229 = vcvt.s32.f32 %v165
    %v230 = vcvt.s32.f32 %v166
    %v231 = vcvt.s32.f32 %v167
    %v232 = vcvt.s32.f32 %v168
    %v233 = vcvt.s32.f32 %v169
    %v234 = vcvt.s32.f32 %v170
    %v235 = vcvt.s32.f32 %v171
    %v236 = vcvt.s32.f32 %v172
    %v237 = vcvt.s32.f32 %v173
    %v238 = vcvt.s32.f32 %v174
    %v239 = vcvt.s32.f32 %v175
    %v240 = vcvt.s32.f32 %v176
    %v241 = vcvt.s32.f32 %v177
    %v242 = vcvt.s32.f32 %v178
    %v243 = vcvt.s32.f32 %v179
    %v244 = vcvt.s32.f32 %v180
    %v245 = vcvt.s32.f32 %v181
    %v246 = vcvt.s32.f32 %v182
    %v247 = vcvt.s32.f32 %v183
    %v248 = vcvt.s32.f32 %v184
    %v249 = vcvt.s32.f32 %v185
    %v250 = vcvt.s32.f32 %v186
    %v251 = vcvt.s32.f32 %v187
    %v252 = vcvt.s32.f32 %v188
    %v253 = vcvt.s32.f32 %v189
    %v254 = vcvt.s32.f32 %v190
    %v255 = vcvt.s32.f32 %v191
    %v256 = vcvt.s32.f32 %v192
    %v257 = vcvt.s32.f32 %v193
    %v258 = vcvt.s32.f32 %v194
    %v259 = vcvt.s32.f32 %v195
    %v260 = vcvt.s32.f32 %v196
    %v261 = vcvt.s32.f32 %v197
    %v262 = vcvt.s32.f32 %v198
    %v263 = vcvt.s32.f32 %v199
    %v264 = vld [vmem:[%s1] sm:$0x3]
    %v265 = vlaneseq
    %v266 = vshrl.u32 %v265, 7
    %v267 = vsub.s32 0, %v266
    %v268 = vrot.slane %v264, %v267
    %v269 = vlaneseq
    %v270 = vshrl.u32 %v269, 7
    %v271 = vsub.s32 1, %v270
    %v272 = vrot.slane %v264, %v271
    %vm273 = vcmp.eq.s32.totalorder %v31, %v268
    %vm274 = vcmp.eq.s32.totalorder %v31, %v272
    %vm275 = vcmp.eq.s32.totalorder %v32, %v268
    %vm276 = vcmp.eq.s32.totalorder %v32, %v272
    %vm277 = vcmp.eq.s32.totalorder %v33, %v268
    %vm278 = vcmp.eq.s32.totalorder %v33, %v272
    %vm279 = vcmp.eq.s32.totalorder %v34, %v268
    %vm280 = vcmp.eq.s32.totalorder %v34, %v272
    %v281 = vsel %vm273, 1, 0
    %v282 = vsel %vm274, 1, 0
    %v283 = vsel %vm275, 1, 0
    %v284 = vsel %vm276, 1, 0
    %v285 = vsel %vm277, 1, 0
    %v286 = vsel %vm278, 1, 0
    %v287 = vsel %vm279, 1, 0
    %v288 = vsel %vm280, 1, 0
    %v289 = vcvt.s32.f32 %v281
    %v290 = vcvt.s32.f32 %v282
    %v291 = vcvt.s32.f32 %v283
    %v292 = vcvt.s32.f32 %v284
    %v293 = vcvt.s32.f32 %v285
    %v294 = vcvt.s32.f32 %v286
    %v295 = vcvt.s32.f32 %v287
    %v296 = vcvt.s32.f32 %v288
    %v297 = vld [vmem:[%s3] sm:$0xff]
    %v298 = vld [vmem:[%s3 + $0x8] sm:$0xff]
    %v299 = vld [vmem:[%s3 + $0x10] sm:$0xff]
    %v300 = vld [vmem:[%s3 + $0x18] sm:$0xff]
    %v301 = vand.u32 %v201, 4294901760
    %302 = vmatprep.subr.mxu0 %v301
    %v303 = vand.u32 %v200, 4294901760
    %304 = vmatpush1.msra.mxu0 %v303
    %v305 = vand.u32 %v203, 4294901760
    %306 = vmatprep.subr.mxu0 %v305
    %v307 = vand.u32 %v202, 4294901760
    %308 = vmatpush1.msra.mxu0 %v307
    %v309 = vand.u32 %v205, 4294901760
    %310 = vmatprep.subr.mxu0 %v309
    %v311 = vand.u32 %v204, 4294901760
    %312 = vmatpush1.msra.mxu0 %v311
    %v313 = vand.u32 %v207, 4294901760
    %314 = vmatprep.subr.mxu0 %v313
    %v315 = vand.u32 %v206, 4294901760
    %316 = vmatpush1.msra.mxu0 %v315
    %v317 = vand.u32 %v209, 4294901760
    %318 = vmatprep.subr.mxu0 %v317
    %v319 = vand.u32 %v208, 4294901760
    %320 = vmatpush1.msra.mxu0 %v319
    %v321 = vand.u32 %v211, 4294901760
    %322 = vmatprep.subr.mxu0 %v321
    %v323 = vand.u32 %v210, 4294901760
    %324 = vmatpush1.msra.mxu0 %v323
    %v325 = vand.u32 %v213, 4294901760
    %326 = vmatprep.subr.mxu0 %v325
    %v327 = vand.u32 %v212, 4294901760
    %328 = vmatpush1.msra.mxu0 %v327
    %v329 = vand.u32 %v215, 4294901760
    %330 = vmatprep.subr.mxu0 %v329
    %v331 = vand.u32 %v214, 4294901760
    %332 = vmatpush1.msra.mxu0 %v331
    %v333 = vand.u32 %v217, 4294901760
    %334 = vmatprep.subr.mxu0 %v333
    %v335 = vand.u32 %v216, 4294901760
    %336 = vmatpush1.msra.mxu0 %v335
    %v337 = vand.u32 %v219, 4294901760
    %338 = vmatprep.subr.mxu0 %v337
    %v339 = vand.u32 %v218, 4294901760
    %340 = vmatpush1.msra.mxu0 %v339
    %v341 = vand.u32 %v221, 4294901760
    %342 = vmatprep.subr.mxu0 %v341
    %v343 = vand.u32 %v220, 4294901760
    %344 = vmatpush1.msra.mxu0 %v343
    %v345 = vand.u32 %v223, 4294901760
    %346 = vmatprep.subr.mxu0 %v345
    %v347 = vand.u32 %v222, 4294901760
    %348 = vmatpush1.msra.mxu0 %v347
    %v349 = vand.u32 %v225, 4294901760
    %350 = vmatprep.subr.mxu0 %v349
    %v351 = vand.u32 %v224, 4294901760
    %352 = vmatpush1.msra.mxu0 %v351
    %v353 = vand.u32 %v227, 4294901760
    %354 = vmatprep.subr.mxu0 %v353
    %v355 = vand.u32 %v226, 4294901760
    %356 = vmatpush1.msra.mxu0 %v355
    %v357 = vand.u32 %v229, 4294901760
    %358 = vmatprep.subr.mxu0 %v357
    %v359 = vand.u32 %v228, 4294901760
    %360 = vmatpush1.msra.mxu0 %v359
    %v361 = vand.u32 %v231, 4294901760
    %362 = vmatprep.subr.mxu0 %v361
    %v363 = vand.u32 %v230, 4294901760
    %364 = vmatpush1.msra.mxu0 %v363
    %v365 = vand.u32 %v233, 4294901760
    %366 = vmatprep.subr.mxu0 %v365
    %v367 = vand.u32 %v232, 4294901760
    %368 = vmatpush1.msra.mxu0 %v367
    %v369 = vand.u32 %v235, 4294901760
    %370 = vmatprep.subr.mxu0 %v369
    %v371 = vand.u32 %v234, 4294901760
    %372 = vmatpush1.msra.mxu0 %v371
    %v373 = vand.u32 %v237, 4294901760
    %374 = vmatprep.subr.mxu0 %v373
    %v375 = vand.u32 %v236, 4294901760
    %376 = vmatpush1.msra.mxu0 %v375
    %v377 = vand.u32 %v239, 4294901760
    %378 = vmatprep.subr.mxu0 %v377
    %v379 = vand.u32 %v238, 4294901760
    %380 = vmatpush1.msra.mxu0 %v379
    %v381 = vand.u32 %v241, 4294901760
    %382 = vmatprep.subr.mxu0 %v381
    %v383 = vand.u32 %v240, 4294901760
    %384 = vmatpush1.msra.mxu0 %v383
    %v385 = vand.u32 %v243, 4294901760
    %386 = vmatprep.subr.mxu0 %v385
    %v387 = vand.u32 %v242, 4294901760
    %388 = vmatpush1.msra.mxu0 %v387
    %v389 = vand.u32 %v245, 4294901760
    %390 = vmatprep.subr.mxu0 %v389
    %v391 = vand.u32 %v244, 4294901760
    %392 = vmatpush1.msra.mxu0 %v391
    %v393 = vand.u32 %v247, 4294901760
    %394 = vmatprep.subr.mxu0 %v393
    %v395 = vand.u32 %v246, 4294901760
    %396 = vmatpush1.msra.mxu0 %v395
    %v397 = vand.u32 %v249, 4294901760
    %398 = vmatprep.subr.mxu0 %v397
    %v399 = vand.u32 %v248, 4294901760
    %400 = vmatpush1.msra.mxu0 %v399
    %v401 = vand.u32 %v251, 4294901760
    %402 = vmatprep.subr.mxu0 %v401
    %v403 = vand.u32 %v250, 4294901760
    %404 = vmatpush1.msra.mxu0 %v403
    %v405 = vand.u32 %v253, 4294901760
    %406 = vmatprep.subr.mxu0 %v405
    %v407 = vand.u32 %v252, 4294901760
    %408 = vmatpush1.msra.mxu0 %v407
    %v409 = vand.u32 %v255, 4294901760
    %410 = vmatprep.subr.mxu0 %v409
    %v411 = vand.u32 %v254, 4294901760
    %412 = vmatpush1.msra.mxu0 %v411
    %v413 = vand.u32 %v257, 4294901760
    %414 = vmatprep.subr.mxu0 %v413
    %v415 = vand.u32 %v256, 4294901760
    %416 = vmatpush1.msra.mxu0 %v415
    %v417 = vand.u32 %v259, 4294901760
    %418 = vmatprep.subr.mxu0 %v417
    %v419 = vand.u32 %v258, 4294901760
    %420 = vmatpush1.msra.mxu0 %v419
    %v421 = vand.u32 %v261, 4294901760
    %422 = vmatprep.subr.mxu0 %v421
    %v423 = vand.u32 %v260, 4294901760
    %424 = vmatpush1.msra.mxu0 %v423
    %v425 = vand.u32 %v263, 4294901760
    %426 = vmatprep.subr.mxu0 %v425
    %v427 = vand.u32 %v262, 4294901760
    %428 = vmatpush1.msra.mxu0 %v427
    %v429 = vand.u32 %v298, 4294901760
    %v430 = vsub.f32 %v298, %v429
    %v431 = vand.u32 %v430, 4294901760
    %v432 = vsub.f32 %v430, %v431
    %v433 = vand.u32 %v432, 4294901760
    %434 = vmatprep.mubr.f32.mxu0 %v433
    %v435 = vand.u32 %v297, 4294901760
    %v436 = vsub.f32 %v297, %v435
    %v437 = vand.u32 %v436, 4294901760
    %v438 = vsub.f32 %v436, %v437
    %v439 = vand.u32 %v438, 4294901760
    %440 = vmatmul.mubr.f32.gmra.mrb[0].mxu0 %v439
    %v441 = vpop.f32.mrb[0].mxu0
    %v442 = vadd.f32 0.0, %v441
    %v443 = vpop.f32.mrb[0].mxu0
    %v444 = vadd.f32 0.0, %v443
    %v445 = vand.u32 %v300, 4294901760
    %v446 = vsub.f32 %v300, %v445
    %v447 = vand.u32 %v446, 4294901760
    %v448 = vsub.f32 %v446, %v447
    %v449 = vand.u32 %v448, 4294901760
    %450 = vmatprep.mubr.f32.mxu0 %v449
    %v451 = vand.u32 %v299, 4294901760
    %v452 = vsub.f32 %v299, %v451
    %v453 = vand.u32 %v452, 4294901760
    %v454 = vsub.f32 %v452, %v453
    %v455 = vand.u32 %v454, 4294901760
    %456 = vmatmul.mubr.f32.gmra.mrb[0].mxu0 %v455
    %v457 = vpop.f32.mrb[0].mxu0
    %v458 = vadd.f32 0.0, %v457
    %v459 = vpop.f32.mrb[0].mxu0
    %v460 = vadd.f32 0.0, %v459
    %461 = vdwg.mxu0
    %v462 = vand.u32 %v201, 4294901760
    %v463 = vsub.f32 %v201, %v462
    %v464 = vand.u32 %v463, 4294901760
    %v465 = vsub.f32 %v463, %v464
    %v466 = vand.u32 %v465, 4294901760
    %467 = vmatprep.subr.mxu0 %v466
    %v468 = vand.u32 %v200, 4294901760
    %v469 = vsub.f32 %v200, %v468
    %v470 = vand.u32 %v469, 4294901760
    %v471 = vsub.f32 %v469, %v470
    %v472 = vand.u32 %v471, 4294901760
    %473 = vmatpush1.msra.mxu0 %v472
    %v474 = vand.u32 %v203, 4294901760
    %v475 = vsub.f32 %v203, %v474
    %v476 = vand.u32 %v475, 4294901760
    %v477 = vsub.f32 %v475, %v476
    %v478 = vand.u32 %v477, 4294901760
    %479 = vmatprep.subr.mxu0 %v478
    %v480 = vand.u32 %v202, 4294901760
    %v481 = vsub.f32 %v202, %v480
    %v482 = vand.u32 %v481, 4294901760
    %v483 = vsub.f32 %v481, %v482
    %v484 = vand.u32 %v483, 4294901760
    %485 = vmatpush1.msra.mxu0 %v484
    %v486 = vand.u32 %v205, 4294901760
    %v487 = vsub.f32 %v205, %v486
    %v488 = vand.u32 %v487, 4294901760
    %v489 = vsub.f32 %v487, %v488
    %v490 = vand.u32 %v489, 4294901760
    %491 = vmatprep.subr.mxu0 %v490
    %v492 = vand.u32 %v204, 4294901760
    %v493 = vsub.f32 %v204, %v492
    %v494 = vand.u32 %v493, 4294901760
    %v495 = vsub.f32 %v493, %v494
    %v496 = vand.u32 %v495, 4294901760
    %497 = vmatpush1.msra.mxu0 %v496
    %v498 = vand.u32 %v207, 4294901760
    %v499 = vsub.f32 %v207, %v498
    %v500 = vand.u32 %v499, 4294901760
    %v501 = vsub.f32 %v499, %v500
    %v502 = vand.u32 %v501, 4294901760
    %503 = vmatprep.subr.mxu0 %v502
    %v504 = vand.u32 %v206, 4294901760
    %v505 = vsub.f32 %v206, %v504
    %v506 = vand.u32 %v505, 4294901760
    %v507 = vsub.f32 %v505, %v506
    %v508 = vand.u32 %v507, 4294901760
    %509 = vmatpush1.msra.mxu0 %v508
    %v510 = vand.u32 %v209, 4294901760
    %v511 = vsub.f32 %v209, %v510
    %v512 = vand.u32 %v511, 4294901760
    %v513 = vsub.f32 %v511, %v512
    %v514 = vand.u32 %v513, 4294901760
    %515 = vmatprep.subr.mxu0 %v514
    %v516 = vand.u32 %v208, 4294901760
    %v517 = vsub.f32 %v208, %v516
    %v518 = vand.u32 %v517, 4294901760
    %v519 = vsub.f32 %v517, %v518
    %v520 = vand.u32 %v519, 4294901760
    %521 = vmatpush1.msra.mxu0 %v520
    %v522 = vand.u32 %v211, 4294901760
    %v523 = vsub.f32 %v211, %v522
    %v524 = vand.u32 %v523, 4294901760
    %v525 = vsub.f32 %v523, %v524
    %v526 = vand.u32 %v525, 4294901760
    %527 = vmatprep.subr.mxu0 %v526
    %v528 = vand.u32 %v210, 4294901760
    %v529 = vsub.f32 %v210, %v528
    %v530 = vand.u32 %v529, 4294901760
    %v531 = vsub.f32 %v529, %v530
    %v532 = vand.u32 %v531, 4294901760
    %533 = vmatpush1.msra.mxu0 %v532
    %v534 = vand.u32 %v213, 4294901760
    %v535 = vsub.f32 %v213, %v534
    %v536 = vand.u32 %v535, 4294901760
    %v537 = vsub.f32 %v535, %v536
    %v538 = vand.u32 %v537, 4294901760
    %539 = vmatprep.subr.mxu0 %v538
    %v540 = vand.u32 %v212, 4294901760
    %v541 = vsub.f32 %v212, %v540
    %v542 = vand.u32 %v541, 4294901760
    %v543 = vsub.f32 %v541, %v542
    %v544 = vand.u32 %v543, 4294901760
    %545 = vmatpush1.msra.mxu0 %v544
    %v546 = vand.u32 %v215, 4294901760
    %v547 = vsub.f32 %v215, %v546
    %v548 = vand.u32 %v547, 4294901760
    %v549 = vsub.f32 %v547, %v548
    %v550 = vand.u32 %v549, 4294901760
    %551 = vmatprep.subr.mxu0 %v550
    %v552 = vand.u32 %v214, 4294901760
    %v553 = vsub.f32 %v214, %v552
    %v554 = vand.u32 %v553, 4294901760
    %v555 = vsub.f32 %v553, %v554
    %v556 = vand.u32 %v555, 4294901760
    %557 = vmatpush1.msra.mxu0 %v556
    %v558 = vand.u32 %v217, 4294901760
    %v559 = vsub.f32 %v217, %v558
    %v560 = vand.u32 %v559, 4294901760
    %v561 = vsub.f32 %v559, %v560
    %v562 = vand.u32 %v561, 4294901760
    %563 = vmatprep.subr.mxu0 %v562
    %v564 = vand.u32 %v216, 4294901760
    %v565 = vsub.f32 %v216, %v564
    %v566 = vand.u32 %v565, 4294901760
    %v567 = vsub.f32 %v565, %v566
    %v568 = vand.u32 %v567, 4294901760
    %569 = vmatpush1.msra.mxu0 %v568
    %v570 = vand.u32 %v219, 4294901760
    %v571 = vsub.f32 %v219, %v570
    %v572 = vand.u32 %v571, 4294901760
    %v573 = vsub.f32 %v571, %v572
    %v574 = vand.u32 %v573, 4294901760
    %575 = vmatprep.subr.mxu0 %v574
    %v576 = vand.u32 %v218, 4294901760
    %v577 = vsub.f32 %v218, %v576
    %v578 = vand.u32 %v577, 4294901760
    %v579 = vsub.f32 %v577, %v578
    %v580 = vand.u32 %v579, 4294901760
    %581 = vmatpush1.msra.mxu0 %v580
    %v582 = vand.u32 %v221, 4294901760
    %v583 = vsub.f32 %v221, %v582
    %v584 = vand.u32 %v583, 4294901760
    %v585 = vsub.f32 %v583, %v584
    %v586 = vand.u32 %v585, 4294901760
    %587 = vmatprep.subr.mxu0 %v586
    %v588 = vand.u32 %v220, 4294901760
    %v589 = vsub.f32 %v220, %v588
    %v590 = vand.u32 %v589, 4294901760
    %v591 = vsub.f32 %v589, %v590
    %v592 = vand.u32 %v591, 4294901760
    %593 = vmatpush1.msra.mxu0 %v592
    %v594 = vand.u32 %v223, 4294901760
    %v595 = vsub.f32 %v223, %v594
    %v596 = vand.u32 %v595, 4294901760
    %v597 = vsub.f32 %v595, %v596
    %v598 = vand.u32 %v597, 4294901760
    %599 = vmatprep.subr.mxu0 %v598
    %v600 = vand.u32 %v222, 4294901760
    %v601 = vsub.f32 %v222, %v600
    %v602 = vand.u32 %v601, 4294901760
    %v603 = vsub.f32 %v601, %v602
    %v604 = vand.u32 %v603, 4294901760
    %605 = vmatpush1.msra.mxu0 %v604
    %v606 = vand.u32 %v225, 4294901760
    %v607 = vsub.f32 %v225, %v606
    %v608 = vand.u32 %v607, 4294901760
    %v609 = vsub.f32 %v607, %v608
    %v610 = vand.u32 %v609, 4294901760
    %611 = vmatprep.subr.mxu0 %v610
    %v612 = vand.u32 %v224, 4294901760
    %v613 = vsub.f32 %v224, %v612
    %v614 = vand.u32 %v613, 4294901760
    %v615 = vsub.f32 %v613, %v614
    %v616 = vand.u32 %v615, 4294901760
    %617 = vmatpush1.msra.mxu0 %v616
    %v618 = vand.u32 %v227, 4294901760
    %v619 = vsub.f32 %v227, %v618
    %v620 = vand.u32 %v619, 4294901760
    %v621 = vsub.f32 %v619, %v620
    %v622 = vand.u32 %v621, 4294901760
    %623 = vmatprep.subr.mxu0 %v622
    %v624 = vand.u32 %v226, 4294901760
    %v625 = vsub.f32 %v226, %v624
    %v626 = vand.u32 %v625, 4294901760
    %v627 = vsub.f32 %v625, %v626
    %v628 = vand.u32 %v627, 4294901760
    %629 = vmatpush1.msra.mxu0 %v628
    %v630 = vand.u32 %v229, 4294901760
    %v631 = vsub.f32 %v229, %v630
    %v632 = vand.u32 %v631, 4294901760
    %v633 = vsub.f32 %v631, %v632
    %v634 = vand.u32 %v633, 4294901760
    %635 = vmatprep.subr.mxu0 %v634
    %v636 = vand.u32 %v228, 4294901760
    %v637 = vsub.f32 %v228, %v636
    %v638 = vand.u32 %v637, 4294901760
    %v639 = vsub.f32 %v637, %v638
    %v640 = vand.u32 %v639, 4294901760
    %641 = vmatpush1.msra.mxu0 %v640
    %v642 = vand.u32 %v231, 4294901760
    %v643 = vsub.f32 %v231, %v642
    %v644 = vand.u32 %v643, 4294901760
    %v645 = vsub.f32 %v643, %v644
    %v646 = vand.u32 %v645, 4294901760
    %647 = vmatprep.subr.mxu0 %v646
    %v648 = vand.u32 %v230, 4294901760
    %v649 = vsub.f32 %v230, %v648
    %v650 = vand.u32 %v649, 4294901760
    %v651 = vsub.f32 %v649, %v650
    %v652 = vand.u32 %v651, 4294901760
    %653 = vmatpush1.msra.mxu0 %v652
    %v654 = vand.u32 %v233, 4294901760
    %v655 = vsub.f32 %v233, %v654
    %v656 = vand.u32 %v655, 4294901760
    %v657 = vsub.f32 %v655, %v656
    %v658 = vand.u32 %v657, 4294901760
    %659 = vmatprep.subr.mxu0 %v658
    %v660 = vand.u32 %v232, 4294901760
    %v661 = vsub.f32 %v232, %v660
    %v662 = vand.u32 %v661, 4294901760
    %v663 = vsub.f32 %v661, %v662
    %v664 = vand.u32 %v663, 4294901760
    %665 = vmatpush1.msra.mxu0 %v664
    %v666 = vand.u32 %v235, 4294901760
    %v667 = vsub.f32 %v235, %v666
    %v668 = vand.u32 %v667, 4294901760
    %v669 = vsub.f32 %v667, %v668
    %v670 = vand.u32 %v669, 4294901760
    %671 = vmatprep.subr.mxu0 %v670
    %v672 = vand.u32 %v234, 4294901760
    %v673 = vsub.f32 %v234, %v672
    %v674 = vand.u32 %v673, 4294901760
    %v675 = vsub.f32 %v673, %v674
    %v676 = vand.u32 %v675, 4294901760
    %677 = vmatpush1.msra.mxu0 %v676
    %v678 = vand.u32 %v237, 4294901760
    %v679 = vsub.f32 %v237, %v678
    %v680 = vand.u32 %v679, 4294901760
    %v681 = vsub.f32 %v679, %v680
    %v682 = vand.u32 %v681, 4294901760
    %683 = vmatprep.subr.mxu0 %v682
    %v684 = vand.u32 %v236, 4294901760
    %v685 = vsub.f32 %v236, %v684
    %v686 = vand.u32 %v685, 4294901760
    %v687 = vsub.f32 %v685, %v686
    %v688 = vand.u32 %v687, 4294901760
    %689 = vmatpush1.msra.mxu0 %v688
    %v690 = vand.u32 %v239, 4294901760
    %v691 = vsub.f32 %v239, %v690
    %v692 = vand.u32 %v691, 4294901760
    %v693 = vsub.f32 %v691, %v692
    %v694 = vand.u32 %v693, 4294901760
    %695 = vmatprep.subr.mxu0 %v694
    %v696 = vand.u32 %v238, 4294901760
    %v697 = vsub.f32 %v238, %v696
    %v698 = vand.u32 %v697, 4294901760
    %v699 = vsub.f32 %v697, %v698
    %v700 = vand.u32 %v699, 4294901760
    %701 = vmatpush1.msra.mxu0 %v700
    %v702 = vand.u32 %v241, 4294901760
    %v703 = vsub.f32 %v241, %v702
    %v704 = vand.u32 %v703, 4294901760
    %v705 = vsub.f32 %v703, %v704
    %v706 = vand.u32 %v705, 4294901760
    %707 = vmatprep.subr.mxu0 %v706
    %v708 = vand.u32 %v240, 4294901760
    %v709 = vsub.f32 %v240, %v708
    %v710 = vand.u32 %v709, 4294901760
    %v711 = vsub.f32 %v709, %v710
    %v712 = vand.u32 %v711, 4294901760
    %713 = vmatpush1.msra.mxu0 %v712
    %v714 = vand.u32 %v243, 4294901760
    %v715 = vsub.f32 %v243, %v714
    %v716 = vand.u32 %v715, 4294901760
    %v717 = vsub.f32 %v715, %v716
    %v718 = vand.u32 %v717, 4294901760
    %719 = vmatprep.subr.mxu0 %v718
    %v720 = vand.u32 %v242, 4294901760
    %v721 = vsub.f32 %v242, %v720
    %v722 = vand.u32 %v721, 4294901760
    %v723 = vsub.f32 %v721, %v722
    %v724 = vand.u32 %v723, 4294901760
    %725 = vmatpush1.msra.mxu0 %v724
    %v726 = vand.u32 %v245, 4294901760
    %v727 = vsub.f32 %v245, %v726
    %v728 = vand.u32 %v727, 4294901760
    %v729 = vsub.f32 %v727, %v728
    %v730 = vand.u32 %v729, 4294901760
    %731 = vmatprep.subr.mxu0 %v730
    %v732 = vand.u32 %v244, 4294901760
    %v733 = vsub.f32 %v244, %v732
    %v734 = vand.u32 %v733, 4294901760
    %v735 = vsub.f32 %v733, %v734
    %v736 = vand.u32 %v735, 4294901760
    %737 = vmatpush1.msra.mxu0 %v736
    %v738 = vand.u32 %v247, 4294901760
    %v739 = vsub.f32 %v247, %v738
    %v740 = vand.u32 %v739, 4294901760
    %v741 = vsub.f32 %v739, %v740
    %v742 = vand.u32 %v741, 4294901760
    %743 = vmatprep.subr.mxu0 %v742
    %v744 = vand.u32 %v246, 4294901760
    %v745 = vsub.f32 %v246, %v744
    %v746 = vand.u32 %v745, 4294901760
    %v747 = vsub.f32 %v745, %v746
    %v748 = vand.u32 %v747, 4294901760
    %749 = vmatpush1.msra.mxu0 %v748
    %v750 = vand.u32 %v249, 4294901760
    %v751 = vsub.f32 %v249, %v750
    %v752 = vand.u32 %v751, 4294901760
    %v753 = vsub.f32 %v751, %v752
    %v754 = vand.u32 %v753, 4294901760
    %755 = vmatprep.subr.mxu0 %v754
    %v756 = vand.u32 %v248, 4294901760
    %v757 = vsub.f32 %v248, %v756
    %v758 = vand.u32 %v757, 4294901760
    %v759 = vsub.f32 %v757, %v758
    %v760 = vand.u32 %v759, 4294901760
    %761 = vmatpush1.msra.mxu0 %v760
    %v762 = vand.u32 %v251, 4294901760
    %v763 = vsub.f32 %v251, %v762
    %v764 = vand.u32 %v763, 4294901760
    %v765 = vsub.f32 %v763, %v764
    %v766 = vand.u32 %v765, 4294901760
    %767 = vmatprep.subr.mxu0 %v766
    %v768 = vand.u32 %v250, 4294901760
    %v769 = vsub.f32 %v250, %v768
    %v770 = vand.u32 %v769, 4294901760
    %v771 = vsub.f32 %v769, %v770
    %v772 = vand.u32 %v771, 4294901760
    %773 = vmatpush1.msra.mxu0 %v772
    %v774 = vand.u32 %v253, 4294901760
    %v775 = vsub.f32 %v253, %v774
    %v776 = vand.u32 %v775, 4294901760
    %v777 = vsub.f32 %v775, %v776
    %v778 = vand.u32 %v777, 4294901760
    %779 = vmatprep.subr.mxu0 %v778
    %v780 = vand.u32 %v252, 4294901760
    %v781 = vsub.f32 %v252, %v780
    %v782 = vand.u32 %v781, 4294901760
    %v783 = vsub.f32 %v781, %v782
    %v784 = vand.u32 %v783, 4294901760
    %785 = vmatpush1.msra.mxu0 %v784
    %v786 = vand.u32 %v255, 4294901760
    %v787 = vsub.f32 %v255, %v786
    %v788 = vand.u32 %v787, 4294901760
    %v789 = vsub.f32 %v787, %v788
    %v790 = vand.u32 %v789, 4294901760
    %791 = vmatprep.subr.mxu0 %v790
    %v792 = vand.u32 %v254, 4294901760
    %v793 = vsub.f32 %v254, %v792
    %v794 = vand.u32 %v793, 4294901760
    %v795 = vsub.f32 %v793, %v794
    %v796 = vand.u32 %v795, 4294901760
    %797 = vmatpush1.msra.mxu0 %v796
    %v798 = vand.u32 %v257, 4294901760
    %v799 = vsub.f32 %v257, %v798
    %v800 = vand.u32 %v799, 4294901760
    %v801 = vsub.f32 %v799, %v800
    %v802 = vand.u32 %v801, 4294901760
    %803 = vmatprep.subr.mxu0 %v802
    %v804 = vand.u32 %v256, 4294901760
    %v805 = vsub.f32 %v256, %v804
    %v806 = vand.u32 %v805, 4294901760
    %v807 = vsub.f32 %v805, %v806
    %v808 = vand.u32 %v807, 4294901760
    %809 = vmatpush1.msra.mxu0 %v808
    %v810 = vand.u32 %v259, 4294901760
    %v811 = vsub.f32 %v259, %v810
    %v812 = vand.u32 %v811, 4294901760
    %v813 = vsub.f32 %v811, %v812
    %v814 = vand.u32 %v813, 4294901760
    %815 = vmatprep.subr.mxu0 %v814
    %v816 = vand.u32 %v258, 4294901760
    %v817 = vsub.f32 %v258, %v816
    %v818 = vand.u32 %v817, 4294901760
    %v819 = vsub.f32 %v817, %v818
    %v820 = vand.u32 %v819, 4294901760
    %821 = vmatpush1.msra.mxu0 %v820
    %v822 = vand.u32 %v261, 4294901760
    %v823 = vsub.f32 %v261, %v822
    %v824 = vand.u32 %v823, 4294901760
    %v825 = vsub.f32 %v823, %v824
    %v826 = vand.u32 %v825, 4294901760
    %827 = vmatprep.subr.mxu0 %v826
    %v828 = vand.u32 %v260, 4294901760
    %v829 = vsub.f32 %v260, %v828
    %v830 = vand.u32 %v829, 4294901760
    %v831 = vsub.f32 %v829, %v830
    %v832 = vand.u32 %v831, 4294901760
    %833 = vmatpush1.msra.mxu0 %v832
    %v834 = vand.u32 %v263, 4294901760
    %v835 = vsub.f32 %v263, %v834
    %v836 = vand.u32 %v835, 4294901760
    %v837 = vsub.f32 %v835, %v836
    %v838 = vand.u32 %v837, 4294901760
    %839 = vmatprep.subr.mxu0 %v838
    %v840 = vand.u32 %v262, 4294901760
    %v841 = vsub.f32 %v262, %v840
    %v842 = vand.u32 %v841, 4294901760
    %v843 = vsub.f32 %v841, %v842
    %v844 = vand.u32 %v843, 4294901760
    %845 = vmatpush1.msra.mxu0 %v844
    %v846 = vand.u32 %v298, 4294901760
    %847 = vmatprep.mubr.f32.mxu0 %v846
    %v848 = vand.u32 %v297, 4294901760
    %849 = vmatmul.mubr.f32.gmra.mrb[0].mxu0 %v848
    %v850 = vpop.f32.mrb[0].mxu0
    %v851 = vadd.f32 %v442, %v850
    %v852 = vpop.f32.mrb[0].mxu0
    %v853 = vadd.f32 %v444, %v852
    %v854 = vand.u32 %v300, 4294901760
    %855 = vmatprep.mubr.f32.mxu0 %v854
    %v856 = vand.u32 %v299, 4294901760
    %857 = vmatmul.mubr.f32.gmra.mrb[0].mxu0 %v856
    %v858 = vpop.f32.mrb[0].mxu0
    %v859 = vadd.f32 %v458, %v858
    %v860 = vpop.f32.mrb[0].mxu0
    %v861 = vadd.f32 %v460, %v860
    %862 = vdwg.mxu0
    %v863 = vand.u32 %v201, 4294901760
    %v864 = vsub.f32 %v201, %v863
    %865 = vmatprep.subr.mxu0 %v864
    %v866 = vand.u32 %v200, 4294901760
    %v867 = vsub.f32 %v200, %v866
    %868 = vmatpush1.msra.mxu0 %v867
    %v869 = vand.u32 %v203, 4294901760
    %v870 = vsub.f32 %v203, %v869
    %871 = vmatprep.subr.mxu0 %v870
    %v872 = vand.u32 %v202, 4294901760
    %v873 = vsub.f32 %v202, %v872
    %874 = vmatpush1.msra.mxu0 %v873
    %v875 = vand.u32 %v205, 4294901760
    %v876 = vsub.f32 %v205, %v875
    %877 = vmatprep.subr.mxu0 %v876
    %v878 = vand.u32 %v204, 4294901760
    %v879 = vsub.f32 %v204, %v878
    %880 = vmatpush1.msra.mxu0 %v879
    %v881 = vand.u32 %v207, 4294901760
    %v882 = vsub.f32 %v207, %v881
    %883 = vmatprep.subr.mxu0 %v882
    %v884 = vand.u32 %v206, 4294901760
    %v885 = vsub.f32 %v206, %v884
    %886 = vmatpush1.msra.mxu0 %v885
    %v887 = vand.u32 %v209, 4294901760
    %v888 = vsub.f32 %v209, %v887
    %889 = vmatprep.subr.mxu0 %v888
    %v890 = vand.u32 %v208, 4294901760
    %v891 = vsub.f32 %v208, %v890
    %892 = vmatpush1.msra.mxu0 %v891
    %v893 = vand.u32 %v211, 4294901760
    %v894 = vsub.f32 %v211, %v893
    %895 = vmatprep.subr.mxu0 %v894
    %v896 = vand.u32 %v210, 4294901760
    %v897 = vsub.f32 %v210, %v896
    %898 = vmatpush1.msra.mxu0 %v897
    %v899 = vand.u32 %v213, 4294901760
    %v900 = vsub.f32 %v213, %v899
    %901 = vmatprep.subr.mxu0 %v900
    %v902 = vand.u32 %v212, 4294901760
    %v903 = vsub.f32 %v212, %v902
    %904 = vmatpush1.msra.mxu0 %v903
    %v905 = vand.u32 %v215, 4294901760
    %v906 = vsub.f32 %v215, %v905
    %907 = vmatprep.subr.mxu0 %v906
    %v908 = vand.u32 %v214, 4294901760
    %v909 = vsub.f32 %v214, %v908
    %910 = vmatpush1.msra.mxu0 %v909
    %v911 = vand.u32 %v217, 4294901760
    %v912 = vsub.f32 %v217, %v911
    %913 = vmatprep.subr.mxu0 %v912
    %v914 = vand.u32 %v216, 4294901760
    %v915 = vsub.f32 %v216, %v914
    %916 = vmatpush1.msra.mxu0 %v915
    %v917 = vand.u32 %v219, 4294901760
    %v918 = vsub.f32 %v219, %v917
    %919 = vmatprep.subr.mxu0 %v918
    %v920 = vand.u32 %v218, 4294901760
    %v921 = vsub.f32 %v218, %v920
    %922 = vmatpush1.msra.mxu0 %v921
    %v923 = vand.u32 %v221, 4294901760
    %v924 = vsub.f32 %v221, %v923
    %925 = vmatprep.subr.mxu0 %v924
    %v926 = vand.u32 %v220, 4294901760
    %v927 = vsub.f32 %v220, %v926
    %928 = vmatpush1.msra.mxu0 %v927
    %v929 = vand.u32 %v223, 4294901760
    %v930 = vsub.f32 %v223, %v929
    %931 = vmatprep.subr.mxu0 %v930
    %v932 = vand.u32 %v222, 4294901760
    %v933 = vsub.f32 %v222, %v932
    %934 = vmatpush1.msra.mxu0 %v933
    %v935 = vand.u32 %v225, 4294901760
    %v936 = vsub.f32 %v225, %v935
    %937 = vmatprep.subr.mxu0 %v936
    %v938 = vand.u32 %v224, 4294901760
    %v939 = vsub.f32 %v224, %v938
    %940 = vmatpush1.msra.mxu0 %v939
    %v941 = vand.u32 %v227, 4294901760
    %v942 = vsub.f32 %v227, %v941
    %943 = vmatprep.subr.mxu0 %v942
    %v944 = vand.u32 %v226, 4294901760
    %v945 = vsub.f32 %v226, %v944
    %946 = vmatpush1.msra.mxu0 %v945
    %v947 = vand.u32 %v229, 4294901760
    %v948 = vsub.f32 %v229, %v947
    %949 = vmatprep.subr.mxu0 %v948
    %v950 = vand.u32 %v228, 4294901760
    %v951 = vsub.f32 %v228, %v950
    %952 = vmatpush1.msra.mxu0 %v951
    %v953 = vand.u32 %v231, 4294901760
    %v954 = vsub.f32 %v231, %v953
    %955 = vmatprep.subr.mxu0 %v954
    %v956 = vand.u32 %v230, 4294901760
    %v957 = vsub.f32 %v230, %v956
    %958 = vmatpush1.msra.mxu0 %v957
    %v959 = vand.u32 %v233, 4294901760
    %v960 = vsub.f32 %v233, %v959
    %961 = vmatprep.subr.mxu0 %v960
    %v962 = vand.u32 %v232, 4294901760
    %v963 = vsub.f32 %v232, %v962
    %964 = vmatpush1.msra.mxu0 %v963
    %v965 = vand.u32 %v235, 4294901760
    %v966 = vsub.f32 %v235, %v965
    %967 = vmatprep.subr.mxu0 %v966
    %v968 = vand.u32 %v234, 4294901760
    %v969 = vsub.f32 %v234, %v968
    %970 = vmatpush1.msra.mxu0 %v969
    %v971 = vand.u32 %v237, 4294901760
    %v972 = vsub.f32 %v237, %v971
    %973 = vmatprep.subr.mxu0 %v972
    %v974 = vand.u32 %v236, 4294901760
    %v975 = vsub.f32 %v236, %v974
    %976 = vmatpush1.msra.mxu0 %v975
    %v977 = vand.u32 %v239, 4294901760
    %v978 = vsub.f32 %v239, %v977
    %979 = vmatprep.subr.mxu0 %v978
    %v980 = vand.u32 %v238, 4294901760
    %v981 = vsub.f32 %v238, %v980
    %982 = vmatpush1.msra.mxu0 %v981
    %v983 = vand.u32 %v241, 4294901760
    %v984 = vsub.f32 %v241, %v983
    %985 = vmatprep.subr.mxu0 %v984
    %v986 = vand.u32 %v240, 4294901760
    %v987 = vsub.f32 %v240, %v986
    %988 = vmatpush1.msra.mxu0 %v987
    %v989 = vand.u32 %v243, 4294901760
    %v990 = vsub.f32 %v243, %v989
    %991 = vmatprep.subr.mxu0 %v990
    %v992 = vand.u32 %v242, 4294901760
    %v993 = vsub.f32 %v242, %v992
    %994 = vmatpush1.msra.mxu0 %v993
    %v995 = vand.u32 %v245, 4294901760
    %v996 = vsub.f32 %v245, %v995
    %997 = vmatprep.subr.mxu0 %v996
    %v998 = vand.u32 %v244, 4294901760
    %v999 = vsub.f32 %v244, %v998
    %1000 = vmatpush1.msra.mxu0 %v999
    %v1001 = vand.u32 %v247, 4294901760
    %v1002 = vsub.f32 %v247, %v1001
    %1003 = vmatprep.subr.mxu0 %v1002
    %v1004 = vand.u32 %v246, 4294901760
    %v1005 = vsub.f32 %v246, %v1004
    %1006 = vmatpush1.msra.mxu0 %v1005
    %v1007 = vand.u32 %v249, 4294901760
    %v1008 = vsub.f32 %v249, %v1007
    %1009 = vmatprep.subr.mxu0 %v1008
    %v1010 = vand.u32 %v248, 4294901760
    %v1011 = vsub.f32 %v248, %v1010
    %1012 = vmatpush1.msra.mxu0 %v1011
    %v1013 = vand.u32 %v251, 4294901760
    %v1014 = vsub.f32 %v251, %v1013
    %1015 = vmatprep.subr.mxu0 %v1014
    %v1016 = vand.u32 %v250, 4294901760
    %v1017 = vsub.f32 %v250, %v1016
    %1018 = vmatpush1.msra.mxu0 %v1017
    %v1019 = vand.u32 %v253, 4294901760
    %v1020 = vsub.f32 %v253, %v1019
    %1021 = vmatprep.subr.mxu0 %v1020
    %v1022 = vand.u32 %v252, 4294901760
    %v1023 = vsub.f32 %v252, %v1022
    %1024 = vmatpush1.msra.mxu0 %v1023
    %v1025 = vand.u32 %v255, 4294901760
    %v1026 = vsub.f32 %v255, %v1025
    %1027 = vmatprep.subr.mxu0 %v1026
    %v1028 = vand.u32 %v254, 4294901760
    %v1029 = vsub.f32 %v254, %v1028
    %1030 = vmatpush1.msra.mxu0 %v1029
    %v1031 = vand.u32 %v257, 4294901760
    %v1032 = vsub.f32 %v257, %v1031
    %1033 = vmatprep.subr.mxu0 %v1032
    %v1034 = vand.u32 %v256, 4294901760
    %v1035 = vsub.f32 %v256, %v1034
    %1036 = vmatpush1.msra.mxu0 %v1035
    %v1037 = vand.u32 %v259, 4294901760
    %v1038 = vsub.f32 %v259, %v1037
    %1039 = vmatprep.subr.mxu0 %v1038
    %v1040 = vand.u32 %v258, 4294901760
    %v1041 = vsub.f32 %v258, %v1040
    %1042 = vmatpush1.msra.mxu0 %v1041
    %v1043 = vand.u32 %v261, 4294901760
    %v1044 = vsub.f32 %v261, %v1043
    %1045 = vmatprep.subr.mxu0 %v1044
    %v1046 = vand.u32 %v260, 4294901760
    %v1047 = vsub.f32 %v260, %v1046
    %1048 = vmatpush1.msra.mxu0 %v1047
    %v1049 = vand.u32 %v263, 4294901760
    %v1050 = vsub.f32 %v263, %v1049
    %1051 = vmatprep.subr.mxu0 %v1050
    %v1052 = vand.u32 %v262, 4294901760
    %v1053 = vsub.f32 %v262, %v1052
    %1054 = vmatpush1.msra.mxu0 %v1053
    %v1055 = vand.u32 %v298, 4294901760
    %v1056 = vsub.f32 %v298, %v1055
    %1057 = vmatprep.mubr.f32.mxu0 %v1056
    %v1058 = vand.u32 %v297, 4294901760
    %v1059 = vsub.f32 %v297, %v1058
    %1060 = vmatmul.mubr.f32.gmra.mrb[0].mxu0 %v1059
    %v1061 = vpop.f32.mrb[0].mxu0
    %v1062 = vadd.f32 %v851, %v1061
    %v1063 = vpop.f32.mrb[0].mxu0
    %v1064 = vadd.f32 %v853, %v1063
    %v1065 = vand.u32 %v300, 4294901760
    %v1066 = vsub.f32 %v300, %v1065
    %1067 = vmatprep.mubr.f32.mxu0 %v1066
    %v1068 = vand.u32 %v299, 4294901760
    %v1069 = vsub.f32 %v299, %v1068
    %1070 = vmatmul.mubr.f32.gmra.mrb[0].mxu0 %v1069
    %v1071 = vpop.f32.mrb[0].mxu0
    %v1072 = vadd.f32 %v859, %v1071
    %v1073 = vpop.f32.mrb[0].mxu0
    %v1074 = vadd.f32 %v861, %v1073
    %1075 = vdwg.mxu0
    %v1076 = vand.u32 %v201, 4294901760
    %1077 = vmatprep.subr.mxu0 %v1076
    %v1078 = vand.u32 %v200, 4294901760
    %1079 = vmatpush1.msra.mxu0 %v1078
    %v1080 = vand.u32 %v203, 4294901760
    %1081 = vmatprep.subr.mxu0 %v1080
    %v1082 = vand.u32 %v202, 4294901760
    %1083 = vmatpush1.msra.mxu0 %v1082
    %v1084 = vand.u32 %v205, 4294901760
    %1085 = vmatprep.subr.mxu0 %v1084
    %v1086 = vand.u32 %v204, 4294901760
    %1087 = vmatpush1.msra.mxu0 %v1086
    %v1088 = vand.u32 %v207, 4294901760
    %1089 = vmatprep.subr.mxu0 %v1088
    %v1090 = vand.u32 %v206, 4294901760
    %1091 = vmatpush1.msra.mxu0 %v1090
    %v1092 = vand.u32 %v209, 4294901760
    %1093 = vmatprep.subr.mxu0 %v1092
    %v1094 = vand.u32 %v208, 4294901760
    %1095 = vmatpush1.msra.mxu0 %v1094
    %v1096 = vand.u32 %v211, 4294901760
    %1097 = vmatprep.subr.mxu0 %v1096
    %v1098 = vand.u32 %v210, 4294901760
    %1099 = vmatpush1.msra.mxu0 %v1098
    %v1100 = vand.u32 %v213, 4294901760
    %1101 = vmatprep.subr.mxu0 %v1100
    %v1102 = vand.u32 %v212, 4294901760
    %1103 = vmatpush1.msra.mxu0 %v1102
    %v1104 = vand.u32 %v215, 4294901760
    %1105 = vmatprep.subr.mxu0 %v1104
    %v1106 = vand.u32 %v214, 4294901760
    %1107 = vmatpush1.msra.mxu0 %v1106
    %v1108 = vand.u32 %v217, 4294901760
    %1109 = vmatprep.subr.mxu0 %v1108
    %v1110 = vand.u32 %v216, 4294901760
    %1111 = vmatpush1.msra.mxu0 %v1110
    %v1112 = vand.u32 %v219, 4294901760
    %1113 = vmatprep.subr.mxu0 %v1112
    %v1114 = vand.u32 %v218, 4294901760
    %1115 = vmatpush1.msra.mxu0 %v1114
    %v1116 = vand.u32 %v221, 4294901760
    %1117 = vmatprep.subr.mxu0 %v1116
    %v1118 = vand.u32 %v220, 4294901760
    %1119 = vmatpush1.msra.mxu0 %v1118
    %v1120 = vand.u32 %v223, 4294901760
    %1121 = vmatprep.subr.mxu0 %v1120
    %v1122 = vand.u32 %v222, 4294901760
    %1123 = vmatpush1.msra.mxu0 %v1122
    %v1124 = vand.u32 %v225, 4294901760
    %1125 = vmatprep.subr.mxu0 %v1124
    %v1126 = vand.u32 %v224, 4294901760
    %1127 = vmatpush1.msra.mxu0 %v1126
    %v1128 = vand.u32 %v227, 4294901760
    %1129 = vmatprep.subr.mxu0 %v1128
    %v1130 = vand.u32 %v226, 4294901760
    %1131 = vmatpush1.msra.mxu0 %v1130
    %v1132 = vand.u32 %v229, 4294901760
    %1133 = vmatprep.subr.mxu0 %v1132
    %v1134 = vand.u32 %v228, 4294901760
    %1135 = vmatpush1.msra.mxu0 %v1134
    %v1136 = vand.u32 %v231, 4294901760
    %1137 = vmatprep.subr.mxu0 %v1136
    %v1138 = vand.u32 %v230, 4294901760
    %1139 = vmatpush1.msra.mxu0 %v1138
    %v1140 = vand.u32 %v233, 4294901760
    %1141 = vmatprep.subr.mxu0 %v1140
    %v1142 = vand.u32 %v232, 4294901760
    %1143 = vmatpush1.msra.mxu0 %v1142
    %v1144 = vand.u32 %v235, 4294901760
    %1145 = vmatprep.subr.mxu0 %v1144
    %v1146 = vand.u32 %v234, 4294901760
    %1147 = vmatpush1.msra.mxu0 %v1146
    %v1148 = vand.u32 %v237, 4294901760
    %1149 = vmatprep.subr.mxu0 %v1148
    %v1150 = vand.u32 %v236, 4294901760
    %1151 = vmatpush1.msra.mxu0 %v1150
    %v1152 = vand.u32 %v239, 4294901760
    %1153 = vmatprep.subr.mxu0 %v1152
    %v1154 = vand.u32 %v238, 4294901760
    %1155 = vmatpush1.msra.mxu0 %v1154
    %v1156 = vand.u32 %v241, 4294901760
    %1157 = vmatprep.subr.mxu0 %v1156
    %v1158 = vand.u32 %v240, 4294901760
    %1159 = vmatpush1.msra.mxu0 %v1158
    %v1160 = vand.u32 %v243, 4294901760
    %1161 = vmatprep.subr.mxu0 %v1160
    %v1162 = vand.u32 %v242, 4294901760
    %1163 = vmatpush1.msra.mxu0 %v1162
    %v1164 = vand.u32 %v245, 4294901760
    %1165 = vmatprep.subr.mxu0 %v1164
    %v1166 = vand.u32 %v244, 4294901760
    %1167 = vmatpush1.msra.mxu0 %v1166
    %v1168 = vand.u32 %v247, 4294901760
    %1169 = vmatprep.subr.mxu0 %v1168
    %v1170 = vand.u32 %v246, 4294901760
    %1171 = vmatpush1.msra.mxu0 %v1170
    %v1172 = vand.u32 %v249, 4294901760
    %1173 = vmatprep.subr.mxu0 %v1172
    %v1174 = vand.u32 %v248, 4294901760
    %1175 = vmatpush1.msra.mxu0 %v1174
    %v1176 = vand.u32 %v251, 4294901760
    %1177 = vmatprep.subr.mxu0 %v1176
    %v1178 = vand.u32 %v250, 4294901760
    %1179 = vmatpush1.msra.mxu0 %v1178
    %v1180 = vand.u32 %v253, 4294901760
    %1181 = vmatprep.subr.mxu0 %v1180
    %v1182 = vand.u32 %v252, 4294901760
    %1183 = vmatpush1.msra.mxu0 %v1182
    %v1184 = vand.u32 %v255, 4294901760
    %1185 = vmatprep.subr.mxu0 %v1184
    %v1186 = vand.u32 %v254, 4294901760
    %1187 = vmatpush1.msra.mxu0 %v1186
    %v1188 = vand.u32 %v257, 4294901760
    %1189 = vmatprep.subr.mxu0 %v1188
    %v1190 = vand.u32 %v256, 4294901760
    %1191 = vmatpush1.msra.mxu0 %v1190
    %v1192 = vand.u32 %v259, 4294901760
    %1193 = vmatprep.subr.mxu0 %v1192
    %v1194 = vand.u32 %v258, 4294901760
    %1195 = vmatpush1.msra.mxu0 %v1194
    %v1196 = vand.u32 %v261, 4294901760
    %1197 = vmatprep.subr.mxu0 %v1196
    %v1198 = vand.u32 %v260, 4294901760
    %1199 = vmatpush1.msra.mxu0 %v1198
    %v1200 = vand.u32 %v263, 4294901760
    %1201 = vmatprep.subr.mxu0 %v1200
    %v1202 = vand.u32 %v262, 4294901760
    %1203 = vmatpush1.msra.mxu0 %v1202
    %v1204 = vand.u32 %v298, 4294901760
    %v1205 = vsub.f32 %v298, %v1204
    %v1206 = vand.u32 %v1205, 4294901760
    %1207 = vmatprep.mubr.f32.mxu0 %v1206
    %v1208 = vand.u32 %v297, 4294901760
    %v1209 = vsub.f32 %v297, %v1208
    %v1210 = vand.u32 %v1209, 4294901760
    %1211 = vmatmul.mubr.f32.gmra.mrb[0].mxu0 %v1210
    %v1212 = vpop.f32.mrb[0].mxu0
    %v1213 = vadd.f32 %v1062, %v1212
    %v1214 = vpop.f32.mrb[0].mxu0
    %v1215 = vadd.f32 %v1064, %v1214
    %v1216 = vand.u32 %v300, 4294901760
    %v1217 = vsub.f32 %v300, %v1216
    %v1218 = vand.u32 %v1217, 4294901760
    %1219 = vmatprep.mubr.f32.mxu0 %v1218
    %v1220 = vand.u32 %v299, 4294901760
    %v1221 = vsub.f32 %v299, %v1220
    %v1222 = vand.u32 %v1221, 4294901760
    %1223 = vmatmul.mubr.f32.gmra.mrb[0].mxu0 %v1222
    %v1224 = vpop.f32.mrb[0].mxu0
    %v1225 = vadd.f32 %v1072, %v1224
    %v1226 = vpop.f32.mrb[0].mxu0
    %v1227 = vadd.f32 %v1074, %v1226
    %1228 = vdwg.mxu0
    %v1229 = vand.u32 %v201, 4294901760
    %v1230 = vsub.f32 %v201, %v1229
    %v1231 = vand.u32 %v1230, 4294901760
    %1232 = vmatprep.subr.mxu0 %v1231
    %v1233 = vand.u32 %v200, 4294901760
    %v1234 = vsub.f32 %v200, %v1233
    %v1235 = vand.u32 %v1234, 4294901760
    %1236 = vmatpush1.msra.mxu0 %v1235
    %v1237 = vand.u32 %v203, 4294901760
    %v1238 = vsub.f32 %v203, %v1237
    %v1239 = vand.u32 %v1238, 4294901760
    %1240 = vmatprep.subr.mxu0 %v1239
    %v1241 = vand.u32 %v202, 4294901760
    %v1242 = vsub.f32 %v202, %v1241
    %v1243 = vand.u32 %v1242, 4294901760
    %1244 = vmatpush1.msra.mxu0 %v1243
    %v1245 = vand.u32 %v205, 4294901760
    %v1246 = vsub.f32 %v205, %v1245
    %v1247 = vand.u32 %v1246, 4294901760
    %1248 = vmatprep.subr.mxu0 %v1247
    %v1249 = vand.u32 %v204, 4294901760
    %v1250 = vsub.f32 %v204, %v1249
    %v1251 = vand.u32 %v1250, 4294901760
    %1252 = vmatpush1.msra.mxu0 %v1251
    %v1253 = vand.u32 %v207, 4294901760
    %v1254 = vsub.f32 %v207, %v1253
    %v1255 = vand.u32 %v1254, 4294901760
    %1256 = vmatprep.subr.mxu0 %v1255
    %v1257 = vand.u32 %v206, 4294901760
    %v1258 = vsub.f32 %v206, %v1257
    %v1259 = vand.u32 %v1258, 4294901760
    %1260 = vmatpush1.msra.mxu0 %v1259
    %v1261 = vand.u32 %v209, 4294901760
    %v1262 = vsub.f32 %v209, %v1261
    %v1263 = vand.u32 %v1262, 4294901760
    %1264 = vmatprep.subr.mxu0 %v1263
    %v1265 = vand.u32 %v208, 4294901760
    %v1266 = vsub.f32 %v208, %v1265
    %v1267 = vand.u32 %v1266, 4294901760
    %1268 = vmatpush1.msra.mxu0 %v1267
    %v1269 = vand.u32 %v211, 4294901760
    %v1270 = vsub.f32 %v211, %v1269
    %v1271 = vand.u32 %v1270, 4294901760
    %1272 = vmatprep.subr.mxu0 %v1271
    %v1273 = vand.u32 %v210, 4294901760
    %v1274 = vsub.f32 %v210, %v1273
    %v1275 = vand.u32 %v1274, 4294901760
    %1276 = vmatpush1.msra.mxu0 %v1275
    %v1277 = vand.u32 %v213, 4294901760
    %v1278 = vsub.f32 %v213, %v1277
    %v1279 = vand.u32 %v1278, 4294901760
    %1280 = vmatprep.subr.mxu0 %v1279
    %v1281 = vand.u32 %v212, 4294901760
    %v1282 = vsub.f32 %v212, %v1281
    %v1283 = vand.u32 %v1282, 4294901760
    %1284 = vmatpush1.msra.mxu0 %v1283
    %v1285 = vand.u32 %v215, 4294901760
    %v1286 = vsub.f32 %v215, %v1285
    %v1287 = vand.u32 %v1286, 4294901760
    %1288 = vmatprep.subr.mxu0 %v1287
    %v1289 = vand.u32 %v214, 4294901760
    %v1290 = vsub.f32 %v214, %v1289
    %v1291 = vand.u32 %v1290, 4294901760
    %1292 = vmatpush1.msra.mxu0 %v1291
    %v1293 = vand.u32 %v217, 4294901760
    %v1294 = vsub.f32 %v217, %v1293
    %v1295 = vand.u32 %v1294, 4294901760
    %1296 = vmatprep.subr.mxu0 %v1295
    %v1297 = vand.u32 %v216, 4294901760
    %v1298 = vsub.f32 %v216, %v1297
    %v1299 = vand.u32 %v1298, 4294901760
    %1300 = vmatpush1.msra.mxu0 %v1299
    %v1301 = vand.u32 %v219, 4294901760
    %v1302 = vsub.f32 %v219, %v1301
    %v1303 = vand.u32 %v1302, 4294901760
    %1304 = vmatprep.subr.mxu0 %v1303
    %v1305 = vand.u32 %v218, 4294901760
    %v1306 = vsub.f32 %v218, %v1305
    %v1307 = vand.u32 %v1306, 4294901760
    %1308 = vmatpush1.msra.mxu0 %v1307
    %v1309 = vand.u32 %v221, 4294901760
    %v1310 = vsub.f32 %v221, %v1309
    %v1311 = vand.u32 %v1310, 4294901760
    %1312 = vmatprep.subr.mxu0 %v1311
    %v1313 = vand.u32 %v220, 4294901760
    %v1314 = vsub.f32 %v220, %v1313
    %v1315 = vand.u32 %v1314, 4294901760
    %1316 = vmatpush1.msra.mxu0 %v1315
    %v1317 = vand.u32 %v223, 4294901760
    %v1318 = vsub.f32 %v223, %v1317
    %v1319 = vand.u32 %v1318, 4294901760
    %1320 = vmatprep.subr.mxu0 %v1319
    %v1321 = vand.u32 %v222, 4294901760
    %v1322 = vsub.f32 %v222, %v1321
    %v1323 = vand.u32 %v1322, 4294901760
    %1324 = vmatpush1.msra.mxu0 %v1323
    %v1325 = vand.u32 %v225, 4294901760
    %v1326 = vsub.f32 %v225, %v1325
    %v1327 = vand.u32 %v1326, 4294901760
    %1328 = vmatprep.subr.mxu0 %v1327
    %v1329 = vand.u32 %v224, 4294901760
    %v1330 = vsub.f32 %v224, %v1329
    %v1331 = vand.u32 %v1330, 4294901760
    %1332 = vmatpush1.msra.mxu0 %v1331
    %v1333 = vand.u32 %v227, 4294901760
    %v1334 = vsub.f32 %v227, %v1333
    %v1335 = vand.u32 %v1334, 4294901760
    %1336 = vmatprep.subr.mxu0 %v1335
    %v1337 = vand.u32 %v226, 4294901760
    %v1338 = vsub.f32 %v226, %v1337
    %v1339 = vand.u32 %v1338, 4294901760
    %1340 = vmatpush1.msra.mxu0 %v1339
    %v1341 = vand.u32 %v229, 4294901760
    %v1342 = vsub.f32 %v229, %v1341
    %v1343 = vand.u32 %v1342, 4294901760
    %1344 = vmatprep.subr.mxu0 %v1343
    %v1345 = vand.u32 %v228, 4294901760
    %v1346 = vsub.f32 %v228, %v1345
    %v1347 = vand.u32 %v1346, 4294901760
    %1348 = vmatpush1.msra.mxu0 %v1347
    %v1349 = vand.u32 %v231, 4294901760
    %v1350 = vsub.f32 %v231, %v1349
    %v1351 = vand.u32 %v1350, 4294901760
    %1352 = vmatprep.subr.mxu0 %v1351
    %v1353 = vand.u32 %v230, 4294901760
    %v1354 = vsub.f32 %v230, %v1353
    %v1355 = vand.u32 %v1354, 4294901760
    %1356 = vmatpush1.msra.mxu0 %v1355
    %v1357 = vand.u32 %v233, 4294901760
    %v1358 = vsub.f32 %v233, %v1357
    %v1359 = vand.u32 %v1358, 4294901760
    %1360 = vmatprep.subr.mxu0 %v1359
    %v1361 = vand.u32 %v232, 4294901760
    %v1362 = vsub.f32 %v232, %v1361
    %v1363 = vand.u32 %v1362, 4294901760
    %1364 = vmatpush1.msra.mxu0 %v1363
    %v1365 = vand.u32 %v235, 4294901760
    %v1366 = vsub.f32 %v235, %v1365
    %v1367 = vand.u32 %v1366, 4294901760
    %1368 = vmatprep.subr.mxu0 %v1367
    %v1369 = vand.u32 %v234, 4294901760
    %v1370 = vsub.f32 %v234, %v1369
    %v1371 = vand.u32 %v1370, 4294901760
    %1372 = vmatpush1.msra.mxu0 %v1371
    %v1373 = vand.u32 %v237, 4294901760
    %v1374 = vsub.f32 %v237, %v1373
    %v1375 = vand.u32 %v1374, 4294901760
    %1376 = vmatprep.subr.mxu0 %v1375
    %v1377 = vand.u32 %v236, 4294901760
    %v1378 = vsub.f32 %v236, %v1377
    %v1379 = vand.u32 %v1378, 4294901760
    %1380 = vmatpush1.msra.mxu0 %v1379
    %v1381 = vand.u32 %v239, 4294901760
    %v1382 = vsub.f32 %v239, %v1381
    %v1383 = vand.u32 %v1382, 4294901760
    %1384 = vmatprep.subr.mxu0 %v1383
    %v1385 = vand.u32 %v238, 4294901760
    %v1386 = vsub.f32 %v238, %v1385
    %v1387 = vand.u32 %v1386, 4294901760
    %1388 = vmatpush1.msra.mxu0 %v1387
    %v1389 = vand.u32 %v241, 4294901760
    %v1390 = vsub.f32 %v241, %v1389
    %v1391 = vand.u32 %v1390, 4294901760
    %1392 = vmatprep.subr.mxu0 %v1391
    %v1393 = vand.u32 %v240, 4294901760
    %v1394 = vsub.f32 %v240, %v1393
    %v1395 = vand.u32 %v1394, 4294901760
    %1396 = vmatpush1.msra.mxu0 %v1395
    %v1397 = vand.u32 %v243, 4294901760
    %v1398 = vsub.f32 %v243, %v1397
    %v1399 = vand.u32 %v1398, 4294901760
    %1400 = vmatprep.subr.mxu0 %v1399
    %v1401 = vand.u32 %v242, 4294901760
    %v1402 = vsub.f32 %v242, %v1401
    %v1403 = vand.u32 %v1402, 4294901760
    %1404 = vmatpush1.msra.mxu0 %v1403
    %v1405 = vand.u32 %v245, 4294901760
    %v1406 = vsub.f32 %v245, %v1405
    %v1407 = vand.u32 %v1406, 4294901760
    %1408 = vmatprep.subr.mxu0 %v1407
    %v1409 = vand.u32 %v244, 4294901760
    %v1410 = vsub.f32 %v244, %v1409
    %v1411 = vand.u32 %v1410, 4294901760
    %1412 = vmatpush1.msra.mxu0 %v1411
    %v1413 = vand.u32 %v247, 4294901760
    %v1414 = vsub.f32 %v247, %v1413
    %v1415 = vand.u32 %v1414, 4294901760
    %1416 = vmatprep.subr.mxu0 %v1415
    %v1417 = vand.u32 %v246, 4294901760
    %v1418 = vsub.f32 %v246, %v1417
    %v1419 = vand.u32 %v1418, 4294901760
    %1420 = vmatpush1.msra.mxu0 %v1419
    %v1421 = vand.u32 %v249, 4294901760
    %v1422 = vsub.f32 %v249, %v1421
    %v1423 = vand.u32 %v1422, 4294901760
    %1424 = vmatprep.subr.mxu0 %v1423
    %v1425 = vand.u32 %v248, 4294901760
    %v1426 = vsub.f32 %v248, %v1425
    %v1427 = vand.u32 %v1426, 4294901760
    %1428 = vmatpush1.msra.mxu0 %v1427
    %v1429 = vand.u32 %v251, 4294901760
    %v1430 = vsub.f32 %v251, %v1429
    %v1431 = vand.u32 %v1430, 4294901760
    %1432 = vmatprep.subr.mxu0 %v1431
    %v1433 = vand.u32 %v250, 4294901760
    %v1434 = vsub.f32 %v250, %v1433
    %v1435 = vand.u32 %v1434, 4294901760
    %1436 = vmatpush1.msra.mxu0 %v1435
    %v1437 = vand.u32 %v253, 4294901760
    %v1438 = vsub.f32 %v253, %v1437
    %v1439 = vand.u32 %v1438, 4294901760
    %1440 = vmatprep.subr.mxu0 %v1439
    %v1441 = vand.u32 %v252, 4294901760
    %v1442 = vsub.f32 %v252, %v1441
    %v1443 = vand.u32 %v1442, 4294901760
    %1444 = vmatpush1.msra.mxu0 %v1443
    %v1445 = vand.u32 %v255, 4294901760
    %v1446 = vsub.f32 %v255, %v1445
    %v1447 = vand.u32 %v1446, 4294901760
    %1448 = vmatprep.subr.mxu0 %v1447
    %v1449 = vand.u32 %v254, 4294901760
    %v1450 = vsub.f32 %v254, %v1449
    %v1451 = vand.u32 %v1450, 4294901760
    %1452 = vmatpush1.msra.mxu0 %v1451
    %v1453 = vand.u32 %v257, 4294901760
    %v1454 = vsub.f32 %v257, %v1453
    %v1455 = vand.u32 %v1454, 4294901760
    %1456 = vmatprep.subr.mxu0 %v1455
    %v1457 = vand.u32 %v256, 4294901760
    %v1458 = vsub.f32 %v256, %v1457
    %v1459 = vand.u32 %v1458, 4294901760
    %1460 = vmatpush1.msra.mxu0 %v1459
    %v1461 = vand.u32 %v259, 4294901760
    %v1462 = vsub.f32 %v259, %v1461
    %v1463 = vand.u32 %v1462, 4294901760
    %1464 = vmatprep.subr.mxu0 %v1463
    %v1465 = vand.u32 %v258, 4294901760
    %v1466 = vsub.f32 %v258, %v1465
    %v1467 = vand.u32 %v1466, 4294901760
    %1468 = vmatpush1.msra.mxu0 %v1467
    %v1469 = vand.u32 %v261, 4294901760
    %v1470 = vsub.f32 %v261, %v1469
    %v1471 = vand.u32 %v1470, 4294901760
    %1472 = vmatprep.subr.mxu0 %v1471
    %v1473 = vand.u32 %v260, 4294901760
    %v1474 = vsub.f32 %v260, %v1473
    %v1475 = vand.u32 %v1474, 4294901760
    %1476 = vmatpush1.msra.mxu0 %v1475
    %v1477 = vand.u32 %v263, 4294901760
    %v1478 = vsub.f32 %v263, %v1477
    %v1479 = vand.u32 %v1478, 4294901760
    %1480 = vmatprep.subr.mxu0 %v1479
    %v1481 = vand.u32 %v262, 4294901760
    %v1482 = vsub.f32 %v262, %v1481
    %v1483 = vand.u32 %v1482, 4294901760
    %1484 = vmatpush1.msra.mxu0 %v1483
    %v1485 = vand.u32 %v298, 4294901760
    %1486 = vmatprep.mubr.f32.mxu0 %v1485
    %v1487 = vand.u32 %v297, 4294901760
    %1488 = vmatmul.mubr.f32.gmra.mrb[0].mxu0 %v1487
    %v1489 = vpop.f32.mrb[0].mxu0
    %v1490 = vadd.f32 %v1213, %v1489
    %v1491 = vpop.f32.mrb[0].mxu0
    %v1492 = vadd.f32 %v1215, %v1491
    %v1493 = vand.u32 %v300, 4294901760
    %1494 = vmatprep.mubr.f32.mxu0 %v1493
    %v1495 = vand.u32 %v299, 4294901760
    %1496 = vmatmul.mubr.f32.gmra.mrb[0].mxu0 %v1495
    %v1497 = vpop.f32.mrb[0].mxu0
    %v1498 = vadd.f32 %v1225, %v1497
    %v1499 = vpop.f32.mrb[0].mxu0
    %v1500 = vadd.f32 %v1227, %v1499
    %1501 = vdwg.mxu0
    %v1502 = vand.u32 %v201, 4294901760
    %1503 = vmatprep.subr.mxu0 %v1502
    %v1504 = vand.u32 %v200, 4294901760
    %1505 = vmatpush1.msra.mxu0 %v1504
    %v1506 = vand.u32 %v203, 4294901760
    %1507 = vmatprep.subr.mxu0 %v1506
    %v1508 = vand.u32 %v202, 4294901760
    %1509 = vmatpush1.msra.mxu0 %v1508
    %v1510 = vand.u32 %v205, 4294901760
    %1511 = vmatprep.subr.mxu0 %v1510
    %v1512 = vand.u32 %v204, 4294901760
    %1513 = vmatpush1.msra.mxu0 %v1512
    %v1514 = vand.u32 %v207, 4294901760
    %1515 = vmatprep.subr.mxu0 %v1514
    %v1516 = vand.u32 %v206, 4294901760
    %1517 = vmatpush1.msra.mxu0 %v1516
    %v1518 = vand.u32 %v209, 4294901760
    %1519 = vmatprep.subr.mxu0 %v1518
    %v1520 = vand.u32 %v208, 4294901760
    %1521 = vmatpush1.msra.mxu0 %v1520
    %v1522 = vand.u32 %v211, 4294901760
    %1523 = vmatprep.subr.mxu0 %v1522
    %v1524 = vand.u32 %v210, 4294901760
    %1525 = vmatpush1.msra.mxu0 %v1524
    %v1526 = vand.u32 %v213, 4294901760
    %1527 = vmatprep.subr.mxu0 %v1526
    %v1528 = vand.u32 %v212, 4294901760
    %1529 = vmatpush1.msra.mxu0 %v1528
    %v1530 = vand.u32 %v215, 4294901760
    %1531 = vmatprep.subr.mxu0 %v1530
    %v1532 = vand.u32 %v214, 4294901760
    %1533 = vmatpush1.msra.mxu0 %v1532
    %v1534 = vand.u32 %v217, 4294901760
    %1535 = vmatprep.subr.mxu0 %v1534
    %v1536 = vand.u32 %v216, 4294901760
    %1537 = vmatpush1.msra.mxu0 %v1536
    %v1538 = vand.u32 %v219, 4294901760
    %1539 = vmatprep.subr.mxu0 %v1538
    %v1540 = vand.u32 %v218, 4294901760
    %1541 = vmatpush1.msra.mxu0 %v1540
    %v1542 = vand.u32 %v221, 4294901760
    %1543 = vmatprep.subr.mxu0 %v1542
    %v1544 = vand.u32 %v220, 4294901760
    %1545 = vmatpush1.msra.mxu0 %v1544
    %v1546 = vand.u32 %v223, 4294901760
    %1547 = vmatprep.subr.mxu0 %v1546
    %v1548 = vand.u32 %v222, 4294901760
    %1549 = vmatpush1.msra.mxu0 %v1548
    %v1550 = vand.u32 %v225, 4294901760
    %1551 = vmatprep.subr.mxu0 %v1550
    %v1552 = vand.u32 %v224, 4294901760
    %1553 = vmatpush1.msra.mxu0 %v1552
    %v1554 = vand.u32 %v227, 4294901760
    %1555 = vmatprep.subr.mxu0 %v1554
    %v1556 = vand.u32 %v226, 4294901760
    %1557 = vmatpush1.msra.mxu0 %v1556
    %v1558 = vand.u32 %v229, 4294901760
    %1559 = vmatprep.subr.mxu0 %v1558
    %v1560 = vand.u32 %v228, 4294901760
    %1561 = vmatpush1.msra.mxu0 %v1560
    %v1562 = vand.u32 %v231, 4294901760
    %1563 = vmatprep.subr.mxu0 %v1562
    %v1564 = vand.u32 %v230, 4294901760
    %1565 = vmatpush1.msra.mxu0 %v1564
    %v1566 = vand.u32 %v233, 4294901760
    %1567 = vmatprep.subr.mxu0 %v1566
    %v1568 = vand.u32 %v232, 4294901760
    %1569 = vmatpush1.msra.mxu0 %v1568
    %v1570 = vand.u32 %v235, 4294901760
    %1571 = vmatprep.subr.mxu0 %v1570
    %v1572 = vand.u32 %v234, 4294901760
    %1573 = vmatpush1.msra.mxu0 %v1572
    %v1574 = vand.u32 %v237, 4294901760
    %1575 = vmatprep.subr.mxu0 %v1574
    %v1576 = vand.u32 %v236, 4294901760
    %1577 = vmatpush1.msra.mxu0 %v1576
    %v1578 = vand.u32 %v239, 4294901760
    %1579 = vmatprep.subr.mxu0 %v1578
    %v1580 = vand.u32 %v238, 4294901760
    %1581 = vmatpush1.msra.mxu0 %v1580
    %v1582 = vand.u32 %v241, 4294901760
    %1583 = vmatprep.subr.mxu0 %v1582
    %v1584 = vand.u32 %v240, 4294901760
    %1585 = vmatpush1.msra.mxu0 %v1584
    %v1586 = vand.u32 %v243, 4294901760
    %1587 = vmatprep.subr.mxu0 %v1586
    %v1588 = vand.u32 %v242, 4294901760
    %1589 = vmatpush1.msra.mxu0 %v1588
    %v1590 = vand.u32 %v245, 4294901760
    %1591 = vmatprep.subr.mxu0 %v1590
    %v1592 = vand.u32 %v244, 4294901760
    %1593 = vmatpush1.msra.mxu0 %v1592
    %v1594 = vand.u32 %v247, 4294901760
    %1595 = vmatprep.subr.mxu0 %v1594
    %v1596 = vand.u32 %v246, 4294901760
    %1597 = vmatpush1.msra.mxu0 %v1596
    %v1598 = vand.u32 %v249, 4294901760
    %1599 = vmatprep.subr.mxu0 %v1598
    %v1600 = vand.u32 %v248, 4294901760
    %1601 = vmatpush1.msra.mxu0 %v1600
    %v1602 = vand.u32 %v251, 4294901760
    %1603 = vmatprep.subr.mxu0 %v1602
    %v1604 = vand.u32 %v250, 4294901760
    %1605 = vmatpush1.msra.mxu0 %v1604
    %v1606 = vand.u32 %v253, 4294901760
    %1607 = vmatprep.subr.mxu0 %v1606
    %v1608 = vand.u32 %v252, 4294901760
    %1609 = vmatpush1.msra.mxu0 %v1608
    %v1610 = vand.u32 %v255, 4294901760
    %1611 = vmatprep.subr.mxu0 %v1610
    %v1612 = vand.u32 %v254, 4294901760
    %1613 = vmatpush1.msra.mxu0 %v1612
    %v1614 = vand.u32 %v257, 4294901760
    %1615 = vmatprep.subr.mxu0 %v1614
    %v1616 = vand.u32 %v256, 4294901760
    %1617 = vmatpush1.msra.mxu0 %v1616
    %v1618 = vand.u32 %v259, 4294901760
    %1619 = vmatprep.subr.mxu0 %v1618
    %v1620 = vand.u32 %v258, 4294901760
    %1621 = vmatpush1.msra.mxu0 %v1620
    %v1622 = vand.u32 %v261, 4294901760
    %1623 = vmatprep.subr.mxu0 %v1622
    %v1624 = vand.u32 %v260, 4294901760
    %1625 = vmatpush1.msra.mxu0 %v1624
    %v1626 = vand.u32 %v263, 4294901760
    %1627 = vmatprep.subr.mxu0 %v1626
    %v1628 = vand.u32 %v262, 4294901760
    %1629 = vmatpush1.msra.mxu0 %v1628
    %v1630 = vand.u32 %v298, 4294901760
    %1631 = vmatprep.mubr.f32.mxu0 %v1630
    %v1632 = vand.u32 %v297, 4294901760
    %1633 = vmatmul.mubr.f32.gmra.mrb[0].mxu0 %v1632
    %v1634 = vpop.f32.mrb[0].mxu0
    %v1635 = vadd.f32 %v1490, %v1634
    %v1636 = vpop.f32.mrb[0].mxu0
    %v1637 = vadd.f32 %v1492, %v1636
    %v1638 = vand.u32 %v300, 4294901760
    %1639 = vmatprep.mubr.f32.mxu0 %v1638
    %v1640 = vand.u32 %v299, 4294901760
    %1641 = vmatmul.mubr.f32.gmra.mrb[0].mxu0 %v1640
    %v1642 = vpop.f32.mrb[0].mxu0
    %v1643 = vadd.f32 %v1498, %v1642
    %v1644 = vpop.f32.mrb[0].mxu0
    %v1645 = vadd.f32 %v1500, %v1644
    %1646 = vdwg.mxu0
    %v1647 = vld [vmem:[%s4] sm:$0xff]
    %v1648 = vld [vmem:[%s4 + $0x8] sm:$0xff]
    %vm1649 = vcmask 261120
    %v1651 = vsel %vm1649, %v1647, 0
    %v1654 = vsel %vm1649, %v1648, 0
    %v1656 = vand.u32 %v290, 4294901760
    %1657 = vmatprep.subr.mxu0 %v1656
    %v1658 = vand.u32 %v289, 4294901760
    %1659 = vmatpush1.msra.mxu0 %v1658
    %v1660 = vand.u32 %v292, 4294901760
    %1661 = vmatprep.subr.mxu0 %v1660
    %v1662 = vand.u32 %v291, 4294901760
    %1663 = vmatpush1.msra.mxu0 %v1662
    %v1664 = vand.u32 %v294, 4294901760
    %1665 = vmatprep.subr.mxu0 %v1664
    %v1666 = vand.u32 %v293, 4294901760
    %1667 = vmatpush1.msra.mxu0 %v1666
    %v1668 = vand.u32 %v296, 4294901760
    %1669 = vmatprep.subr.mxu0 %v1668
    %v1670 = vand.u32 %v295, 4294901760
    %1671 = vmatpush1.msra.mxu0 %v1670
    %1672 = vmatprep.subr.mxu0 0.0
    %1673 = vmatpush1.msra.mxu0 0.0
    %1674 = vmatprep.subr.mxu0 0.0
    %1675 = vmatpush1.msra.mxu0 0.0
    %1676 = vmatprep.subr.mxu0 0.0
    %1677 = vmatpush1.msra.mxu0 0.0
    %1678 = vmatprep.subr.mxu0 0.0
    %1679 = vmatpush1.msra.mxu0 0.0
    %1680 = vmatprep.subr.mxu0 0.0
    %1681 = vmatpush1.msra.mxu0 0.0
    %1682 = vmatprep.subr.mxu0 0.0
    %1683 = vmatpush1.msra.mxu0 0.0
    %1684 = vmatprep.subr.mxu0 0.0
    %1685 = vmatpush1.msra.mxu0 0.0
    %1686 = vmatprep.subr.mxu0 0.0
    %1687 = vmatpush1.msra.mxu0 0.0
    %1688 = vmatprep.subr.mxu0 0.0
    %1689 = vmatpush1.msra.mxu0 0.0
    %1690 = vmatprep.subr.mxu0 0.0
    %1691 = vmatpush1.msra.mxu0 0.0
    %1692 = vmatprep.subr.mxu0 0.0
    %1693 = vmatpush1.msra.mxu0 0.0
    %1694 = vmatprep.subr.mxu0 0.0
    %1695 = vmatpush1.msra.mxu0 0.0
    %1696 = vmatprep.subr.mxu0 0.0
    %1697 = vmatpush1.msra.mxu0 0.0
    %1698 = vmatprep.subr.mxu0 0.0
    %1699 = vmatpush1.msra.mxu0 0.0
    %1700 = vmatprep.subr.mxu0 0.0
    %1701 = vmatpush1.msra.mxu0 0.0
    %1702 = vmatprep.subr.mxu0 0.0
    %1703 = vmatpush1.msra.mxu0 0.0
    %1704 = vmatprep.subr.mxu0 0.0
    %1705 = vmatpush1.msra.mxu0 0.0
    %1706 = vmatprep.subr.mxu0 0.0
    %1707 = vmatpush1.msra.mxu0 0.0
    %1708 = vmatprep.subr.mxu0 0.0
    %1709 = vmatpush1.msra.mxu0 0.0
    %1710 = vmatprep.subr.mxu0 0.0
    %1711 = vmatpush1.msra.mxu0 0.0
    %1712 = vmatprep.subr.mxu0 0.0
    %1713 = vmatpush1.msra.mxu0 0.0
    %1714 = vmatprep.subr.mxu0 0.0
    %1715 = vmatpush1.msra.mxu0 0.0
    %1716 = vmatprep.subr.mxu0 0.0
    %1717 = vmatpush1.msra.mxu0 0.0
    %1718 = vmatprep.subr.mxu0 0.0
    %1719 = vmatpush1.msra.mxu0 0.0
    %1720 = vmatprep.subr.mxu0 0.0
    %1721 = vmatpush1.msra.mxu0 0.0
    %1722 = vmatprep.subr.mxu0 0.0
    %1723 = vmatpush1.msra.mxu0 0.0
    %1724 = vmatprep.subr.mxu0 0.0
    %1725 = vmatpush1.msra.mxu0 0.0
    %1726 = vmatprep.subr.mxu0 0.0
    %1727 = vmatpush1.msra.mxu0 0.0
    %1728 = vmatprep.mubr.f32.mxu0 0.0
    %v1729 = vand.u32 %v1651, 4294901760
    %v1730 = vsub.f32 %v1651, %v1729
    %v1731 = vand.u32 %v1730, 4294901760
    %v1732 = vsub.f32 %v1730, %v1731
    %v1733 = vand.u32 %v1732, 4294901760
    %1734 = vmatmul.mubr.f32.gmra.mrb[0].mxu0 %v1733
    %v1735 = vpop.f32.mrb[0].mxu0
    %v1736 = vadd.f32 0.0, %v1735
    %v1737 = vpop.f32.mrb[0].mxu0
    %v1738 = vadd.f32 0.0, %v1737
    %1739 = vmatprep.mubr.f32.mxu0 0.0
    %v1740 = vand.u32 %v1654, 4294901760
    %v1741 = vsub.f32 %v1654, %v1740
    %v1742 = vand.u32 %v1741, 4294901760
    %v1743 = vsub.f32 %v1741, %v1742
    %v1744 = vand.u32 %v1743, 4294901760
    %1745 = vmatmul.mubr.f32.gmra.mrb[0].mxu0 %v1744
    %v1746 = vpop.f32.mrb[0].mxu0
    %v1747 = vadd.f32 0.0, %v1746
    %v1748 = vpop.f32.mrb[0].mxu0
    %v1749 = vadd.f32 0.0, %v1748
    %1750 = vdwg.mxu0
    %v1751 = vand.u32 %v290, 4294901760
    %v1752 = vsub.f32 %v290, %v1751
    %v1753 = vand.u32 %v1752, 4294901760
    %v1754 = vsub.f32 %v1752, %v1753
    %v1755 = vand.u32 %v1754, 4294901760
    %1756 = vmatprep.subr.mxu0 %v1755
    %v1757 = vand.u32 %v289, 4294901760
    %v1758 = vsub.f32 %v289, %v1757
    %v1759 = vand.u32 %v1758, 4294901760
    %v1760 = vsub.f32 %v1758, %v1759
    %v1761 = vand.u32 %v1760, 4294901760
    %1762 = vmatpush1.msra.mxu0 %v1761
    %v1763 = vand.u32 %v292, 4294901760
    %v1764 = vsub.f32 %v292, %v1763
    %v1765 = vand.u32 %v1764, 4294901760
    %v1766 = vsub.f32 %v1764, %v1765
    %v1767 = vand.u32 %v1766, 4294901760
    %1768 = vmatprep.subr.mxu0 %v1767
    %v1769 = vand.u32 %v291, 4294901760
    %v1770 = vsub.f32 %v291, %v1769
    %v1771 = vand.u32 %v1770, 4294901760
    %v1772 = vsub.f32 %v1770, %v1771
    %v1773 = vand.u32 %v1772, 4294901760
    %1774 = vmatpush1.msra.mxu0 %v1773
    %v1775 = vand.u32 %v294, 4294901760
    %v1776 = vsub.f32 %v294, %v1775
    %v1777 = vand.u32 %v1776, 4294901760
    %v1778 = vsub.f32 %v1776, %v1777
    %v1779 = vand.u32 %v1778, 4294901760
    %1780 = vmatprep.subr.mxu0 %v1779
    %v1781 = vand.u32 %v293, 4294901760
    %v1782 = vsub.f32 %v293, %v1781
    %v1783 = vand.u32 %v1782, 4294901760
    %v1784 = vsub.f32 %v1782, %v1783
    %v1785 = vand.u32 %v1784, 4294901760
    %1786 = vmatpush1.msra.mxu0 %v1785
    %v1787 = vand.u32 %v296, 4294901760
    %v1788 = vsub.f32 %v296, %v1787
    %v1789 = vand.u32 %v1788, 4294901760
    %v1790 = vsub.f32 %v1788, %v1789
    %v1791 = vand.u32 %v1790, 4294901760
    %1792 = vmatprep.subr.mxu0 %v1791
    %v1793 = vand.u32 %v295, 4294901760
    %v1794 = vsub.f32 %v295, %v1793
    %v1795 = vand.u32 %v1794, 4294901760
    %v1796 = vsub.f32 %v1794, %v1795
    %v1797 = vand.u32 %v1796, 4294901760
    %1798 = vmatpush1.msra.mxu0 %v1797
    %1799 = vmatprep.subr.mxu0 0.0
    %1800 = vmatpush1.msra.mxu0 0.0
    %1801 = vmatprep.subr.mxu0 0.0
    %1802 = vmatpush1.msra.mxu0 0.0
    %1803 = vmatprep.subr.mxu0 0.0
    %1804 = vmatpush1.msra.mxu0 0.0
    %1805 = vmatprep.subr.mxu0 0.0
    %1806 = vmatpush1.msra.mxu0 0.0
    %1807 = vmatprep.subr.mxu0 0.0
    %1808 = vmatpush1.msra.mxu0 0.0
    %1809 = vmatprep.subr.mxu0 0.0
    %1810 = vmatpush1.msra.mxu0 0.0
    %1811 = vmatprep.subr.mxu0 0.0
    %1812 = vmatpush1.msra.mxu0 0.0
    %1813 = vmatprep.subr.mxu0 0.0
    %1814 = vmatpush1.msra.mxu0 0.0
    %1815 = vmatprep.subr.mxu0 0.0
    %1816 = vmatpush1.msra.mxu0 0.0
    %1817 = vmatprep.subr.mxu0 0.0
    %1818 = vmatpush1.msra.mxu0 0.0
    %1819 = vmatprep.subr.mxu0 0.0
    %1820 = vmatpush1.msra.mxu0 0.0
    %1821 = vmatprep.subr.mxu0 0.0
    %1822 = vmatpush1.msra.mxu0 0.0
    %1823 = vmatprep.subr.mxu0 0.0
    %1824 = vmatpush1.msra.mxu0 0.0
    %1825 = vmatprep.subr.mxu0 0.0
    %1826 = vmatpush1.msra.mxu0 0.0
    %1827 = vmatprep.subr.mxu0 0.0
    %1828 = vmatpush1.msra.mxu0 0.0
    %1829 = vmatprep.subr.mxu0 0.0
    %1830 = vmatpush1.msra.mxu0 0.0
    %1831 = vmatprep.subr.mxu0 0.0
    %1832 = vmatpush1.msra.mxu0 0.0
    %1833 = vmatprep.subr.mxu0 0.0
    %1834 = vmatpush1.msra.mxu0 0.0
    %1835 = vmatprep.subr.mxu0 0.0
    %1836 = vmatpush1.msra.mxu0 0.0
    %1837 = vmatprep.subr.mxu0 0.0
    %1838 = vmatpush1.msra.mxu0 0.0
    %1839 = vmatprep.subr.mxu0 0.0
    %1840 = vmatpush1.msra.mxu0 0.0
    %1841 = vmatprep.subr.mxu0 0.0
    %1842 = vmatpush1.msra.mxu0 0.0
    %1843 = vmatprep.subr.mxu0 0.0
    %1844 = vmatpush1.msra.mxu0 0.0
    %1845 = vmatprep.subr.mxu0 0.0
    %1846 = vmatpush1.msra.mxu0 0.0
    %1847 = vmatprep.subr.mxu0 0.0
    %1848 = vmatpush1.msra.mxu0 0.0
    %1849 = vmatprep.subr.mxu0 0.0
    %1850 = vmatpush1.msra.mxu0 0.0
    %1851 = vmatprep.subr.mxu0 0.0
    %1852 = vmatpush1.msra.mxu0 0.0
    %1853 = vmatprep.subr.mxu0 0.0
    %1854 = vmatpush1.msra.mxu0 0.0
    %1855 = vmatprep.mubr.f32.mxu0 0.0
    %v1856 = vand.u32 %v1651, 4294901760
    %1857 = vmatmul.mubr.f32.gmra.mrb[0].mxu0 %v1856
    %v1858 = vpop.f32.mrb[0].mxu0
    %v1859 = vadd.f32 %v1736, %v1858
    %v1860 = vpop.f32.mrb[0].mxu0
    %v1861 = vadd.f32 %v1738, %v1860
    %1862 = vmatprep.mubr.f32.mxu0 0.0
    %v1863 = vand.u32 %v1654, 4294901760
    %1864 = vmatmul.mubr.f32.gmra.mrb[0].mxu0 %v1863
    %v1865 = vpop.f32.mrb[0].mxu0
    %v1866 = vadd.f32 %v1747, %v1865
    %v1867 = vpop.f32.mrb[0].mxu0
    %v1868 = vadd.f32 %v1749, %v1867
    %1869 = vdwg.mxu0
    %v1870 = vand.u32 %v290, 4294901760
    %v1871 = vsub.f32 %v290, %v1870
    %1872 = vmatprep.subr.mxu0 %v1871
    %v1873 = vand.u32 %v289, 4294901760
    %v1874 = vsub.f32 %v289, %v1873
    %1875 = vmatpush1.msra.mxu0 %v1874
    %v1876 = vand.u32 %v292, 4294901760
    %v1877 = vsub.f32 %v292, %v1876
    %1878 = vmatprep.subr.mxu0 %v1877
    %v1879 = vand.u32 %v291, 4294901760
    %v1880 = vsub.f32 %v291, %v1879
    %1881 = vmatpush1.msra.mxu0 %v1880
    %v1882 = vand.u32 %v294, 4294901760
    %v1883 = vsub.f32 %v294, %v1882
    %1884 = vmatprep.subr.mxu0 %v1883
    %v1885 = vand.u32 %v293, 4294901760
    %v1886 = vsub.f32 %v293, %v1885
    %1887 = vmatpush1.msra.mxu0 %v1886
    %v1888 = vand.u32 %v296, 4294901760
    %v1889 = vsub.f32 %v296, %v1888
    %1890 = vmatprep.subr.mxu0 %v1889
    %v1891 = vand.u32 %v295, 4294901760
    %v1892 = vsub.f32 %v295, %v1891
    %1893 = vmatpush1.msra.mxu0 %v1892
    %1894 = vmatprep.subr.mxu0 0.0
    %1895 = vmatpush1.msra.mxu0 0.0
    %1896 = vmatprep.subr.mxu0 0.0
    %1897 = vmatpush1.msra.mxu0 0.0
    %1898 = vmatprep.subr.mxu0 0.0
    %1899 = vmatpush1.msra.mxu0 0.0
    %1900 = vmatprep.subr.mxu0 0.0
    %1901 = vmatpush1.msra.mxu0 0.0
    %1902 = vmatprep.subr.mxu0 0.0
    %1903 = vmatpush1.msra.mxu0 0.0
    %1904 = vmatprep.subr.mxu0 0.0
    %1905 = vmatpush1.msra.mxu0 0.0
    %1906 = vmatprep.subr.mxu0 0.0
    %1907 = vmatpush1.msra.mxu0 0.0
    %1908 = vmatprep.subr.mxu0 0.0
    %1909 = vmatpush1.msra.mxu0 0.0
    %1910 = vmatprep.subr.mxu0 0.0
    %1911 = vmatpush1.msra.mxu0 0.0
    %1912 = vmatprep.subr.mxu0 0.0
    %1913 = vmatpush1.msra.mxu0 0.0
    %1914 = vmatprep.subr.mxu0 0.0
    %1915 = vmatpush1.msra.mxu0 0.0
    %1916 = vmatprep.subr.mxu0 0.0
    %1917 = vmatpush1.msra.mxu0 0.0
    %1918 = vmatprep.subr.mxu0 0.0
    %1919 = vmatpush1.msra.mxu0 0.0
    %1920 = vmatprep.subr.mxu0 0.0
    %1921 = vmatpush1.msra.mxu0 0.0
    %1922 = vmatprep.subr.mxu0 0.0
    %1923 = vmatpush1.msra.mxu0 0.0
    %1924 = vmatprep.subr.mxu0 0.0
    %1925 = vmatpush1.msra.mxu0 0.0
    %1926 = vmatprep.subr.mxu0 0.0
    %1927 = vmatpush1.msra.mxu0 0.0
    %1928 = vmatprep.subr.mxu0 0.0
    %1929 = vmatpush1.msra.mxu0 0.0
    %1930 = vmatprep.subr.mxu0 0.0
    %1931 = vmatpush1.msra.mxu0 0.0
    %1932 = vmatprep.subr.mxu0 0.0
    %1933 = vmatpush1.msra.mxu0 0.0
    %1934 = vmatprep.subr.mxu0 0.0
    %1935 = vmatpush1.msra.mxu0 0.0
    %1936 = vmatprep.subr.mxu0 0.0
    %1937 = vmatpush1.msra.mxu0 0.0
    %1938 = vmatprep.subr.mxu0 0.0
    %1939 = vmatpush1.msra.mxu0 0.0
    %1940 = vmatprep.subr.mxu0 0.0
    %1941 = vmatpush1.msra.mxu0 0.0
    %1942 = vmatprep.subr.mxu0 0.0
    %1943 = vmatpush1.msra.mxu0 0.0
    %1944 = vmatprep.subr.mxu0 0.0
    %1945 = vmatpush1.msra.mxu0 0.0
    %1946 = vmatprep.subr.mxu0 0.0
    %1947 = vmatpush1.msra.mxu0 0.0
    %1948 = vmatprep.subr.mxu0 0.0
    %1949 = vmatpush1.msra.mxu0 0.0
    %1950 = vmatprep.mubr.f32.mxu0 0.0
    %v1951 = vand.u32 %v1651, 4294901760
    %v1952 = vsub.f32 %v1651, %v1951
    %1953 = vmatmul.mubr.f32.gmra.mrb[0].mxu0 %v1952
    %v1954 = vpop.f32.mrb[0].mxu0
    %v1955 = vadd.f32 %v1859, %v1954
    %v1956 = vpop.f32.mrb[0].mxu0
    %v1957 = vadd.f32 %v1861, %v1956
    %1958 = vmatprep.mubr.f32.mxu0 0.0
    %v1959 = vand.u32 %v1654, 4294901760
    %v1960 = vsub.f32 %v1654, %v1959
    %1961 = vmatmul.mubr.f32.gmra.mrb[0].mxu0 %v1960
    %v1962 = vpop.f32.mrb[0].mxu0
    %v1963 = vadd.f32 %v1866, %v1962
    %v1964 = vpop.f32.mrb[0].mxu0
    %v1965 = vadd.f32 %v1868, %v1964
    %1966 = vdwg.mxu0
    %v1967 = vand.u32 %v290, 4294901760
    %1968 = vmatprep.subr.mxu0 %v1967
    %v1969 = vand.u32 %v289, 4294901760
    %1970 = vmatpush1.msra.mxu0 %v1969
    %v1971 = vand.u32 %v292, 4294901760
    %1972 = vmatprep.subr.mxu0 %v1971
    %v1973 = vand.u32 %v291, 4294901760
    %1974 = vmatpush1.msra.mxu0 %v1973
    %v1975 = vand.u32 %v294, 4294901760
    %1976 = vmatprep.subr.mxu0 %v1975
    %v1977 = vand.u32 %v293, 4294901760
    %1978 = vmatpush1.msra.mxu0 %v1977
    %v1979 = vand.u32 %v296, 4294901760
    %1980 = vmatprep.subr.mxu0 %v1979
    %v1981 = vand.u32 %v295, 4294901760
    %1982 = vmatpush1.msra.mxu0 %v1981
    %1983 = vmatprep.subr.mxu0 0.0
    %1984 = vmatpush1.msra.mxu0 0.0
    %1985 = vmatprep.subr.mxu0 0.0
    %1986 = vmatpush1.msra.mxu0 0.0
    %1987 = vmatprep.subr.mxu0 0.0
    %1988 = vmatpush1.msra.mxu0 0.0
    %1989 = vmatprep.subr.mxu0 0.0
    %1990 = vmatpush1.msra.mxu0 0.0
    %1991 = vmatprep.subr.mxu0 0.0
    %1992 = vmatpush1.msra.mxu0 0.0
    %1993 = vmatprep.subr.mxu0 0.0
    %1994 = vmatpush1.msra.mxu0 0.0
    %1995 = vmatprep.subr.mxu0 0.0
    %1996 = vmatpush1.msra.mxu0 0.0
    %1997 = vmatprep.subr.mxu0 0.0
    %1998 = vmatpush1.msra.mxu0 0.0
    %1999 = vmatprep.subr.mxu0 0.0
    %2000 = vmatpush1.msra.mxu0 0.0
    %2001 = vmatprep.subr.mxu0 0.0
    %2002 = vmatpush1.msra.mxu0 0.0
    %2003 = vmatprep.subr.mxu0 0.0
    %2004 = vmatpush1.msra.mxu0 0.0
    %2005 = vmatprep.subr.mxu0 0.0
    %2006 = vmatpush1.msra.mxu0 0.0
    %2007 = vmatprep.subr.mxu0 0.0
    %2008 = vmatpush1.msra.mxu0 0.0
    %2009 = vmatprep.subr.mxu0 0.0
    %2010 = vmatpush1.msra.mxu0 0.0
    %2011 = vmatprep.subr.mxu0 0.0
    %2012 = vmatpush1.msra.mxu0 0.0
    %2013 = vmatprep.subr.mxu0 0.0
    %2014 = vmatpush1.msra.mxu0 0.0
    %2015 = vmatprep.subr.mxu0 0.0
    %2016 = vmatpush1.msra.mxu0 0.0
    %2017 = vmatprep.subr.mxu0 0.0
    %2018 = vmatpush1.msra.mxu0 0.0
    %2019 = vmatprep.subr.mxu0 0.0
    %2020 = vmatpush1.msra.mxu0 0.0
    %2021 = vmatprep.subr.mxu0 0.0
    %2022 = vmatpush1.msra.mxu0 0.0
    %2023 = vmatprep.subr.mxu0 0.0
    %2024 = vmatpush1.msra.mxu0 0.0
    %2025 = vmatprep.subr.mxu0 0.0
    %2026 = vmatpush1.msra.mxu0 0.0
    %2027 = vmatprep.subr.mxu0 0.0
    %2028 = vmatpush1.msra.mxu0 0.0
    %2029 = vmatprep.subr.mxu0 0.0
    %2030 = vmatpush1.msra.mxu0 0.0
    %2031 = vmatprep.subr.mxu0 0.0
    %2032 = vmatpush1.msra.mxu0 0.0
    %2033 = vmatprep.subr.mxu0 0.0
    %2034 = vmatpush1.msra.mxu0 0.0
    %2035 = vmatprep.subr.mxu0 0.0
    %2036 = vmatpush1.msra.mxu0 0.0
    %2037 = vmatprep.subr.mxu0 0.0
    %2038 = vmatpush1.msra.mxu0 0.0
    %2039 = vmatprep.mubr.f32.mxu0 0.0
    %v2040 = vand.u32 %v1651, 4294901760
    %v2041 = vsub.f32 %v1651, %v2040
    %v2042 = vand.u32 %v2041, 4294901760
    %2043 = vmatmul.mubr.f32.gmra.mrb[0].mxu0 %v2042
    %v2044 = vpop.f32.mrb[0].mxu0
    %v2045 = vadd.f32 %v1955, %v2044
    %v2046 = vpop.f32.mrb[0].mxu0
    %v2047 = vadd.f32 %v1957, %v2046
    %2048 = vmatprep.mubr.f32.mxu0 0.0
    %v2049 = vand.u32 %v1654, 4294901760
    %v2050 = vsub.f32 %v1654, %v2049
    %v2051 = vand.u32 %v2050, 4294901760
    %2052 = vmatmul.mubr.f32.gmra.mrb[0].mxu0 %v2051
    %v2053 = vpop.f32.mrb[0].mxu0
    %v2054 = vadd.f32 %v1963, %v2053
    %v2055 = vpop.f32.mrb[0].mxu0
    %v2056 = vadd.f32 %v1965, %v2055
    %2057 = vdwg.mxu0
    %v2058 = vand.u32 %v290, 4294901760
    %v2059 = vsub.f32 %v290, %v2058
    %v2060 = vand.u32 %v2059, 4294901760
    %2061 = vmatprep.subr.mxu0 %v2060
    %v2062 = vand.u32 %v289, 4294901760
    %v2063 = vsub.f32 %v289, %v2062
    %v2064 = vand.u32 %v2063, 4294901760
    %2065 = vmatpush1.msra.mxu0 %v2064
    %v2066 = vand.u32 %v292, 4294901760
    %v2067 = vsub.f32 %v292, %v2066
    %v2068 = vand.u32 %v2067, 4294901760
    %2069 = vmatprep.subr.mxu0 %v2068
    %v2070 = vand.u32 %v291, 4294901760
    %v2071 = vsub.f32 %v291, %v2070
    %v2072 = vand.u32 %v2071, 4294901760
    %2073 = vmatpush1.msra.mxu0 %v2072
    %v2074 = vand.u32 %v294, 4294901760
    %v2075 = vsub.f32 %v294, %v2074
    %v2076 = vand.u32 %v2075, 4294901760
    %2077 = vmatprep.subr.mxu0 %v2076
    %v2078 = vand.u32 %v293, 4294901760
    %v2079 = vsub.f32 %v293, %v2078
    %v2080 = vand.u32 %v2079, 4294901760
    %2081 = vmatpush1.msra.mxu0 %v2080
    %v2082 = vand.u32 %v296, 4294901760
    %v2083 = vsub.f32 %v296, %v2082
    %v2084 = vand.u32 %v2083, 4294901760
    %2085 = vmatprep.subr.mxu0 %v2084
    %v2086 = vand.u32 %v295, 4294901760
    %v2087 = vsub.f32 %v295, %v2086
    %v2088 = vand.u32 %v2087, 4294901760
    %2089 = vmatpush1.msra.mxu0 %v2088
    %2090 = vmatprep.subr.mxu0 0.0
    %2091 = vmatpush1.msra.mxu0 0.0
    %2092 = vmatprep.subr.mxu0 0.0
    %2093 = vmatpush1.msra.mxu0 0.0
    %2094 = vmatprep.subr.mxu0 0.0
    %2095 = vmatpush1.msra.mxu0 0.0
    %2096 = vmatprep.subr.mxu0 0.0
    %2097 = vmatpush1.msra.mxu0 0.0
    %2098 = vmatprep.subr.mxu0 0.0
    %2099 = vmatpush1.msra.mxu0 0.0
    %2100 = vmatprep.subr.mxu0 0.0
    %2101 = vmatpush1.msra.mxu0 0.0
    %2102 = vmatprep.subr.mxu0 0.0
    %2103 = vmatpush1.msra.mxu0 0.0
    %2104 = vmatprep.subr.mxu0 0.0
    %2105 = vmatpush1.msra.mxu0 0.0
    %2106 = vmatprep.subr.mxu0 0.0
    %2107 = vmatpush1.msra.mxu0 0.0
    %2108 = vmatprep.subr.mxu0 0.0
    %2109 = vmatpush1.msra.mxu0 0.0
    %2110 = vmatprep.subr.mxu0 0.0
    %2111 = vmatpush1.msra.mxu0 0.0
    %2112 = vmatprep.subr.mxu0 0.0
    %2113 = vmatpush1.msra.mxu0 0.0
    %2114 = vmatprep.subr.mxu0 0.0
    %2115 = vmatpush1.msra.mxu0 0.0
    %2116 = vmatprep.subr.mxu0 0.0
    %2117 = vmatpush1.msra.mxu0 0.0
    %2118 = vmatprep.subr.mxu0 0.0
    %2119 = vmatpush1.msra.mxu0 0.0
    %2120 = vmatprep.subr.mxu0 0.0
    %2121 = vmatpush1.msra.mxu0 0.0
    %2122 = vmatprep.subr.mxu0 0.0
    %2123 = vmatpush1.msra.mxu0 0.0
    %2124 = vmatprep.subr.mxu0 0.0
    %2125 = vmatpush1.msra.mxu0 0.0
    %2126 = vmatprep.subr.mxu0 0.0
    %2127 = vmatpush1.msra.mxu0 0.0
    %2128 = vmatprep.subr.mxu0 0.0
    %2129 = vmatpush1.msra.mxu0 0.0
    %2130 = vmatprep.subr.mxu0 0.0
    %2131 = vmatpush1.msra.mxu0 0.0
    %2132 = vmatprep.subr.mxu0 0.0
    %2133 = vmatpush1.msra.mxu0 0.0
    %2134 = vmatprep.subr.mxu0 0.0
    %2135 = vmatpush1.msra.mxu0 0.0
    %2136 = vmatprep.subr.mxu0 0.0
    %2137 = vmatpush1.msra.mxu0 0.0
    %2138 = vmatprep.subr.mxu0 0.0
    %2139 = vmatpush1.msra.mxu0 0.0
    %2140 = vmatprep.subr.mxu0 0.0
    %2141 = vmatpush1.msra.mxu0 0.0
    %2142 = vmatprep.subr.mxu0 0.0
    %2143 = vmatpush1.msra.mxu0 0.0
    %2144 = vmatprep.subr.mxu0 0.0
    %2145 = vmatpush1.msra.mxu0 0.0
    %2146 = vmatprep.mubr.f32.mxu0 0.0
    %v2147 = vand.u32 %v1651, 4294901760
    %2148 = vmatmul.mubr.f32.gmra.mrb[0].mxu0 %v2147
    %v2149 = vpop.f32.mrb[0].mxu0
    %v2150 = vadd.f32 %v2045, %v2149
    %v2151 = vpop.f32.mrb[0].mxu0
    %v2152 = vadd.f32 %v2047, %v2151
    %2153 = vmatprep.mubr.f32.mxu0 0.0
    %v2154 = vand.u32 %v1654, 4294901760
    %2155 = vmatmul.mubr.f32.gmra.mrb[0].mxu0 %v2154
    %v2156 = vpop.f32.mrb[0].mxu0
    %v2157 = vadd.f32 %v2054, %v2156
    %v2158 = vpop.f32.mrb[0].mxu0
    %v2159 = vadd.f32 %v2056, %v2158
    %2160 = vdwg.mxu0
    %v2161 = vand.u32 %v290, 4294901760
    %2162 = vmatprep.subr.mxu0 %v2161
    %v2163 = vand.u32 %v289, 4294901760
    %2164 = vmatpush1.msra.mxu0 %v2163
    %v2165 = vand.u32 %v292, 4294901760
    %2166 = vmatprep.subr.mxu0 %v2165
    %v2167 = vand.u32 %v291, 4294901760
    %2168 = vmatpush1.msra.mxu0 %v2167
    %v2169 = vand.u32 %v294, 4294901760
    %2170 = vmatprep.subr.mxu0 %v2169
    %v2171 = vand.u32 %v293, 4294901760
    %2172 = vmatpush1.msra.mxu0 %v2171
    %v2173 = vand.u32 %v296, 4294901760
    %2174 = vmatprep.subr.mxu0 %v2173
    %v2175 = vand.u32 %v295, 4294901760
    %2176 = vmatpush1.msra.mxu0 %v2175
    %2177 = vmatprep.subr.mxu0 0.0
    %2178 = vmatpush1.msra.mxu0 0.0
    %2179 = vmatprep.subr.mxu0 0.0
    %2180 = vmatpush1.msra.mxu0 0.0
    %2181 = vmatprep.subr.mxu0 0.0
    %2182 = vmatpush1.msra.mxu0 0.0
    %2183 = vmatprep.subr.mxu0 0.0
    %2184 = vmatpush1.msra.mxu0 0.0
    %2185 = vmatprep.subr.mxu0 0.0
    %2186 = vmatpush1.msra.mxu0 0.0
    %2187 = vmatprep.subr.mxu0 0.0
    %2188 = vmatpush1.msra.mxu0 0.0
    %2189 = vmatprep.subr.mxu0 0.0
    %2190 = vmatpush1.msra.mxu0 0.0
    %2191 = vmatprep.subr.mxu0 0.0
    %2192 = vmatpush1.msra.mxu0 0.0
    %2193 = vmatprep.subr.mxu0 0.0
    %2194 = vmatpush1.msra.mxu0 0.0
    %2195 = vmatprep.subr.mxu0 0.0
    %2196 = vmatpush1.msra.mxu0 0.0
    %2197 = vmatprep.subr.mxu0 0.0
    %2198 = vmatpush1.msra.mxu0 0.0
    %2199 = vmatprep.subr.mxu0 0.0
    %2200 = vmatpush1.msra.mxu0 0.0
    %2201 = vmatprep.subr.mxu0 0.0
    %2202 = vmatpush1.msra.mxu0 0.0
    %2203 = vmatprep.subr.mxu0 0.0
    %2204 = vmatpush1.msra.mxu0 0.0
    %2205 = vmatprep.subr.mxu0 0.0
    %2206 = vmatpush1.msra.mxu0 0.0
    %2207 = vmatprep.subr.mxu0 0.0
    %2208 = vmatpush1.msra.mxu0 0.0
    %2209 = vmatprep.subr.mxu0 0.0
    %2210 = vmatpush1.msra.mxu0 0.0
    %2211 = vmatprep.subr.mxu0 0.0
    %2212 = vmatpush1.msra.mxu0 0.0
    %2213 = vmatprep.subr.mxu0 0.0
    %2214 = vmatpush1.msra.mxu0 0.0
    %2215 = vmatprep.subr.mxu0 0.0
    %2216 = vmatpush1.msra.mxu0 0.0
    %2217 = vmatprep.subr.mxu0 0.0
    %2218 = vmatpush1.msra.mxu0 0.0
    %2219 = vmatprep.subr.mxu0 0.0
    %2220 = vmatpush1.msra.mxu0 0.0
    %2221 = vmatprep.subr.mxu0 0.0
    %2222 = vmatpush1.msra.mxu0 0.0
    %2223 = vmatprep.subr.mxu0 0.0
    %2224 = vmatpush1.msra.mxu0 0.0
    %2225 = vmatprep.subr.mxu0 0.0
    %2226 = vmatpush1.msra.mxu0 0.0
    %2227 = vmatprep.subr.mxu0 0.0
    %2228 = vmatpush1.msra.mxu0 0.0
    %2229 = vmatprep.subr.mxu0 0.0
    %2230 = vmatpush1.msra.mxu0 0.0
    %2231 = vmatprep.subr.mxu0 0.0
    %2232 = vmatpush1.msra.mxu0 0.0
    %2233 = vmatprep.mubr.f32.mxu0 0.0
    %v2234 = vand.u32 %v1651, 4294901760
    %2235 = vmatmul.mubr.f32.gmra.mrb[0].mxu0 %v2234
    %v2236 = vpop.f32.mrb[0].mxu0
    %v2237 = vadd.f32 %v2150, %v2236
    %v2238 = vpop.f32.mrb[0].mxu0
    %v2239 = vadd.f32 %v2152, %v2238
    %2240 = vmatprep.mubr.f32.mxu0 0.0
    %v2241 = vand.u32 %v1654, 4294901760
    %2242 = vmatmul.mubr.f32.gmra.mrb[0].mxu0 %v2241
    %v2243 = vpop.f32.mrb[0].mxu0
    %v2244 = vadd.f32 %v2157, %v2243
    %v2245 = vpop.f32.mrb[0].mxu0
    %v2246 = vadd.f32 %v2159, %v2245
    %2247 = vdwg.mxu0
    %v2248 = vand.u32 2147483647, %v1635
    %v2249 = vand.u32 2147483647, %v1637
    %v2250 = vsub.f32 0.0, %v2248
    %v2251 = vsub.f32 0.0, %v2249
    %v2252 = vmul.f32 %v2250, 1.442695
    %v2253 = vpow.pop %v2252
    %v2254 = vmul.f32 %v2251, 1.442695
    %v2255 = vpow.pop %v2254
    %v2256 = vadd.f32 %v2253, 1.0
    %v2257 = vlog2.pop %v2256
    %v2258 = vmul.f32 %v2257, 0.6931472
    %v2259 = vmul.f32 -0.5, %v2253
    %v2260 = vadd.f32 %v2259, 1.0
    %v2261 = vmul.f32 %v2260, %v2253
    %v2262 = vand.u32 2147483647, %v2253
    %vm2263 = vcmp.lt.f32.partialorder %v2262, 0.0004427343
    %v2264 = vsel %vm2263, %v2261, %v2258
    %v2265 = vadd.f32 %v2255, 1.0
    %v2266 = vlog2.pop %v2265
    %v2267 = vmul.f32 %v2266, 0.6931472
    %v2268 = vmul.f32 -0.5, %v2255
    %v2269 = vadd.f32 %v2268, 1.0
    %v2270 = vmul.f32 %v2269, %v2255
    %v2271 = vand.u32 2147483647, %v2255
    %vm2272 = vcmp.lt.f32.partialorder %v2271, 0.0004427343
    %v2273 = vsel %vm2272, %v2270, %v2267
    %v2274 = vmax.f32 %v1635, 0.0
    %v2275 = vmax.f32 %v1637, 0.0
    %v2276 = vadd.f32 %v2264, %v2274
    %v2277 = vadd.f32 %v2273, %v2275
    %v2278 = vand.u32 2147483647, %v2237
    %v2279 = vand.u32 2147483647, %v2239
    %v2280 = vsub.f32 0.0, %v2278
    %v2281 = vsub.f32 0.0, %v2279
    %v2282 = vmul.f32 %v2280, 1.442695
    %v2283 = vpow.pop %v2282
    %v2284 = vmul.f32 %v2281, 1.442695
    %v2285 = vpow.pop %v2284
    %v2286 = vadd.f32 %v2283, 1.0
    %v2287 = vlog2.pop %v2286
    %v2288 = vmul.f32 %v2287, 0.6931472
    %v2289 = vmul.f32 -0.5, %v2283
    %v2290 = vadd.f32 %v2289, 1.0
    %v2291 = vmul.f32 %v2290, %v2283
    %v2292 = vand.u32 2147483647, %v2283
    %vm2293 = vcmp.lt.f32.partialorder %v2292, 0.0004427343
    %v2294 = vsel %vm2293, %v2291, %v2288
    %v2295 = vadd.f32 %v2285, 1.0
    %v2296 = vlog2.pop %v2295
    %v2297 = vmul.f32 %v2296, 0.6931472
    %v2298 = vmul.f32 -0.5, %v2285
    %v2299 = vadd.f32 %v2298, 1.0
    %v2300 = vmul.f32 %v2299, %v2285
    %v2301 = vand.u32 2147483647, %v2285
    %vm2302 = vcmp.lt.f32.partialorder %v2301, 0.0004427343
    %v2303 = vsel %vm2302, %v2300, %v2297
    %v2304 = vmax.f32 %v2237, 0.0
    %v2305 = vmax.f32 %v2239, 0.0
    %v2306 = vadd.f32 %v2294, %v2304
    %v2307 = vadd.f32 %v2303, %v2305
    %v2308 = vand.u32 2147483647, %v1643
    %v2309 = vand.u32 2147483647, %v1645
    %v2310 = vsub.f32 0.0, %v2308
    %v2311 = vsub.f32 0.0, %v2309
    %v2312 = vmul.f32 %v2310, 1.442695
    %v2313 = vpow.pop %v2312
    %v2314 = vmul.f32 %v2311, 1.442695
    %v2315 = vpow.pop %v2314
    %v2316 = vadd.f32 %v2313, 1.0
    %v2317 = vlog2.pop %v2316
    %v2318 = vmul.f32 %v2317, 0.6931472
    %v2319 = vmul.f32 -0.5, %v2313
    %v2320 = vadd.f32 %v2319, 1.0
    %v2321 = vmul.f32 %v2320, %v2313
    %v2322 = vand.u32 2147483647, %v2313
    %vm2323 = vcmp.lt.f32.partialorder %v2322, 0.0004427343
    %v2324 = vsel %vm2323, %v2321, %v2318
    %v2325 = vadd.f32 %v2315, 1.0
    %v2326 = vlog2.pop %v2325
    %v2327 = vmul.f32 %v2326, 0.6931472
    %v2328 = vmul.f32 -0.5, %v2315
    %v2329 = vadd.f32 %v2328, 1.0
    %v2330 = vmul.f32 %v2329, %v2315
    %v2331 = vand.u32 2147483647, %v2315
    %vm2332 = vcmp.lt.f32.partialorder %v2331, 0.0004427343
    %v2333 = vsel %vm2332, %v2330, %v2327
    %v2334 = vmax.f32 %v1643, 0.0
    %v2335 = vmax.f32 %v1645, 0.0
    %v2336 = vadd.f32 %v2324, %v2334
    %v2337 = vadd.f32 %v2333, %v2335
    %v2338 = vand.u32 2147483647, %v2244
    %v2339 = vand.u32 2147483647, %v2246
    %v2340 = vsub.f32 0.0, %v2338
    %v2341 = vsub.f32 0.0, %v2339
    %v2342 = vmul.f32 %v2340, 1.442695
    %v2343 = vpow.pop %v2342
    %v2344 = vmul.f32 %v2341, 1.442695
    %v2345 = vpow.pop %v2344
    %v2346 = vadd.f32 %v2343, 1.0
    %v2347 = vlog2.pop %v2346
    %v2348 = vmul.f32 %v2347, 0.6931472
    %v2349 = vmul.f32 -0.5, %v2343
    %v2350 = vadd.f32 %v2349, 1.0
    %v2351 = vmul.f32 %v2350, %v2343
    %v2352 = vand.u32 2147483647, %v2343
    %vm2353 = vcmp.lt.f32.partialorder %v2352, 0.0004427343
    %v2354 = vsel %vm2353, %v2351, %v2348
    %v2355 = vadd.f32 %v2345, 1.0
    %v2356 = vlog2.pop %v2355
    %v2357 = vmul.f32 %v2356, 0.6931472
    %v2358 = vmul.f32 -0.5, %v2345
    %v2359 = vadd.f32 %v2358, 1.0
    %v2360 = vmul.f32 %v2359, %v2345
    %v2361 = vand.u32 2147483647, %v2345
    %vm2362 = vcmp.lt.f32.partialorder %v2361, 0.0004427343
    %v2363 = vsel %vm2362, %v2360, %v2357
    %v2364 = vmax.f32 %v2244, 0.0
    %v2365 = vmax.f32 %v2246, 0.0
    %v2366 = vadd.f32 %v2354, %v2364
    %v2367 = vadd.f32 %v2363, %v2365
    %v2368 = vmul.f32 %v2336, %v2366
    %v2369 = vmul.f32 %v2337, %v2367
    %2372 = vrot.lane.b32.xlu0 %v24, 120
    %v2373 = vpop.permute.xlu0 %2372
    %2374 = vrot.lane.b32.xlu0 %v25, 120
    %v2375 = vpop.permute.xlu0 %2374
    %vm2376 = vcmask 64512
    %v2377 = vsel %vm2376, %v2373, 0
    %v2379 = vsel %vm2376, %v2375, 0
    %v2381 = vand.u32 %v2307, 4294901760
    %2382 = vmatprep.subr.mxu0 %v2381
    %v2383 = vand.u32 %v2306, 4294901760
    %2384 = vmatpush1.msra.mxu0 %v2383
    %2385 = vmatprep.subr.mxu0 0.0
    %2386 = vmatpush1.msra.mxu0 0.0
    %2387 = vmatprep.subr.mxu0 0.0
    %2388 = vmatpush1.msra.mxu0 0.0
    %2389 = vmatprep.subr.mxu0 0.0
    %2390 = vmatpush1.msra.mxu0 0.0
    %2391 = vmatprep.subr.mxu0 0.0
    %2392 = vmatpush1.msra.mxu0 0.0
    %2393 = vmatprep.subr.mxu0 0.0
    %2394 = vmatpush1.msra.mxu0 0.0
    %2395 = vmatprep.subr.mxu0 0.0
    %2396 = vmatpush1.msra.mxu0 0.0
    %2397 = vmatprep.subr.mxu0 0.0
    %2398 = vmatpush1.msra.mxu0 0.0
    %2399 = vmatprep.subr.mxu0 0.0
    %2400 = vmatpush1.msra.mxu0 0.0
    %2401 = vmatprep.subr.mxu0 0.0
    %2402 = vmatpush1.msra.mxu0 0.0
    %2403 = vmatprep.subr.mxu0 0.0
    %2404 = vmatpush1.msra.mxu0 0.0
    %2405 = vmatprep.subr.mxu0 0.0
    %2406 = vmatpush1.msra.mxu0 0.0
    %2407 = vmatprep.subr.mxu0 0.0
    %2408 = vmatpush1.msra.mxu0 0.0
    %2409 = vmatprep.subr.mxu0 0.0
    %2410 = vmatpush1.msra.mxu0 0.0
    %2411 = vmatprep.subr.mxu0 0.0
    %2412 = vmatpush1.msra.mxu0 0.0
    %2413 = vmatprep.subr.mxu0 0.0
    %2414 = vmatpush1.msra.mxu0 0.0
    %2415 = vmatprep.subr.mxu0 0.0
    %2416 = vmatpush1.msra.mxu0 0.0
    %2417 = vmatprep.subr.mxu0 0.0
    %2418 = vmatpush1.msra.mxu0 0.0
    %2419 = vmatprep.subr.mxu0 0.0
    %2420 = vmatpush1.msra.mxu0 0.0
    %2421 = vmatprep.subr.mxu0 0.0
    %2422 = vmatpush1.msra.mxu0 0.0
    %2423 = vmatprep.subr.mxu0 0.0
    %2424 = vmatpush1.msra.mxu0 0.0
    %2425 = vmatprep.subr.mxu0 0.0
    %2426 = vmatpush1.msra.mxu0 0.0
    %2427 = vmatprep.subr.mxu0 0.0
    %2428 = vmatpush1.msra.mxu0 0.0
    %2429 = vmatprep.subr.mxu0 0.0
    %2430 = vmatpush1.msra.mxu0 0.0
    %2431 = vmatprep.subr.mxu0 0.0
    %2432 = vmatpush1.msra.mxu0 0.0
    %2433 = vmatprep.subr.mxu0 0.0
    %2434 = vmatpush1.msra.mxu0 0.0
    %2435 = vmatprep.subr.mxu0 0.0
    %2436 = vmatpush1.msra.mxu0 0.0
    %2437 = vmatprep.subr.mxu0 0.0
    %2438 = vmatpush1.msra.mxu0 0.0
    %2439 = vmatprep.subr.mxu0 0.0
    %2440 = vmatpush1.msra.mxu0 0.0
    %2441 = vmatprep.subr.mxu0 0.0
    %2442 = vmatpush1.msra.mxu0 0.0
    %2443 = vmatprep.subr.mxu0 0.0
    %2444 = vmatpush1.msra.mxu0 0.0
    %2445 = vmatprep.subr.mxu0 0.0
    %2446 = vmatpush1.msra.mxu0 0.0
    %2447 = vmatprep.mubr.f32.mxu0 0.0
    %v2448 = vand.u32 %v2377, 4294901760
    %v2449 = vsub.f32 %v2377, %v2448
    %v2450 = vand.u32 %v2449, 4294901760
    %v2451 = vsub.f32 %v2449, %v2450
    %v2452 = vand.u32 %v2451, 4294901760
    %2453 = vmatmul.mubr.f32.gmra.mrb[0].mxu0 %v2452
    %v2454 = vpop.f32.mrb[0].mxu0
    %v2455 = vadd.f32 0.0, %v2454
    %v2456 = vpop.f32.mrb[0].mxu0
    %v2457 = vadd.f32 0.0, %v2456
    %2458 = vmatprep.mubr.f32.mxu0 0.0
    %v2459 = vand.u32 %v2379, 4294901760
    %v2460 = vsub.f32 %v2379, %v2459
    %v2461 = vand.u32 %v2460, 4294901760
    %v2462 = vsub.f32 %v2460, %v2461
    %v2463 = vand.u32 %v2462, 4294901760
    %2464 = vmatmul.mubr.f32.gmra.mrb[0].mxu0 %v2463
    %v2465 = vpop.f32.mrb[0].mxu0
    %v2466 = vadd.f32 0.0, %v2465
    %v2467 = vpop.f32.mrb[0].mxu0
    %v2468 = vadd.f32 0.0, %v2467
    %2469 = vdwg.mxu0
    %v2470 = vand.u32 %v2307, 4294901760
    %v2471 = vsub.f32 %v2307, %v2470
    %v2472 = vand.u32 %v2471, 4294901760
    %v2473 = vsub.f32 %v2471, %v2472
    %v2474 = vand.u32 %v2473, 4294901760
    %2475 = vmatprep.subr.mxu0 %v2474
    %v2476 = vand.u32 %v2306, 4294901760
    %v2477 = vsub.f32 %v2306, %v2476
    %v2478 = vand.u32 %v2477, 4294901760
    %v2479 = vsub.f32 %v2477, %v2478
    %v2480 = vand.u32 %v2479, 4294901760
    %2481 = vmatpush1.msra.mxu0 %v2480
    %2482 = vmatprep.subr.mxu0 0.0
    %2483 = vmatpush1.msra.mxu0 0.0
    %2484 = vmatprep.subr.mxu0 0.0
    %2485 = vmatpush1.msra.mxu0 0.0
    %2486 = vmatprep.subr.mxu0 0.0
    %2487 = vmatpush1.msra.mxu0 0.0
    %2488 = vmatprep.subr.mxu0 0.0
    %2489 = vmatpush1.msra.mxu0 0.0
    %2490 = vmatprep.subr.mxu0 0.0
    %2491 = vmatpush1.msra.mxu0 0.0
    %2492 = vmatprep.subr.mxu0 0.0
    %2493 = vmatpush1.msra.mxu0 0.0
    %2494 = vmatprep.subr.mxu0 0.0
    %2495 = vmatpush1.msra.mxu0 0.0
    %2496 = vmatprep.subr.mxu0 0.0
    %2497 = vmatpush1.msra.mxu0 0.0
    %2498 = vmatprep.subr.mxu0 0.0
    %2499 = vmatpush1.msra.mxu0 0.0
    %2500 = vmatprep.subr.mxu0 0.0
    %2501 = vmatpush1.msra.mxu0 0.0
    %2502 = vmatprep.subr.mxu0 0.0
    %2503 = vmatpush1.msra.mxu0 0.0
    %2504 = vmatprep.subr.mxu0 0.0
    %2505 = vmatpush1.msra.mxu0 0.0
    %2506 = vmatprep.subr.mxu0 0.0
    %2507 = vmatpush1.msra.mxu0 0.0
    %2508 = vmatprep.subr.mxu0 0.0
    %2509 = vmatpush1.msra.mxu0 0.0
    %2510 = vmatprep.subr.mxu0 0.0
    %2511 = vmatpush1.msra.mxu0 0.0
    %2512 = vmatprep.subr.mxu0 0.0
    %2513 = vmatpush1.msra.mxu0 0.0
    %2514 = vmatprep.subr.mxu0 0.0
    %2515 = vmatpush1.msra.mxu0 0.0
    %2516 = vmatprep.subr.mxu0 0.0
    %2517 = vmatpush1.msra.mxu0 0.0
    %2518 = vmatprep.subr.mxu0 0.0
    %2519 = vmatpush1.msra.mxu0 0.0
    %2520 = vmatprep.subr.mxu0 0.0
    %2521 = vmatpush1.msra.mxu0 0.0
    %2522 = vmatprep.subr.mxu0 0.0
    %2523 = vmatpush1.msra.mxu0 0.0
    %2524 = vmatprep.subr.mxu0 0.0
    %2525 = vmatpush1.msra.mxu0 0.0
    %2526 = vmatprep.subr.mxu0 0.0
    %2527 = vmatpush1.msra.mxu0 0.0
    %2528 = vmatprep.subr.mxu0 0.0
    %2529 = vmatpush1.msra.mxu0 0.0
    %2530 = vmatprep.subr.mxu0 0.0
    %2531 = vmatpush1.msra.mxu0 0.0
    %2532 = vmatprep.subr.mxu0 0.0
    %2533 = vmatpush1.msra.mxu0 0.0
    %2534 = vmatprep.subr.mxu0 0.0
    %2535 = vmatpush1.msra.mxu0 0.0
    %2536 = vmatprep.subr.mxu0 0.0
    %2537 = vmatpush1.msra.mxu0 0.0
    %2538 = vmatprep.subr.mxu0 0.0
    %2539 = vmatpush1.msra.mxu0 0.0
    %2540 = vmatprep.subr.mxu0 0.0
    %2541 = vmatpush1.msra.mxu0 0.0
    %2542 = vmatprep.subr.mxu0 0.0
    %2543 = vmatpush1.msra.mxu0 0.0
    %2544 = vmatprep.mubr.f32.mxu0 0.0
    %v2545 = vand.u32 %v2377, 4294901760
    %2546 = vmatmul.mubr.f32.gmra.mrb[0].mxu0 %v2545
    %v2547 = vpop.f32.mrb[0].mxu0
    %v2548 = vadd.f32 %v2455, %v2547
    %v2549 = vpop.f32.mrb[0].mxu0
    %v2550 = vadd.f32 %v2457, %v2549
    %2551 = vmatprep.mubr.f32.mxu0 0.0
    %v2552 = vand.u32 %v2379, 4294901760
    %2553 = vmatmul.mubr.f32.gmra.mrb[0].mxu0 %v2552
    %v2554 = vpop.f32.mrb[0].mxu0
    %v2555 = vadd.f32 %v2466, %v2554
    %v2556 = vpop.f32.mrb[0].mxu0
    %v2557 = vadd.f32 %v2468, %v2556
    %2558 = vdwg.mxu0
    %v2559 = vand.u32 %v2307, 4294901760
    %v2560 = vsub.f32 %v2307, %v2559
    %2561 = vmatprep.subr.mxu0 %v2560
    %v2562 = vand.u32 %v2306, 4294901760
    %v2563 = vsub.f32 %v2306, %v2562
    %2564 = vmatpush1.msra.mxu0 %v2563
    %2565 = vmatprep.subr.mxu0 0.0
    %2566 = vmatpush1.msra.mxu0 0.0
    %2567 = vmatprep.subr.mxu0 0.0
    %2568 = vmatpush1.msra.mxu0 0.0
    %2569 = vmatprep.subr.mxu0 0.0
    %2570 = vmatpush1.msra.mxu0 0.0
    %2571 = vmatprep.subr.mxu0 0.0
    %2572 = vmatpush1.msra.mxu0 0.0
    %2573 = vmatprep.subr.mxu0 0.0
    %2574 = vmatpush1.msra.mxu0 0.0
    %2575 = vmatprep.subr.mxu0 0.0
    %2576 = vmatpush1.msra.mxu0 0.0
    %2577 = vmatprep.subr.mxu0 0.0
    %2578 = vmatpush1.msra.mxu0 0.0
    %2579 = vmatprep.subr.mxu0 0.0
    %2580 = vmatpush1.msra.mxu0 0.0
    %2581 = vmatprep.subr.mxu0 0.0
    %2582 = vmatpush1.msra.mxu0 0.0
    %2583 = vmatprep.subr.mxu0 0.0
    %2584 = vmatpush1.msra.mxu0 0.0
    %2585 = vmatprep.subr.mxu0 0.0
    %2586 = vmatpush1.msra.mxu0 0.0
    %2587 = vmatprep.subr.mxu0 0.0
    %2588 = vmatpush1.msra.mxu0 0.0
    %2589 = vmatprep.subr.mxu0 0.0
    %2590 = vmatpush1.msra.mxu0 0.0
    %2591 = vmatprep.subr.mxu0 0.0
    %2592 = vmatpush1.msra.mxu0 0.0
    %2593 = vmatprep.subr.mxu0 0.0
    %2594 = vmatpush1.msra.mxu0 0.0
    %2595 = vmatprep.subr.mxu0 0.0
    %2596 = vmatpush1.msra.mxu0 0.0
    %2597 = vmatprep.subr.mxu0 0.0
    %2598 = vmatpush1.msra.mxu0 0.0
    %2599 = vmatprep.subr.mxu0 0.0
    %2600 = vmatpush1.msra.mxu0 0.0
    %2601 = vmatprep.subr.mxu0 0.0
    %2602 = vmatpush1.msra.mxu0 0.0
    %2603 = vmatprep.subr.mxu0 0.0
    %2604 = vmatpush1.msra.mxu0 0.0
    %2605 = vmatprep.subr.mxu0 0.0
    %2606 = vmatpush1.msra.mxu0 0.0
    %2607 = vmatprep.subr.mxu0 0.0
    %2608 = vmatpush1.msra.mxu0 0.0
    %2609 = vmatprep.subr.mxu0 0.0
    %2610 = vmatpush1.msra.mxu0 0.0
    %2611 = vmatprep.subr.mxu0 0.0
    %2612 = vmatpush1.msra.mxu0 0.0
    %2613 = vmatprep.subr.mxu0 0.0
    %2614 = vmatpush1.msra.mxu0 0.0
    %2615 = vmatprep.subr.mxu0 0.0
    %2616 = vmatpush1.msra.mxu0 0.0
    %2617 = vmatprep.subr.mxu0 0.0
    %2618 = vmatpush1.msra.mxu0 0.0
    %2619 = vmatprep.subr.mxu0 0.0
    %2620 = vmatpush1.msra.mxu0 0.0
    %2621 = vmatprep.subr.mxu0 0.0
    %2622 = vmatpush1.msra.mxu0 0.0
    %2623 = vmatprep.subr.mxu0 0.0
    %2624 = vmatpush1.msra.mxu0 0.0
    %2625 = vmatprep.subr.mxu0 0.0
    %2626 = vmatpush1.msra.mxu0 0.0
    %2627 = vmatprep.mubr.f32.mxu0 0.0
    %v2628 = vand.u32 %v2377, 4294901760
    %v2629 = vsub.f32 %v2377, %v2628
    %2630 = vmatmul.mubr.f32.gmra.mrb[0].mxu0 %v2629
    %v2631 = vpop.f32.mrb[0].mxu0
    %v2632 = vadd.f32 %v2548, %v2631
    %v2633 = vpop.f32.mrb[0].mxu0
    %v2634 = vadd.f32 %v2550, %v2633
    %2635 = vmatprep.mubr.f32.mxu0 0.0
    %v2636 = vand.u32 %v2379, 4294901760
    %v2637 = vsub.f32 %v2379, %v2636
    %2638 = vmatmul.mubr.f32.gmra.mrb[0].mxu0 %v2637
    %v2639 = vpop.f32.mrb[0].mxu0
    %v2640 = vadd.f32 %v2555, %v2639
    %v2641 = vpop.f32.mrb[0].mxu0
    %v2642 = vadd.f32 %v2557, %v2641
    %2643 = vdwg.mxu0
    %v2644 = vand.u32 %v2307, 4294901760
    %2645 = vmatprep.subr.mxu0 %v2644
    %v2646 = vand.u32 %v2306, 4294901760
    %2647 = vmatpush1.msra.mxu0 %v2646
    %2648 = vmatprep.subr.mxu0 0.0
    %2649 = vmatpush1.msra.mxu0 0.0
    %2650 = vmatprep.subr.mxu0 0.0
    %2651 = vmatpush1.msra.mxu0 0.0
    %2652 = vmatprep.subr.mxu0 0.0
    %2653 = vmatpush1.msra.mxu0 0.0
    %2654 = vmatprep.subr.mxu0 0.0
    %2655 = vmatpush1.msra.mxu0 0.0
    %2656 = vmatprep.subr.mxu0 0.0
    %2657 = vmatpush1.msra.mxu0 0.0
    %2658 = vmatprep.subr.mxu0 0.0
    %2659 = vmatpush1.msra.mxu0 0.0
    %2660 = vmatprep.subr.mxu0 0.0
    %2661 = vmatpush1.msra.mxu0 0.0
    %2662 = vmatprep.subr.mxu0 0.0
    %2663 = vmatpush1.msra.mxu0 0.0
    %2664 = vmatprep.subr.mxu0 0.0
    %2665 = vmatpush1.msra.mxu0 0.0
    %2666 = vmatprep.subr.mxu0 0.0
    %2667 = vmatpush1.msra.mxu0 0.0
    %2668 = vmatprep.subr.mxu0 0.0
    %2669 = vmatpush1.msra.mxu0 0.0
    %2670 = vmatprep.subr.mxu0 0.0
    %2671 = vmatpush1.msra.mxu0 0.0
    %2672 = vmatprep.subr.mxu0 0.0
    %2673 = vmatpush1.msra.mxu0 0.0
    %2674 = vmatprep.subr.mxu0 0.0
    %2675 = vmatpush1.msra.mxu0 0.0
    %2676 = vmatprep.subr.mxu0 0.0
    %2677 = vmatpush1.msra.mxu0 0.0
    %2678 = vmatprep.subr.mxu0 0.0
    %2679 = vmatpush1.msra.mxu0 0.0
    %2680 = vmatprep.subr.mxu0 0.0
    %2681 = vmatpush1.msra.mxu0 0.0
    %2682 = vmatprep.subr.mxu0 0.0
    %2683 = vmatpush1.msra.mxu0 0.0
    %2684 = vmatprep.subr.mxu0 0.0
    %2685 = vmatpush1.msra.mxu0 0.0
    %2686 = vmatprep.subr.mxu0 0.0
    %2687 = vmatpush1.msra.mxu0 0.0
    %2688 = vmatprep.subr.mxu0 0.0
    %2689 = vmatpush1.msra.mxu0 0.0
    %2690 = vmatprep.subr.mxu0 0.0
    %2691 = vmatpush1.msra.mxu0 0.0
    %2692 = vmatprep.subr.mxu0 0.0
    %2693 = vmatpush1.msra.mxu0 0.0
    %2694 = vmatprep.subr.mxu0 0.0
    %2695 = vmatpush1.msra.mxu0 0.0
    %2696 = vmatprep.subr.mxu0 0.0
    %2697 = vmatpush1.msra.mxu0 0.0
    %2698 = vmatprep.subr.mxu0 0.0
    %2699 = vmatpush1.msra.mxu0 0.0
    %2700 = vmatprep.subr.mxu0 0.0
    %2701 = vmatpush1.msra.mxu0 0.0
    %2702 = vmatprep.subr.mxu0 0.0
    %2703 = vmatpush1.msra.mxu0 0.0
    %2704 = vmatprep.subr.mxu0 0.0
    %2705 = vmatpush1.msra.mxu0 0.0
    %2706 = vmatprep.subr.mxu0 0.0
    %2707 = vmatpush1.msra.mxu0 0.0
    %2708 = vmatprep.subr.mxu0 0.0
    %2709 = vmatpush1.msra.mxu0 0.0
    %2710 = vmatprep.mubr.f32.mxu0 0.0
    %v2711 = vand.u32 %v2377, 4294901760
    %v2712 = vsub.f32 %v2377, %v2711
    %v2713 = vand.u32 %v2712, 4294901760
    %2714 = vmatmul.mubr.f32.gmra.mrb[0].mxu0 %v2713
    %v2715 = vpop.f32.mrb[0].mxu0
    %v2716 = vadd.f32 %v2632, %v2715
    %v2717 = vpop.f32.mrb[0].mxu0
    %v2718 = vadd.f32 %v2634, %v2717
    %2719 = vmatprep.mubr.f32.mxu0 0.0
    %v2720 = vand.u32 %v2379, 4294901760
    %v2721 = vsub.f32 %v2379, %v2720
    %v2722 = vand.u32 %v2721, 4294901760
    %2723 = vmatmul.mubr.f32.gmra.mrb[0].mxu0 %v2722
    %v2724 = vpop.f32.mrb[0].mxu0
    %v2725 = vadd.f32 %v2640, %v2724
    %v2726 = vpop.f32.mrb[0].mxu0
    %v2727 = vadd.f32 %v2642, %v2726
    %2728 = vdwg.mxu0
    %v2729 = vand.u32 %v2307, 4294901760
    %v2730 = vsub.f32 %v2307, %v2729
    %v2731 = vand.u32 %v2730, 4294901760
    %2732 = vmatprep.subr.mxu0 %v2731
    %v2733 = vand.u32 %v2306, 4294901760
    %v2734 = vsub.f32 %v2306, %v2733
    %v2735 = vand.u32 %v2734, 4294901760
    %2736 = vmatpush1.msra.mxu0 %v2735
    %2737 = vmatprep.subr.mxu0 0.0
    %2738 = vmatpush1.msra.mxu0 0.0
    %2739 = vmatprep.subr.mxu0 0.0
    %2740 = vmatpush1.msra.mxu0 0.0
    %2741 = vmatprep.subr.mxu0 0.0
    %2742 = vmatpush1.msra.mxu0 0.0
    %2743 = vmatprep.subr.mxu0 0.0
    %2744 = vmatpush1.msra.mxu0 0.0
    %2745 = vmatprep.subr.mxu0 0.0
    %2746 = vmatpush1.msra.mxu0 0.0
    %2747 = vmatprep.subr.mxu0 0.0
    %2748 = vmatpush1.msra.mxu0 0.0
    %2749 = vmatprep.subr.mxu0 0.0
    %2750 = vmatpush1.msra.mxu0 0.0
    %2751 = vmatprep.subr.mxu0 0.0
    %2752 = vmatpush1.msra.mxu0 0.0
    %2753 = vmatprep.subr.mxu0 0.0
    %2754 = vmatpush1.msra.mxu0 0.0
    %2755 = vmatprep.subr.mxu0 0.0
    %2756 = vmatpush1.msra.mxu0 0.0
    %2757 = vmatprep.subr.mxu0 0.0
    %2758 = vmatpush1.msra.mxu0 0.0
    %2759 = vmatprep.subr.mxu0 0.0
    %2760 = vmatpush1.msra.mxu0 0.0
    %2761 = vmatprep.subr.mxu0 0.0
    %2762 = vmatpush1.msra.mxu0 0.0
    %2763 = vmatprep.subr.mxu0 0.0
    %2764 = vmatpush1.msra.mxu0 0.0
    %2765 = vmatprep.subr.mxu0 0.0
    %2766 = vmatpush1.msra.mxu0 0.0
    %2767 = vmatprep.subr.mxu0 0.0
    %2768 = vmatpush1.msra.mxu0 0.0
    %2769 = vmatprep.subr.mxu0 0.0
    %2770 = vmatpush1.msra.mxu0 0.0
    %2771 = vmatprep.subr.mxu0 0.0
    %2772 = vmatpush1.msra.mxu0 0.0
    %2773 = vmatprep.subr.mxu0 0.0
    %2774 = vmatpush1.msra.mxu0 0.0
    %2775 = vmatprep.subr.mxu0 0.0
    %2776 = vmatpush1.msra.mxu0 0.0
    %2777 = vmatprep.subr.mxu0 0.0
    %2778 = vmatpush1.msra.mxu0 0.0
    %2779 = vmatprep.subr.mxu0 0.0
    %2780 = vmatpush1.msra.mxu0 0.0
    %2781 = vmatprep.subr.mxu0 0.0
    %2782 = vmatpush1.msra.mxu0 0.0
    %2783 = vmatprep.subr.mxu0 0.0
    %2784 = vmatpush1.msra.mxu0 0.0
    %2785 = vmatprep.subr.mxu0 0.0
    %2786 = vmatpush1.msra.mxu0 0.0
    %2787 = vmatprep.subr.mxu0 0.0
    %2788 = vmatpush1.msra.mxu0 0.0
    %2789 = vmatprep.subr.mxu0 0.0
    %2790 = vmatpush1.msra.mxu0 0.0
    %2791 = vmatprep.subr.mxu0 0.0
    %2792 = vmatpush1.msra.mxu0 0.0
    %2793 = vmatprep.subr.mxu0 0.0
    %2794 = vmatpush1.msra.mxu0 0.0
    %2795 = vmatprep.subr.mxu0 0.0
    %2796 = vmatpush1.msra.mxu0 0.0
    %2797 = vmatprep.subr.mxu0 0.0
    %2798 = vmatpush1.msra.mxu0 0.0
    %2799 = vmatprep.mubr.f32.mxu0 0.0
    %v2800 = vand.u32 %v2377, 4294901760
    %2801 = vmatmul.mubr.f32.gmra.mrb[0].mxu0 %v2800
    %v2802 = vpop.f32.mrb[0].mxu0
    %v2803 = vadd.f32 %v2716, %v2802
    %v2804 = vpop.f32.mrb[0].mxu0
    %v2805 = vadd.f32 %v2718, %v2804
    %2806 = vmatprep.mubr.f32.mxu0 0.0
    %v2807 = vand.u32 %v2379, 4294901760
    %2808 = vmatmul.mubr.f32.gmra.mrb[0].mxu0 %v2807
    %v2809 = vpop.f32.mrb[0].mxu0
    %v2810 = vadd.f32 %v2725, %v2809
    %v2811 = vpop.f32.mrb[0].mxu0
    %v2812 = vadd.f32 %v2727, %v2811
    %2813 = vdwg.mxu0
    %v2814 = vand.u32 %v2307, 4294901760
    %2815 = vmatprep.subr.mxu0 %v2814
    %v2816 = vand.u32 %v2306, 4294901760
    %2817 = vmatpush1.msra.mxu0 %v2816
    %2818 = vmatprep.subr.mxu0 0.0
    %2819 = vmatpush1.msra.mxu0 0.0
    %2820 = vmatprep.subr.mxu0 0.0
    %2821 = vmatpush1.msra.mxu0 0.0
    %2822 = vmatprep.subr.mxu0 0.0
    %2823 = vmatpush1.msra.mxu0 0.0
    %2824 = vmatprep.subr.mxu0 0.0
    %2825 = vmatpush1.msra.mxu0 0.0
    %2826 = vmatprep.subr.mxu0 0.0
    %2827 = vmatpush1.msra.mxu0 0.0
    %2828 = vmatprep.subr.mxu0 0.0
    %2829 = vmatpush1.msra.mxu0 0.0
    %2830 = vmatprep.subr.mxu0 0.0
    %2831 = vmatpush1.msra.mxu0 0.0
    %2832 = vmatprep.subr.mxu0 0.0
    %2833 = vmatpush1.msra.mxu0 0.0
    %2834 = vmatprep.subr.mxu0 0.0
    %2835 = vmatpush1.msra.mxu0 0.0
    %2836 = vmatprep.subr.mxu0 0.0
    %2837 = vmatpush1.msra.mxu0 0.0
    %2838 = vmatprep.subr.mxu0 0.0
    %2839 = vmatpush1.msra.mxu0 0.0
    %2840 = vmatprep.subr.mxu0 0.0
    %2841 = vmatpush1.msra.mxu0 0.0
    %2842 = vmatprep.subr.mxu0 0.0
    %2843 = vmatpush1.msra.mxu0 0.0
    %2844 = vmatprep.subr.mxu0 0.0
    %2845 = vmatpush1.msra.mxu0 0.0
    %2846 = vmatprep.subr.mxu0 0.0
    %2847 = vmatpush1.msra.mxu0 0.0
    %2848 = vmatprep.subr.mxu0 0.0
    %2849 = vmatpush1.msra.mxu0 0.0
    %2850 = vmatprep.subr.mxu0 0.0
    %2851 = vmatpush1.msra.mxu0 0.0
    %2852 = vmatprep.subr.mxu0 0.0
    %2853 = vmatpush1.msra.mxu0 0.0
    %2854 = vmatprep.subr.mxu0 0.0
    %2855 = vmatpush1.msra.mxu0 0.0
    %2856 = vmatprep.subr.mxu0 0.0
    %2857 = vmatpush1.msra.mxu0 0.0
    %2858 = vmatprep.subr.mxu0 0.0
    %2859 = vmatpush1.msra.mxu0 0.0
    %2860 = vmatprep.subr.mxu0 0.0
    %2861 = vmatpush1.msra.mxu0 0.0
    %2862 = vmatprep.subr.mxu0 0.0
    %2863 = vmatpush1.msra.mxu0 0.0
    %2864 = vmatprep.subr.mxu0 0.0
    %2865 = vmatpush1.msra.mxu0 0.0
    %2866 = vmatprep.subr.mxu0 0.0
    %2867 = vmatpush1.msra.mxu0 0.0
    %2868 = vmatprep.subr.mxu0 0.0
    %2869 = vmatpush1.msra.mxu0 0.0
    %2870 = vmatprep.subr.mxu0 0.0
    %2871 = vmatpush1.msra.mxu0 0.0
    %2872 = vmatprep.subr.mxu0 0.0
    %2873 = vmatpush1.msra.mxu0 0.0
    %2874 = vmatprep.subr.mxu0 0.0
    %2875 = vmatpush1.msra.mxu0 0.0
    %2876 = vmatprep.subr.mxu0 0.0
    %2877 = vmatpush1.msra.mxu0 0.0
    %2878 = vmatprep.subr.mxu0 0.0
    %2879 = vmatpush1.msra.mxu0 0.0
    %2880 = vmatprep.mubr.f32.mxu0 0.0
    %v2881 = vand.u32 %v2377, 4294901760
    %2882 = vmatmul.mubr.f32.gmra.mrb[0].mxu0 %v2881
    %v2883 = vpop.f32.mrb[0].mxu0
    %v2884 = vadd.f32 %v2803, %v2883
    %v2885 = vpop.f32.mrb[0].mxu0
    %v2886 = vadd.f32 %v2805, %v2885
    %2887 = vmatprep.mubr.f32.mxu0 0.0
    %v2888 = vand.u32 %v2379, 4294901760
    %2889 = vmatmul.mubr.f32.gmra.mrb[0].mxu0 %v2888
    %v2890 = vpop.f32.mrb[0].mxu0
    %v2891 = vadd.f32 %v2810, %v2890
    %v2892 = vpop.f32.mrb[0].mxu0
    %v2893 = vadd.f32 %v2812, %v2892
    %2894 = vdwg.mxu0
    %v2895 = vsel %vm2376, %v24, 0
    %v2897 = vsel %vm2376, %v25, 0
    %v2899 = vand.u32 %v2277, 4294901760
    %2900 = vmatprep.subr.mxu0 %v2899
    %v2901 = vand.u32 %v2276, 4294901760
    %2902 = vmatpush1.msra.mxu0 %v2901
    %2903 = vmatprep.subr.mxu0 0.0
    %2904 = vmatpush1.msra.mxu0 0.0
    %2905 = vmatprep.subr.mxu0 0.0
    %2906 = vmatpush1.msra.mxu0 0.0
    %2907 = vmatprep.subr.mxu0 0.0
    %2908 = vmatpush1.msra.mxu0 0.0
    %2909 = vmatprep.subr.mxu0 0.0
    %2910 = vmatpush1.msra.mxu0 0.0
    %2911 = vmatprep.subr.mxu0 0.0
    %2912 = vmatpush1.msra.mxu0 0.0
    %2913 = vmatprep.subr.mxu0 0.0
    %2914 = vmatpush1.msra.mxu0 0.0
    %2915 = vmatprep.subr.mxu0 0.0
    %2916 = vmatpush1.msra.mxu0 0.0
    %2917 = vmatprep.subr.mxu0 0.0
    %2918 = vmatpush1.msra.mxu0 0.0
    %2919 = vmatprep.subr.mxu0 0.0
    %2920 = vmatpush1.msra.mxu0 0.0
    %2921 = vmatprep.subr.mxu0 0.0
    %2922 = vmatpush1.msra.mxu0 0.0
    %2923 = vmatprep.subr.mxu0 0.0
    %2924 = vmatpush1.msra.mxu0 0.0
    %2925 = vmatprep.subr.mxu0 0.0
    %2926 = vmatpush1.msra.mxu0 0.0
    %2927 = vmatprep.subr.mxu0 0.0
    %2928 = vmatpush1.msra.mxu0 0.0
    %2929 = vmatprep.subr.mxu0 0.0
    %2930 = vmatpush1.msra.mxu0 0.0
    %2931 = vmatprep.subr.mxu0 0.0
    %2932 = vmatpush1.msra.mxu0 0.0
    %2933 = vmatprep.subr.mxu0 0.0
    %2934 = vmatpush1.msra.mxu0 0.0
    %2935 = vmatprep.subr.mxu0 0.0
    %2936 = vmatpush1.msra.mxu0 0.0
    %2937 = vmatprep.subr.mxu0 0.0
    %2938 = vmatpush1.msra.mxu0 0.0
    %2939 = vmatprep.subr.mxu0 0.0
    %2940 = vmatpush1.msra.mxu0 0.0
    %2941 = vmatprep.subr.mxu0 0.0
    %2942 = vmatpush1.msra.mxu0 0.0
    %2943 = vmatprep.subr.mxu0 0.0
    %2944 = vmatpush1.msra.mxu0 0.0
    %2945 = vmatprep.subr.mxu0 0.0
    %2946 = vmatpush1.msra.mxu0 0.0
    %2947 = vmatprep.subr.mxu0 0.0
    %2948 = vmatpush1.msra.mxu0 0.0
    %2949 = vmatprep.subr.mxu0 0.0
    %2950 = vmatpush1.msra.mxu0 0.0
    %2951 = vmatprep.subr.mxu0 0.0
    %2952 = vmatpush1.msra.mxu0 0.0
    %2953 = vmatprep.subr.mxu0 0.0
    %2954 = vmatpush1.msra.mxu0 0.0
    %2955 = vmatprep.subr.mxu0 0.0
    %2956 = vmatpush1.msra.mxu0 0.0
    %2957 = vmatprep.subr.mxu0 0.0
    %2958 = vmatpush1.msra.mxu0 0.0
    %2959 = vmatprep.subr.mxu0 0.0
    %2960 = vmatpush1.msra.mxu0 0.0
    %2961 = vmatprep.subr.mxu0 0.0
    %2962 = vmatpush1.msra.mxu0 0.0
    %2963 = vmatprep.subr.mxu0 0.0
    %2964 = vmatpush1.msra.mxu0 0.0
    %2965 = vmatprep.mubr.f32.mxu0 0.0
    %v2966 = vand.u32 %v2895, 4294901760
    %v2967 = vsub.f32 %v2895, %v2966
    %v2968 = vand.u32 %v2967, 4294901760
    %v2969 = vsub.f32 %v2967, %v2968
    %v2970 = vand.u32 %v2969, 4294901760
    %2971 = vmatmul.mubr.f32.gmra.mrb[0].mxu0 %v2970
    %v2972 = vpop.f32.mrb[0].mxu0
    %v2973 = vadd.f32 %v2884, %v2972
    %v2974 = vpop.f32.mrb[0].mxu0
    %v2975 = vadd.f32 %v2886, %v2974
    %2976 = vmatprep.mubr.f32.mxu0 0.0
    %v2977 = vand.u32 %v2897, 4294901760
    %v2978 = vsub.f32 %v2897, %v2977
    %v2979 = vand.u32 %v2978, 4294901760
    %v2980 = vsub.f32 %v2978, %v2979
    %v2981 = vand.u32 %v2980, 4294901760
    %2982 = vmatmul.mubr.f32.gmra.mrb[0].mxu0 %v2981
    %v2983 = vpop.f32.mrb[0].mxu0
    %v2984 = vadd.f32 %v2891, %v2983
    %v2985 = vpop.f32.mrb[0].mxu0
    %v2986 = vadd.f32 %v2893, %v2985
    %2987 = vdwg.mxu0
    %v2988 = vand.u32 %v2277, 4294901760
    %v2989 = vsub.f32 %v2277, %v2988
    %v2990 = vand.u32 %v2989, 4294901760
    %v2991 = vsub.f32 %v2989, %v2990
    %v2992 = vand.u32 %v2991, 4294901760
    %2993 = vmatprep.subr.mxu0 %v2992
    %v2994 = vand.u32 %v2276, 4294901760
    %v2995 = vsub.f32 %v2276, %v2994
    %v2996 = vand.u32 %v2995, 4294901760
    %v2997 = vsub.f32 %v2995, %v2996
    %v2998 = vand.u32 %v2997, 4294901760
    %2999 = vmatpush1.msra.mxu0 %v2998
    %3000 = vmatprep.subr.mxu0 0.0
    %3001 = vmatpush1.msra.mxu0 0.0
    %3002 = vmatprep.subr.mxu0 0.0
    %3003 = vmatpush1.msra.mxu0 0.0
    %3004 = vmatprep.subr.mxu0 0.0
    %3005 = vmatpush1.msra.mxu0 0.0
    %3006 = vmatprep.subr.mxu0 0.0
    %3007 = vmatpush1.msra.mxu0 0.0
    %3008 = vmatprep.subr.mxu0 0.0
    %3009 = vmatpush1.msra.mxu0 0.0
    %3010 = vmatprep.subr.mxu0 0.0
    %3011 = vmatpush1.msra.mxu0 0.0
    %3012 = vmatprep.subr.mxu0 0.0
    %3013 = vmatpush1.msra.mxu0 0.0
    %3014 = vmatprep.subr.mxu0 0.0
    %3015 = vmatpush1.msra.mxu0 0.0
    %3016 = vmatprep.subr.mxu0 0.0
    %3017 = vmatpush1.msra.mxu0 0.0
    %3018 = vmatprep.subr.mxu0 0.0
    %3019 = vmatpush1.msra.mxu0 0.0
    %3020 = vmatprep.subr.mxu0 0.0
    %3021 = vmatpush1.msra.mxu0 0.0
    %3022 = vmatprep.subr.mxu0 0.0
    %3023 = vmatpush1.msra.mxu0 0.0
    %3024 = vmatprep.subr.mxu0 0.0
    %3025 = vmatpush1.msra.mxu0 0.0
    %3026 = vmatprep.subr.mxu0 0.0
    %3027 = vmatpush1.msra.mxu0 0.0
    %3028 = vmatprep.subr.mxu0 0.0
    %3029 = vmatpush1.msra.mxu0 0.0
    %3030 = vmatprep.subr.mxu0 0.0
    %3031 = vmatpush1.msra.mxu0 0.0
    %3032 = vmatprep.subr.mxu0 0.0
    %3033 = vmatpush1.msra.mxu0 0.0
    %3034 = vmatprep.subr.mxu0 0.0
    %3035 = vmatpush1.msra.mxu0 0.0
    %3036 = vmatprep.subr.mxu0 0.0
    %3037 = vmatpush1.msra.mxu0 0.0
    %3038 = vmatprep.subr.mxu0 0.0
    %3039 = vmatpush1.msra.mxu0 0.0
    %3040 = vmatprep.subr.mxu0 0.0
    %3041 = vmatpush1.msra.mxu0 0.0
    %3042 = vmatprep.subr.mxu0 0.0
    %3043 = vmatpush1.msra.mxu0 0.0
    %3044 = vmatprep.subr.mxu0 0.0
    %3045 = vmatpush1.msra.mxu0 0.0
    %3046 = vmatprep.subr.mxu0 0.0
    %3047 = vmatpush1.msra.mxu0 0.0
    %3048 = vmatprep.subr.mxu0 0.0
    %3049 = vmatpush1.msra.mxu0 0.0
    %3050 = vmatprep.subr.mxu0 0.0
    %3051 = vmatpush1.msra.mxu0 0.0
    %3052 = vmatprep.subr.mxu0 0.0
    %3053 = vmatpush1.msra.mxu0 0.0
    %3054 = vmatprep.subr.mxu0 0.0
    %3055 = vmatpush1.msra.mxu0 0.0
    %3056 = vmatprep.subr.mxu0 0.0
    %3057 = vmatpush1.msra.mxu0 0.0
    %3058 = vmatprep.subr.mxu0 0.0
    %3059 = vmatpush1.msra.mxu0 0.0
    %3060 = vmatprep.subr.mxu0 0.0
    %3061 = vmatpush1.msra.mxu0 0.0
    %3062 = vmatprep.mubr.f32.mxu0 0.0
    %v3063 = vand.u32 %v2895, 4294901760
    %3064 = vmatmul.mubr.f32.gmra.mrb[0].mxu0 %v3063
    %v3065 = vpop.f32.mrb[0].mxu0
    %v3066 = vadd.f32 %v2973, %v3065
    %v3067 = vpop.f32.mrb[0].mxu0
    %v3068 = vadd.f32 %v2975, %v3067
    %3069 = vmatprep.mubr.f32.mxu0 0.0
    %v3070 = vand.u32 %v2897, 4294901760
    %3071 = vmatmul.mubr.f32.gmra.mrb[0].mxu0 %v3070
    %v3072 = vpop.f32.mrb[0].mxu0
    %v3073 = vadd.f32 %v2984, %v3072
    %v3074 = vpop.f32.mrb[0].mxu0
    %v3075 = vadd.f32 %v2986, %v3074
    %3076 = vdwg.mxu0
    %v3077 = vand.u32 %v2277, 4294901760
    %v3078 = vsub.f32 %v2277, %v3077
    %3079 = vmatprep.subr.mxu0 %v3078
    %v3080 = vand.u32 %v2276, 4294901760
    %v3081 = vsub.f32 %v2276, %v3080
    %3082 = vmatpush1.msra.mxu0 %v3081
    %3083 = vmatprep.subr.mxu0 0.0
    %3084 = vmatpush1.msra.mxu0 0.0
    %3085 = vmatprep.subr.mxu0 0.0
    %3086 = vmatpush1.msra.mxu0 0.0
    %3087 = vmatprep.subr.mxu0 0.0
    %3088 = vmatpush1.msra.mxu0 0.0
    %3089 = vmatprep.subr.mxu0 0.0
    %3090 = vmatpush1.msra.mxu0 0.0
    %3091 = vmatprep.subr.mxu0 0.0
    %3092 = vmatpush1.msra.mxu0 0.0
    %3093 = vmatprep.subr.mxu0 0.0
    %3094 = vmatpush1.msra.mxu0 0.0
    %3095 = vmatprep.subr.mxu0 0.0
    %3096 = vmatpush1.msra.mxu0 0.0
    %3097 = vmatprep.subr.mxu0 0.0
    %3098 = vmatpush1.msra.mxu0 0.0
    %3099 = vmatprep.subr.mxu0 0.0
    %3100 = vmatpush1.msra.mxu0 0.0
    %3101 = vmatprep.subr.mxu0 0.0
    %3102 = vmatpush1.msra.mxu0 0.0
    %3103 = vmatprep.subr.mxu0 0.0
    %3104 = vmatpush1.msra.mxu0 0.0
    %3105 = vmatprep.subr.mxu0 0.0
    %3106 = vmatpush1.msra.mxu0 0.0
    %3107 = vmatprep.subr.mxu0 0.0
    %3108 = vmatpush1.msra.mxu0 0.0
    %3109 = vmatprep.subr.mxu0 0.0
    %3110 = vmatpush1.msra.mxu0 0.0
    %3111 = vmatprep.subr.mxu0 0.0
    %3112 = vmatpush1.msra.mxu0 0.0
    %3113 = vmatprep.subr.mxu0 0.0
    %3114 = vmatpush1.msra.mxu0 0.0
    %3115 = vmatprep.subr.mxu0 0.0
    %3116 = vmatpush1.msra.mxu0 0.0
    %3117 = vmatprep.subr.mxu0 0.0
    %3118 = vmatpush1.msra.mxu0 0.0
    %3119 = vmatprep.subr.mxu0 0.0
    %3120 = vmatpush1.msra.mxu0 0.0
    %3121 = vmatprep.subr.mxu0 0.0
    %3122 = vmatpush1.msra.mxu0 0.0
    %3123 = vmatprep.subr.mxu0 0.0
    %3124 = vmatpush1.msra.mxu0 0.0
    %3125 = vmatprep.subr.mxu0 0.0
    %3126 = vmatpush1.msra.mxu0 0.0
    %3127 = vmatprep.subr.mxu0 0.0
    %3128 = vmatpush1.msra.mxu0 0.0
    %3129 = vmatprep.subr.mxu0 0.0
    %3130 = vmatpush1.msra.mxu0 0.0
    %3131 = vmatprep.subr.mxu0 0.0
    %3132 = vmatpush1.msra.mxu0 0.0
    %3133 = vmatprep.subr.mxu0 0.0
    %3134 = vmatpush1.msra.mxu0 0.0
    %3135 = vmatprep.subr.mxu0 0.0
    %3136 = vmatpush1.msra.mxu0 0.0
    %3137 = vmatprep.subr.mxu0 0.0
    %3138 = vmatpush1.msra.mxu0 0.0
    %3139 = vmatprep.subr.mxu0 0.0
    %3140 = vmatpush1.msra.mxu0 0.0
    %3141 = vmatprep.subr.mxu0 0.0
    %3142 = vmatpush1.msra.mxu0 0.0
    %3143 = vmatprep.subr.mxu0 0.0
    %3144 = vmatpush1.msra.mxu0 0.0
    %3145 = vmatprep.mubr.f32.mxu0 0.0
    %v3146 = vand.u32 %v2895, 4294901760
    %v3147 = vsub.f32 %v2895, %v3146
    %3148 = vmatmul.mubr.f32.gmra.mrb[0].mxu0 %v3147
    %v3149 = vpop.f32.mrb[0].mxu0
    %v3150 = vadd.f32 %v3066, %v3149
    %v3151 = vpop.f32.mrb[0].mxu0
    %v3152 = vadd.f32 %v3068, %v3151
    %3153 = vmatprep.mubr.f32.mxu0 0.0
    %v3154 = vand.u32 %v2897, 4294901760
    %v3155 = vsub.f32 %v2897, %v3154
    %3156 = vmatmul.mubr.f32.gmra.mrb[0].mxu0 %v3155
    %v3157 = vpop.f32.mrb[0].mxu0
    %v3158 = vadd.f32 %v3073, %v3157
    %v3159 = vpop.f32.mrb[0].mxu0
    %v3160 = vadd.f32 %v3075, %v3159
    %3161 = vdwg.mxu0
    %v3162 = vand.u32 %v2277, 4294901760
    %3163 = vmatprep.subr.mxu0 %v3162
    %v3164 = vand.u32 %v2276, 4294901760
    %3165 = vmatpush1.msra.mxu0 %v3164
    %3166 = vmatprep.subr.mxu0 0.0
    %3167 = vmatpush1.msra.mxu0 0.0
    %3168 = vmatprep.subr.mxu0 0.0
    %3169 = vmatpush1.msra.mxu0 0.0
    %3170 = vmatprep.subr.mxu0 0.0
    %3171 = vmatpush1.msra.mxu0 0.0
    %3172 = vmatprep.subr.mxu0 0.0
    %3173 = vmatpush1.msra.mxu0 0.0
    %3174 = vmatprep.subr.mxu0 0.0
    %3175 = vmatpush1.msra.mxu0 0.0
    %3176 = vmatprep.subr.mxu0 0.0
    %3177 = vmatpush1.msra.mxu0 0.0
    %3178 = vmatprep.subr.mxu0 0.0
    %3179 = vmatpush1.msra.mxu0 0.0
    %3180 = vmatprep.subr.mxu0 0.0
    %3181 = vmatpush1.msra.mxu0 0.0
    %3182 = vmatprep.subr.mxu0 0.0
    %3183 = vmatpush1.msra.mxu0 0.0
    %3184 = vmatprep.subr.mxu0 0.0
    %3185 = vmatpush1.msra.mxu0 0.0
    %3186 = vmatprep.subr.mxu0 0.0
    %3187 = vmatpush1.msra.mxu0 0.0
    %3188 = vmatprep.subr.mxu0 0.0
    %3189 = vmatpush1.msra.mxu0 0.0
    %3190 = vmatprep.subr.mxu0 0.0
    %3191 = vmatpush1.msra.mxu0 0.0
    %3192 = vmatprep.subr.mxu0 0.0
    %3193 = vmatpush1.msra.mxu0 0.0
    %3194 = vmatprep.subr.mxu0 0.0
    %3195 = vmatpush1.msra.mxu0 0.0
    %3196 = vmatprep.subr.mxu0 0.0
    %3197 = vmatpush1.msra.mxu0 0.0
    %3198 = vmatprep.subr.mxu0 0.0
    %3199 = vmatpush1.msra.mxu0 0.0
    %3200 = vmatprep.subr.mxu0 0.0
    %3201 = vmatpush1.msra.mxu0 0.0
    %3202 = vmatprep.subr.mxu0 0.0
    %3203 = vmatpush1.msra.mxu0 0.0
    %3204 = vmatprep.subr.mxu0 0.0
    %3205 = vmatpush1.msra.mxu0 0.0
    %3206 = vmatprep.subr.mxu0 0.0
    %3207 = vmatpush1.msra.mxu0 0.0
    %3208 = vmatprep.subr.mxu0 0.0
    %3209 = vmatpush1.msra.mxu0 0.0
    %3210 = vmatprep.subr.mxu0 0.0
    %3211 = vmatpush1.msra.mxu0 0.0
    %3212 = vmatprep.subr.mxu0 0.0
    %3213 = vmatpush1.msra.mxu0 0.0
    %3214 = vmatprep.subr.mxu0 0.0
    %3215 = vmatpush1.msra.mxu0 0.0
    %3216 = vmatprep.subr.mxu0 0.0
    %3217 = vmatpush1.msra.mxu0 0.0
    %3218 = vmatprep.subr.mxu0 0.0
    %3219 = vmatpush1.msra.mxu0 0.0
    %3220 = vmatprep.subr.mxu0 0.0
    %3221 = vmatpush1.msra.mxu0 0.0
    %3222 = vmatprep.subr.mxu0 0.0
    %3223 = vmatpush1.msra.mxu0 0.0
    %3224 = vmatprep.subr.mxu0 0.0
    %3225 = vmatpush1.msra.mxu0 0.0
    %3226 = vmatprep.subr.mxu0 0.0
    %3227 = vmatpush1.msra.mxu0 0.0
    %3228 = vmatprep.mubr.f32.mxu0 0.0
    %v3229 = vand.u32 %v2895, 4294901760
    %v3230 = vsub.f32 %v2895, %v3229
    %v3231 = vand.u32 %v3230, 4294901760
    %3232 = vmatmul.mubr.f32.gmra.mrb[0].mxu0 %v3231
    %v3233 = vpop.f32.mrb[0].mxu0
    %v3234 = vadd.f32 %v3150, %v3233
    %v3235 = vpop.f32.mrb[0].mxu0
    %v3236 = vadd.f32 %v3152, %v3235
    %3237 = vmatprep.mubr.f32.mxu0 0.0
    %v3238 = vand.u32 %v2897, 4294901760
    %v3239 = vsub.f32 %v2897, %v3238
    %v3240 = vand.u32 %v3239, 4294901760
    %3241 = vmatmul.mubr.f32.gmra.mrb[0].mxu0 %v3240
    %v3242 = vpop.f32.mrb[0].mxu0
    %v3243 = vadd.f32 %v3158, %v3242
    %v3244 = vpop.f32.mrb[0].mxu0
    %v3245 = vadd.f32 %v3160, %v3244
    %3246 = vdwg.mxu0
    %v3247 = vand.u32 %v2277, 4294901760
    %v3248 = vsub.f32 %v2277, %v3247
    %v3249 = vand.u32 %v3248, 4294901760
    %3250 = vmatprep.subr.mxu0 %v3249
    %v3251 = vand.u32 %v2276, 4294901760
    %v3252 = vsub.f32 %v2276, %v3251
    %v3253 = vand.u32 %v3252, 4294901760
    %3254 = vmatpush1.msra.mxu0 %v3253
    %3255 = vmatprep.subr.mxu0 0.0
    %3256 = vmatpush1.msra.mxu0 0.0
    %3257 = vmatprep.subr.mxu0 0.0
    %3258 = vmatpush1.msra.mxu0 0.0
    %3259 = vmatprep.subr.mxu0 0.0
    %3260 = vmatpush1.msra.mxu0 0.0
    %3261 = vmatprep.subr.mxu0 0.0
    %3262 = vmatpush1.msra.mxu0 0.0
    %3263 = vmatprep.subr.mxu0 0.0
    %3264 = vmatpush1.msra.mxu0 0.0
    %3265 = vmatprep.subr.mxu0 0.0
    %3266 = vmatpush1.msra.mxu0 0.0
    %3267 = vmatprep.subr.mxu0 0.0
    %3268 = vmatpush1.msra.mxu0 0.0
    %3269 = vmatprep.subr.mxu0 0.0
    %3270 = vmatpush1.msra.mxu0 0.0
    %3271 = vmatprep.subr.mxu0 0.0
    %3272 = vmatpush1.msra.mxu0 0.0
    %3273 = vmatprep.subr.mxu0 0.0
    %3274 = vmatpush1.msra.mxu0 0.0
    %3275 = vmatprep.subr.mxu0 0.0
    %3276 = vmatpush1.msra.mxu0 0.0
    %3277 = vmatprep.subr.mxu0 0.0
    %3278 = vmatpush1.msra.mxu0 0.0
    %3279 = vmatprep.subr.mxu0 0.0
    %3280 = vmatpush1.msra.mxu0 0.0
    %3281 = vmatprep.subr.mxu0 0.0
    %3282 = vmatpush1.msra.mxu0 0.0
    %3283 = vmatprep.subr.mxu0 0.0
    %3284 = vmatpush1.msra.mxu0 0.0
    %3285 = vmatprep.subr.mxu0 0.0
    %3286 = vmatpush1.msra.mxu0 0.0
    %3287 = vmatprep.subr.mxu0 0.0
    %3288 = vmatpush1.msra.mxu0 0.0
    %3289 = vmatprep.subr.mxu0 0.0
    %3290 = vmatpush1.msra.mxu0 0.0
    %3291 = vmatprep.subr.mxu0 0.0
    %3292 = vmatpush1.msra.mxu0 0.0
    %3293 = vmatprep.subr.mxu0 0.0
    %3294 = vmatpush1.msra.mxu0 0.0
    %3295 = vmatprep.subr.mxu0 0.0
    %3296 = vmatpush1.msra.mxu0 0.0
    %3297 = vmatprep.subr.mxu0 0.0
    %3298 = vmatpush1.msra.mxu0 0.0
    %3299 = vmatprep.subr.mxu0 0.0
    %3300 = vmatpush1.msra.mxu0 0.0
    %3301 = vmatprep.subr.mxu0 0.0
    %3302 = vmatpush1.msra.mxu0 0.0
    %3303 = vmatprep.subr.mxu0 0.0
    %3304 = vmatpush1.msra.mxu0 0.0
    %3305 = vmatprep.subr.mxu0 0.0
    %3306 = vmatpush1.msra.mxu0 0.0
    %3307 = vmatprep.subr.mxu0 0.0
    %3308 = vmatpush1.msra.mxu0 0.0
    %3309 = vmatprep.subr.mxu0 0.0
    %3310 = vmatpush1.msra.mxu0 0.0
    %3311 = vmatprep.subr.mxu0 0.0
    %3312 = vmatpush1.msra.mxu0 0.0
    %3313 = vmatprep.subr.mxu0 0.0
    %3314 = vmatpush1.msra.mxu0 0.0
    %3315 = vmatprep.subr.mxu0 0.0
    %3316 = vmatpush1.msra.mxu0 0.0
    %3317 = vmatprep.mubr.f32.mxu0 0.0
    %v3318 = vand.u32 %v2895, 4294901760
    %3319 = vmatmul.mubr.f32.gmra.mrb[0].mxu0 %v3318
    %v3320 = vpop.f32.mrb[0].mxu0
    %v3321 = vadd.f32 %v3234, %v3320
    %v3322 = vpop.f32.mrb[0].mxu0
    %v3323 = vadd.f32 %v3236, %v3322
    %3324 = vmatprep.mubr.f32.mxu0 0.0
    %v3325 = vand.u32 %v2897, 4294901760
    %3326 = vmatmul.mubr.f32.gmra.mrb[0].mxu0 %v3325
    %v3327 = vpop.f32.mrb[0].mxu0
    %v3328 = vadd.f32 %v3243, %v3327
    %v3329 = vpop.f32.mrb[0].mxu0
    %v3330 = vadd.f32 %v3245, %v3329
    %3331 = vdwg.mxu0
    %v3332 = vand.u32 %v2277, 4294901760
    %3333 = vmatprep.subr.mxu0 %v3332
    %v3334 = vand.u32 %v2276, 4294901760
    %3335 = vmatpush1.msra.mxu0 %v3334
    %3336 = vmatprep.subr.mxu0 0.0
    %3337 = vmatpush1.msra.mxu0 0.0
    %3338 = vmatprep.subr.mxu0 0.0
    %3339 = vmatpush1.msra.mxu0 0.0
    %3340 = vmatprep.subr.mxu0 0.0
    %3341 = vmatpush1.msra.mxu0 0.0
    %3342 = vmatprep.subr.mxu0 0.0
    %3343 = vmatpush1.msra.mxu0 0.0
    %3344 = vmatprep.subr.mxu0 0.0
    %3345 = vmatpush1.msra.mxu0 0.0
    %3346 = vmatprep.subr.mxu0 0.0
    %3347 = vmatpush1.msra.mxu0 0.0
    %3348 = vmatprep.subr.mxu0 0.0
    %3349 = vmatpush1.msra.mxu0 0.0
    %3350 = vmatprep.subr.mxu0 0.0
    %3351 = vmatpush1.msra.mxu0 0.0
    %3352 = vmatprep.subr.mxu0 0.0
    %3353 = vmatpush1.msra.mxu0 0.0
    %3354 = vmatprep.subr.mxu0 0.0
    %3355 = vmatpush1.msra.mxu0 0.0
    %3356 = vmatprep.subr.mxu0 0.0
    %3357 = vmatpush1.msra.mxu0 0.0
    %3358 = vmatprep.subr.mxu0 0.0
    %3359 = vmatpush1.msra.mxu0 0.0
    %3360 = vmatprep.subr.mxu0 0.0
    %3361 = vmatpush1.msra.mxu0 0.0
    %3362 = vmatprep.subr.mxu0 0.0
    %3363 = vmatpush1.msra.mxu0 0.0
    %3364 = vmatprep.subr.mxu0 0.0
    %3365 = vmatpush1.msra.mxu0 0.0
    %3366 = vmatprep.subr.mxu0 0.0
    %3367 = vmatpush1.msra.mxu0 0.0
    %3368 = vmatprep.subr.mxu0 0.0
    %3369 = vmatpush1.msra.mxu0 0.0
    %3370 = vmatprep.subr.mxu0 0.0
    %3371 = vmatpush1.msra.mxu0 0.0
    %3372 = vmatprep.subr.mxu0 0.0
    %3373 = vmatpush1.msra.mxu0 0.0
    %3374 = vmatprep.subr.mxu0 0.0
    %3375 = vmatpush1.msra.mxu0 0.0
    %3376 = vmatprep.subr.mxu0 0.0
    %3377 = vmatpush1.msra.mxu0 0.0
    %3378 = vmatprep.subr.mxu0 0.0
    %3379 = vmatpush1.msra.mxu0 0.0
    %3380 = vmatprep.subr.mxu0 0.0
    %3381 = vmatpush1.msra.mxu0 0.0
    %3382 = vmatprep.subr.mxu0 0.0
    %3383 = vmatpush1.msra.mxu0 0.0
    %3384 = vmatprep.subr.mxu0 0.0
    %3385 = vmatpush1.msra.mxu0 0.0
    %3386 = vmatprep.subr.mxu0 0.0
    %3387 = vmatpush1.msra.mxu0 0.0
    %3388 = vmatprep.subr.mxu0 0.0
    %3389 = vmatpush1.msra.mxu0 0.0
    %3390 = vmatprep.subr.mxu0 0.0
    %3391 = vmatpush1.msra.mxu0 0.0
    %3392 = vmatprep.subr.mxu0 0.0
    %3393 = vmatpush1.msra.mxu0 0.0
    %3394 = vmatprep.subr.mxu0 0.0
    %3395 = vmatpush1.msra.mxu0 0.0
    %3396 = vmatprep.subr.mxu0 0.0
    %3397 = vmatpush1.msra.mxu0 0.0
    %3398 = vmatprep.mubr.f32.mxu0 0.0
    %v3399 = vand.u32 %v2895, 4294901760
    %3400 = vmatmul.mubr.f32.gmra.mrb[0].mxu0 %v3399
    %v3401 = vpop.f32.mrb[0].mxu0
    %v3402 = vadd.f32 %v3321, %v3401
    %v3403 = vpop.f32.mrb[0].mxu0
    %v3404 = vadd.f32 %v3323, %v3403
    %3405 = vmatprep.mubr.f32.mxu0 0.0
    %v3406 = vand.u32 %v2897, 4294901760
    %3407 = vmatmul.mubr.f32.gmra.mrb[0].mxu0 %v3406
    %v3408 = vpop.f32.mrb[0].mxu0
    %v3409 = vadd.f32 %v3328, %v3408
    %v3410 = vpop.f32.mrb[0].mxu0
    %v3411 = vadd.f32 %v3330, %v3410
    %3412 = vdwg.mxu0
    %3413 = vset.pattern.permute.xlu0 16
    %3414 = vperm.xlu0 %3413, %v24
    %v3415 = vpop.permute.xlu0 %3414
    %3417 = vset.pattern.permute.xlu0 16
    %3418 = vperm.xlu0 %3417, %v25
    %v3419 = vpop.permute.xlu0 %3418
    %v3421 = vadd.f32 %v3402, %v3415
    %v3422 = vadd.f32 %v3404, %v3415
    %v3423 = vadd.f32 %v3409, %v3419
    %v3424 = vadd.f32 %v3411, %v3419
    %vm3425 = vcmp.gt.f32.partialorder %v3421, 0.0
    %vm3426 = vcmp.gt.f32.partialorder %v3422, 0.0
    %vm3427 = vcmp.gt.f32.partialorder %v3423, 0.0
    %vm3428 = vcmp.gt.f32.partialorder %v3424, 0.0
    %v3429 = vmul.f32 %v3421, 0.01
    %v3430 = vmul.f32 %v3422, 0.01
    %v3431 = vmul.f32 %v3423, 0.01
    %v3432 = vmul.f32 %v3424, 0.01
    %v3433 = vsel %vm3425, %v3421, %v3429
    %v3434 = vsel %vm3426, %v3422, %v3430
    %v3435 = vsel %vm3427, %v3423, %v3431
    %v3436 = vsel %vm3428, %v3424, %v3432
    %3438 = vset.pattern.permute.xlu0 16
    %3439 = vperm.xlu0 %3438, %v26
    %v3440 = vpop.permute.xlu0 %3439
    %vm3442 = vcmask 130048
    %v3443 = vsel %vm3442, %v26, 0
    %v3445 = vand.u32 %v3434, 4294901760
    %3446 = vmatprep.subr.mxu0 %v3445
    %v3447 = vand.u32 %v3433, 4294901760
    %3448 = vmatpush1.msra.mxu0 %v3447
    %v3449 = vand.u32 %v3436, 4294901760
    %3450 = vmatprep.subr.mxu0 %v3449
    %v3451 = vand.u32 %v3435, 4294901760
    %3452 = vmatpush1.msra.mxu0 %v3451
    %3453 = vmatprep.subr.mxu0 0.0
    %3454 = vmatpush1.msra.mxu0 0.0
    %3455 = vmatprep.subr.mxu0 0.0
    %3456 = vmatpush1.msra.mxu0 0.0
    %3457 = vmatprep.subr.mxu0 0.0
    %3458 = vmatpush1.msra.mxu0 0.0
    %3459 = vmatprep.subr.mxu0 0.0
    %3460 = vmatpush1.msra.mxu0 0.0
    %3461 = vmatprep.subr.mxu0 0.0
    %3462 = vmatpush1.msra.mxu0 0.0
    %3463 = vmatprep.subr.mxu0 0.0
    %3464 = vmatpush1.msra.mxu0 0.0
    %3465 = vmatprep.subr.mxu0 0.0
    %3466 = vmatpush1.msra.mxu0 0.0
    %3467 = vmatprep.subr.mxu0 0.0
    %3468 = vmatpush1.msra.mxu0 0.0
    %3469 = vmatprep.subr.mxu0 0.0
    %3470 = vmatpush1.msra.mxu0 0.0
    %3471 = vmatprep.subr.mxu0 0.0
    %3472 = vmatpush1.msra.mxu0 0.0
    %3473 = vmatprep.subr.mxu0 0.0
    %3474 = vmatpush1.msra.mxu0 0.0
    %3475 = vmatprep.subr.mxu0 0.0
    %3476 = vmatpush1.msra.mxu0 0.0
    %3477 = vmatprep.subr.mxu0 0.0
    %3478 = vmatpush1.msra.mxu0 0.0
    %3479 = vmatprep.subr.mxu0 0.0
    %3480 = vmatpush1.msra.mxu0 0.0
    %3481 = vmatprep.subr.mxu0 0.0
    %3482 = vmatpush1.msra.mxu0 0.0
    %3483 = vmatprep.subr.mxu0 0.0
    %3484 = vmatpush1.msra.mxu0 0.0
    %3485 = vmatprep.subr.mxu0 0.0
    %3486 = vmatpush1.msra.mxu0 0.0
    %3487 = vmatprep.subr.mxu0 0.0
    %3488 = vmatpush1.msra.mxu0 0.0
    %3489 = vmatprep.subr.mxu0 0.0
    %3490 = vmatpush1.msra.mxu0 0.0
    %3491 = vmatprep.subr.mxu0 0.0
    %3492 = vmatpush1.msra.mxu0 0.0
    %3493 = vmatprep.subr.mxu0 0.0
    %3494 = vmatpush1.msra.mxu0 0.0
    %3495 = vmatprep.subr.mxu0 0.0
    %3496 = vmatpush1.msra.mxu0 0.0
    %3497 = vmatprep.subr.mxu0 0.0
    %3498 = vmatpush1.msra.mxu0 0.0
    %3499 = vmatprep.subr.mxu0 0.0
    %3500 = vmatpush1.msra.mxu0 0.0
    %3501 = vmatprep.subr.mxu0 0.0
    %3502 = vmatpush1.msra.mxu0 0.0
    %3503 = vmatprep.subr.mxu0 0.0
    %3504 = vmatpush1.msra.mxu0 0.0
    %3505 = vmatprep.subr.mxu0 0.0
    %3506 = vmatpush1.msra.mxu0 0.0
    %3507 = vmatprep.subr.mxu0 0.0
    %3508 = vmatpush1.msra.mxu0 0.0
    %3509 = vmatprep.subr.mxu0 0.0
    %3510 = vmatpush1.msra.mxu0 0.0
    %3511 = vmatprep.subr.mxu0 0.0
    %3512 = vmatpush1.msra.mxu0 0.0
    %3513 = vmatprep.mubr.f32.mxu0 0.0
    %v3514 = vand.u32 %v3443, 4294901760
    %v3515 = vsub.f32 %v3443, %v3514
    %v3516 = vand.u32 %v3515, 4294901760
    %v3517 = vsub.f32 %v3515, %v3516
    %v3518 = vand.u32 %v3517, 4294901760
    %3519 = vmatmul.mubr.f32.gmra.mrb[0].mxu0 %v3518
    %v3520 = vpop.f32.mrb[0].mxu0
    %v3521 = vadd.f32 %v3440, %v3520
    %v3522 = vpop.f32.mrb[0].mxu0
    %v3523 = vadd.f32 %v3440, %v3522
    %3524 = vdwg.mxu0
    %v3525 = vand.u32 %v3434, 4294901760
    %v3526 = vsub.f32 %v3434, %v3525
    %v3527 = vand.u32 %v3526, 4294901760
    %v3528 = vsub.f32 %v3526, %v3527
    %v3529 = vand.u32 %v3528, 4294901760
    %3530 = vmatprep.subr.mxu0 %v3529
    %v3531 = vand.u32 %v3433, 4294901760
    %v3532 = vsub.f32 %v3433, %v3531
    %v3533 = vand.u32 %v3532, 4294901760
    %v3534 = vsub.f32 %v3532, %v3533
    %v3535 = vand.u32 %v3534, 4294901760
    %3536 = vmatpush1.msra.mxu0 %v3535
    %v3537 = vand.u32 %v3436, 4294901760
    %v3538 = vsub.f32 %v3436, %v3537
    %v3539 = vand.u32 %v3538, 4294901760
    %v3540 = vsub.f32 %v3538, %v3539
    %v3541 = vand.u32 %v3540, 4294901760
    %3542 = vmatprep.subr.mxu0 %v3541
    %v3543 = vand.u32 %v3435, 4294901760
    %v3544 = vsub.f32 %v3435, %v3543
    %v3545 = vand.u32 %v3544, 4294901760
    %v3546 = vsub.f32 %v3544, %v3545
    %v3547 = vand.u32 %v3546, 4294901760
    %3548 = vmatpush1.msra.mxu0 %v3547
    %3549 = vmatprep.subr.mxu0 0.0
    %3550 = vmatpush1.msra.mxu0 0.0
    %3551 = vmatprep.subr.mxu0 0.0
    %3552 = vmatpush1.msra.mxu0 0.0
    %3553 = vmatprep.subr.mxu0 0.0
    %3554 = vmatpush1.msra.mxu0 0.0
    %3555 = vmatprep.subr.mxu0 0.0
    %3556 = vmatpush1.msra.mxu0 0.0
    %3557 = vmatprep.subr.mxu0 0.0
    %3558 = vmatpush1.msra.mxu0 0.0
    %3559 = vmatprep.subr.mxu0 0.0
    %3560 = vmatpush1.msra.mxu0 0.0
    %3561 = vmatprep.subr.mxu0 0.0
    %3562 = vmatpush1.msra.mxu0 0.0
    %3563 = vmatprep.subr.mxu0 0.0
    %3564 = vmatpush1.msra.mxu0 0.0
    %3565 = vmatprep.subr.mxu0 0.0
    %3566 = vmatpush1.msra.mxu0 0.0
    %3567 = vmatprep.subr.mxu0 0.0
    %3568 = vmatpush1.msra.mxu0 0.0
    %3569 = vmatprep.subr.mxu0 0.0
    %3570 = vmatpush1.msra.mxu0 0.0
    %3571 = vmatprep.subr.mxu0 0.0
    %3572 = vmatpush1.msra.mxu0 0.0
    %3573 = vmatprep.subr.mxu0 0.0
    %3574 = vmatpush1.msra.mxu0 0.0
    %3575 = vmatprep.subr.mxu0 0.0
    %3576 = vmatpush1.msra.mxu0 0.0
    %3577 = vmatprep.subr.mxu0 0.0
    %3578 = vmatpush1.msra.mxu0 0.0
    %3579 = vmatprep.subr.mxu0 0.0
    %3580 = vmatpush1.msra.mxu0 0.0
    %3581 = vmatprep.subr.mxu0 0.0
    %3582 = vmatpush1.msra.mxu0 0.0
    %3583 = vmatprep.subr.mxu0 0.0
    %3584 = vmatpush1.msra.mxu0 0.0
    %3585 = vmatprep.subr.mxu0 0.0
    %3586 = vmatpush1.msra.mxu0 0.0
    %3587 = vmatprep.subr.mxu0 0.0
    %3588 = vmatpush1.msra.mxu0 0.0
    %3589 = vmatprep.subr.mxu0 0.0
    %3590 = vmatpush1.msra.mxu0 0.0
    %3591 = vmatprep.subr.mxu0 0.0
    %3592 = vmatpush1.msra.mxu0 0.0
    %3593 = vmatprep.subr.mxu0 0.0
    %3594 = vmatpush1.msra.mxu0 0.0
    %3595 = vmatprep.subr.mxu0 0.0
    %3596 = vmatpush1.msra.mxu0 0.0
    %3597 = vmatprep.subr.mxu0 0.0
    %3598 = vmatpush1.msra.mxu0 0.0
    %3599 = vmatprep.subr.mxu0 0.0
    %3600 = vmatpush1.msra.mxu0 0.0
    %3601 = vmatprep.subr.mxu0 0.0
    %3602 = vmatpush1.msra.mxu0 0.0
    %3603 = vmatprep.subr.mxu0 0.0
    %3604 = vmatpush1.msra.mxu0 0.0
    %3605 = vmatprep.subr.mxu0 0.0
    %3606 = vmatpush1.msra.mxu0 0.0
    %3607 = vmatprep.subr.mxu0 0.0
    %3608 = vmatpush1.msra.mxu0 0.0
    %3609 = vmatprep.mubr.f32.mxu0 0.0
    %v3610 = vand.u32 %v3443, 4294901760
    %3611 = vmatmul.mubr.f32.gmra.mrb[0].mxu0 %v3610
    %v3612 = vpop.f32.mrb[0].mxu0
    %v3613 = vadd.f32 %v3521, %v3612
    %v3614 = vpop.f32.mrb[0].mxu0
    %v3615 = vadd.f32 %v3523, %v3614
    %3616 = vdwg.mxu0
    %v3617 = vand.u32 %v3434, 4294901760
    %v3618 = vsub.f32 %v3434, %v3617
    %3619 = vmatprep.subr.mxu0 %v3618
    %v3620 = vand.u32 %v3433, 4294901760
    %v3621 = vsub.f32 %v3433, %v3620
    %3622 = vmatpush1.msra.mxu0 %v3621
    %v3623 = vand.u32 %v3436, 4294901760
    %v3624 = vsub.f32 %v3436, %v3623
    %3625 = vmatprep.subr.mxu0 %v3624
    %v3626 = vand.u32 %v3435, 4294901760
    %v3627 = vsub.f32 %v3435, %v3626
    %3628 = vmatpush1.msra.mxu0 %v3627
    %3629 = vmatprep.subr.mxu0 0.0
    %3630 = vmatpush1.msra.mxu0 0.0
    %3631 = vmatprep.subr.mxu0 0.0
    %3632 = vmatpush1.msra.mxu0 0.0
    %3633 = vmatprep.subr.mxu0 0.0
    %3634 = vmatpush1.msra.mxu0 0.0
    %3635 = vmatprep.subr.mxu0 0.0
    %3636 = vmatpush1.msra.mxu0 0.0
    %3637 = vmatprep.subr.mxu0 0.0
    %3638 = vmatpush1.msra.mxu0 0.0
    %3639 = vmatprep.subr.mxu0 0.0
    %3640 = vmatpush1.msra.mxu0 0.0
    %3641 = vmatprep.subr.mxu0 0.0
    %3642 = vmatpush1.msra.mxu0 0.0
    %3643 = vmatprep.subr.mxu0 0.0
    %3644 = vmatpush1.msra.mxu0 0.0
    %3645 = vmatprep.subr.mxu0 0.0
    %3646 = vmatpush1.msra.mxu0 0.0
    %3647 = vmatprep.subr.mxu0 0.0
    %3648 = vmatpush1.msra.mxu0 0.0
    %3649 = vmatprep.subr.mxu0 0.0
    %3650 = vmatpush1.msra.mxu0 0.0
    %3651 = vmatprep.subr.mxu0 0.0
    %3652 = vmatpush1.msra.mxu0 0.0
    %3653 = vmatprep.subr.mxu0 0.0
    %3654 = vmatpush1.msra.mxu0 0.0
    %3655 = vmatprep.subr.mxu0 0.0
    %3656 = vmatpush1.msra.mxu0 0.0
    %3657 = vmatprep.subr.mxu0 0.0
    %3658 = vmatpush1.msra.mxu0 0.0
    %3659 = vmatprep.subr.mxu0 0.0
    %3660 = vmatpush1.msra.mxu0 0.0
    %3661 = vmatprep.subr.mxu0 0.0
    %3662 = vmatpush1.msra.mxu0 0.0
    %3663 = vmatprep.subr.mxu0 0.0
    %3664 = vmatpush1.msra.mxu0 0.0
    %3665 = vmatprep.subr.mxu0 0.0
    %3666 = vmatpush1.msra.mxu0 0.0
    %3667 = vmatprep.subr.mxu0 0.0
    %3668 = vmatpush1.msra.mxu0 0.0
    %3669 = vmatprep.subr.mxu0 0.0
    %3670 = vmatpush1.msra.mxu0 0.0
    %3671 = vmatprep.subr.mxu0 0.0
    %3672 = vmatpush1.msra.mxu0 0.0
    %3673 = vmatprep.subr.mxu0 0.0
    %3674 = vmatpush1.msra.mxu0 0.0
    %3675 = vmatprep.subr.mxu0 0.0
    %3676 = vmatpush1.msra.mxu0 0.0
    %3677 = vmatprep.subr.mxu0 0.0
    %3678 = vmatpush1.msra.mxu0 0.0
    %3679 = vmatprep.subr.mxu0 0.0
    %3680 = vmatpush1.msra.mxu0 0.0
    %3681 = vmatprep.subr.mxu0 0.0
    %3682 = vmatpush1.msra.mxu0 0.0
    %3683 = vmatprep.subr.mxu0 0.0
    %3684 = vmatpush1.msra.mxu0 0.0
    %3685 = vmatprep.subr.mxu0 0.0
    %3686 = vmatpush1.msra.mxu0 0.0
    %3687 = vmatprep.subr.mxu0 0.0
    %3688 = vmatpush1.msra.mxu0 0.0
    %3689 = vmatprep.mubr.f32.mxu0 0.0
    %v3690 = vand.u32 %v3443, 4294901760
    %v3691 = vsub.f32 %v3443, %v3690
    %3692 = vmatmul.mubr.f32.gmra.mrb[0].mxu0 %v3691
    %v3693 = vpop.f32.mrb[0].mxu0
    %v3694 = vadd.f32 %v3613, %v3693
    %v3695 = vpop.f32.mrb[0].mxu0
    %v3696 = vadd.f32 %v3615, %v3695
    %3697 = vdwg.mxu0
    %v3698 = vand.u32 %v3434, 4294901760
    %3699 = vmatprep.subr.mxu0 %v3698
    %v3700 = vand.u32 %v3433, 4294901760
    %3701 = vmatpush1.msra.mxu0 %v3700
    %v3702 = vand.u32 %v3436, 4294901760
    %3703 = vmatprep.subr.mxu0 %v3702
    %v3704 = vand.u32 %v3435, 4294901760
    %3705 = vmatpush1.msra.mxu0 %v3704
    %3706 = vmatprep.subr.mxu0 0.0
    %3707 = vmatpush1.msra.mxu0 0.0
    %3708 = vmatprep.subr.mxu0 0.0
    %3709 = vmatpush1.msra.mxu0 0.0
    %3710 = vmatprep.subr.mxu0 0.0
    %3711 = vmatpush1.msra.mxu0 0.0
    %3712 = vmatprep.subr.mxu0 0.0
    %3713 = vmatpush1.msra.mxu0 0.0
    %3714 = vmatprep.subr.mxu0 0.0
    %3715 = vmatpush1.msra.mxu0 0.0
    %3716 = vmatprep.subr.mxu0 0.0
    %3717 = vmatpush1.msra.mxu0 0.0
    %3718 = vmatprep.subr.mxu0 0.0
    %3719 = vmatpush1.msra.mxu0 0.0
    %3720 = vmatprep.subr.mxu0 0.0
    %3721 = vmatpush1.msra.mxu0 0.0
    %3722 = vmatprep.subr.mxu0 0.0
    %3723 = vmatpush1.msra.mxu0 0.0
    %3724 = vmatprep.subr.mxu0 0.0
    %3725 = vmatpush1.msra.mxu0 0.0
    %3726 = vmatprep.subr.mxu0 0.0
    %3727 = vmatpush1.msra.mxu0 0.0
    %3728 = vmatprep.subr.mxu0 0.0
    %3729 = vmatpush1.msra.mxu0 0.0
    %3730 = vmatprep.subr.mxu0 0.0
    %3731 = vmatpush1.msra.mxu0 0.0
    %3732 = vmatprep.subr.mxu0 0.0
    %3733 = vmatpush1.msra.mxu0 0.0
    %3734 = vmatprep.subr.mxu0 0.0
    %3735 = vmatpush1.msra.mxu0 0.0
    %3736 = vmatprep.subr.mxu0 0.0
    %3737 = vmatpush1.msra.mxu0 0.0
    %3738 = vmatprep.subr.mxu0 0.0
    %3739 = vmatpush1.msra.mxu0 0.0
    %3740 = vmatprep.subr.mxu0 0.0
    %3741 = vmatpush1.msra.mxu0 0.0
    %3742 = vmatprep.subr.mxu0 0.0
    %3743 = vmatpush1.msra.mxu0 0.0
    %3744 = vmatprep.subr.mxu0 0.0
    %3745 = vmatpush1.msra.mxu0 0.0
    %3746 = vmatprep.subr.mxu0 0.0
    %3747 = vmatpush1.msra.mxu0 0.0
    %3748 = vmatprep.subr.mxu0 0.0
    %3749 = vmatpush1.msra.mxu0 0.0
    %3750 = vmatprep.subr.mxu0 0.0
    %3751 = vmatpush1.msra.mxu0 0.0
    %3752 = vmatprep.subr.mxu0 0.0
    %3753 = vmatpush1.msra.mxu0 0.0
    %3754 = vmatprep.subr.mxu0 0.0
    %3755 = vmatpush1.msra.mxu0 0.0
    %3756 = vmatprep.subr.mxu0 0.0
    %3757 = vmatpush1.msra.mxu0 0.0
    %3758 = vmatprep.subr.mxu0 0.0
    %3759 = vmatpush1.msra.mxu0 0.0
    %3760 = vmatprep.subr.mxu0 0.0
    %3761 = vmatpush1.msra.mxu0 0.0
    %3762 = vmatprep.subr.mxu0 0.0
    %3763 = vmatpush1.msra.mxu0 0.0
    %3764 = vmatprep.subr.mxu0 0.0
    %3765 = vmatpush1.msra.mxu0 0.0
    %3766 = vmatprep.mubr.f32.mxu0 0.0
    %v3767 = vand.u32 %v3443, 4294901760
    %v3768 = vsub.f32 %v3443, %v3767
    %v3769 = vand.u32 %v3768, 4294901760
    %3770 = vmatmul.mubr.f32.gmra.mrb[0].mxu0 %v3769
    %v3771 = vpop.f32.mrb[0].mxu0
    %v3772 = vadd.f32 %v3694, %v3771
    %v3773 = vpop.f32.mrb[0].mxu0
    %v3774 = vadd.f32 %v3696, %v3773
    %3775 = vdwg.mxu0
    %v3776 = vand.u32 %v3434, 4294901760
    %v3777 = vsub.f32 %v3434, %v3776
    %v3778 = vand.u32 %v3777, 4294901760
    %3779 = vmatprep.subr.mxu0 %v3778
    %v3780 = vand.u32 %v3433, 4294901760
    %v3781 = vsub.f32 %v3433, %v3780
    %v3782 = vand.u32 %v3781, 4294901760
    %3783 = vmatpush1.msra.mxu0 %v3782
    %v3784 = vand.u32 %v3436, 4294901760
    %v3785 = vsub.f32 %v3436, %v3784
    %v3786 = vand.u32 %v3785, 4294901760
    %3787 = vmatprep.subr.mxu0 %v3786
    %v3788 = vand.u32 %v3435, 4294901760
    %v3789 = vsub.f32 %v3435, %v3788
    %v3790 = vand.u32 %v3789, 4294901760
    %3791 = vmatpush1.msra.mxu0 %v3790
    %3792 = vmatprep.subr.mxu0 0.0
    %3793 = vmatpush1.msra.mxu0 0.0
    %3794 = vmatprep.subr.mxu0 0.0
    %3795 = vmatpush1.msra.mxu0 0.0
    %3796 = vmatprep.subr.mxu0 0.0
    %3797 = vmatpush1.msra.mxu0 0.0
    %3798 = vmatprep.subr.mxu0 0.0
    %3799 = vmatpush1.msra.mxu0 0.0
    %3800 = vmatprep.subr.mxu0 0.0
    %3801 = vmatpush1.msra.mxu0 0.0
    %3802 = vmatprep.subr.mxu0 0.0
    %3803 = vmatpush1.msra.mxu0 0.0
    %3804 = vmatprep.subr.mxu0 0.0
    %3805 = vmatpush1.msra.mxu0 0.0
    %3806 = vmatprep.subr.mxu0 0.0
    %3807 = vmatpush1.msra.mxu0 0.0
    %3808 = vmatprep.subr.mxu0 0.0
    %3809 = vmatpush1.msra.mxu0 0.0
    %3810 = vmatprep.subr.mxu0 0.0
    %3811 = vmatpush1.msra.mxu0 0.0
    %3812 = vmatprep.subr.mxu0 0.0
    %3813 = vmatpush1.msra.mxu0 0.0
    %3814 = vmatprep.subr.mxu0 0.0
    %3815 = vmatpush1.msra.mxu0 0.0
    %3816 = vmatprep.subr.mxu0 0.0
    %3817 = vmatpush1.msra.mxu0 0.0
    %3818 = vmatprep.subr.mxu0 0.0
    %3819 = vmatpush1.msra.mxu0 0.0
    %3820 = vmatprep.subr.mxu0 0.0
    %3821 = vmatpush1.msra.mxu0 0.0
    %3822 = vmatprep.subr.mxu0 0.0
    %3823 = vmatpush1.msra.mxu0 0.0
    %3824 = vmatprep.subr.mxu0 0.0
    %3825 = vmatpush1.msra.mxu0 0.0
    %3826 = vmatprep.subr.mxu0 0.0
    %3827 = vmatpush1.msra.mxu0 0.0
    %3828 = vmatprep.subr.mxu0 0.0
    %3829 = vmatpush1.msra.mxu0 0.0
    %3830 = vmatprep.subr.mxu0 0.0
    %3831 = vmatpush1.msra.mxu0 0.0
    %3832 = vmatprep.subr.mxu0 0.0
    %3833 = vmatpush1.msra.mxu0 0.0
    %3834 = vmatprep.subr.mxu0 0.0
    %3835 = vmatpush1.msra.mxu0 0.0
    %3836 = vmatprep.subr.mxu0 0.0
    %3837 = vmatpush1.msra.mxu0 0.0
    %3838 = vmatprep.subr.mxu0 0.0
    %3839 = vmatpush1.msra.mxu0 0.0
    %3840 = vmatprep.subr.mxu0 0.0
    %3841 = vmatpush1.msra.mxu0 0.0
    %3842 = vmatprep.subr.mxu0 0.0
    %3843 = vmatpush1.msra.mxu0 0.0
    %3844 = vmatprep.subr.mxu0 0.0
    %3845 = vmatpush1.msra.mxu0 0.0
    %3846 = vmatprep.subr.mxu0 0.0
    %3847 = vmatpush1.msra.mxu0 0.0
    %3848 = vmatprep.subr.mxu0 0.0
    %3849 = vmatpush1.msra.mxu0 0.0
    %3850 = vmatprep.subr.mxu0 0.0
    %3851 = vmatpush1.msra.mxu0 0.0
    %3852 = vmatprep.mubr.f32.mxu0 0.0
    %v3853 = vand.u32 %v3443, 4294901760
    %3854 = vmatmul.mubr.f32.gmra.mrb[0].mxu0 %v3853
    %v3855 = vpop.f32.mrb[0].mxu0
    %v3856 = vadd.f32 %v3772, %v3855
    %v3857 = vpop.f32.mrb[0].mxu0
    %v3858 = vadd.f32 %v3774, %v3857
    %3859 = vdwg.mxu0
    %v3860 = vand.u32 %v3434, 4294901760
    %3861 = vmatprep.subr.mxu0 %v3860
    %v3862 = vand.u32 %v3433, 4294901760
    %3863 = vmatpush1.msra.mxu0 %v3862
    %v3864 = vand.u32 %v3436, 4294901760
    %3865 = vmatprep.subr.mxu0 %v3864
    %v3866 = vand.u32 %v3435, 4294901760
    %3867 = vmatpush1.msra.mxu0 %v3866
    %3868 = vmatprep.subr.mxu0 0.0
    %3869 = vmatpush1.msra.mxu0 0.0
    %3870 = vmatprep.subr.mxu0 0.0
    %3871 = vmatpush1.msra.mxu0 0.0
    %3872 = vmatprep.subr.mxu0 0.0
    %3873 = vmatpush1.msra.mxu0 0.0
    %3874 = vmatprep.subr.mxu0 0.0
    %3875 = vmatpush1.msra.mxu0 0.0
    %3876 = vmatprep.subr.mxu0 0.0
    %3877 = vmatpush1.msra.mxu0 0.0
    %3878 = vmatprep.subr.mxu0 0.0
    %3879 = vmatpush1.msra.mxu0 0.0
    %3880 = vmatprep.subr.mxu0 0.0
    %3881 = vmatpush1.msra.mxu0 0.0
    %3882 = vmatprep.subr.mxu0 0.0
    %3883 = vmatpush1.msra.mxu0 0.0
    %3884 = vmatprep.subr.mxu0 0.0
    %3885 = vmatpush1.msra.mxu0 0.0
    %3886 = vmatprep.subr.mxu0 0.0
    %3887 = vmatpush1.msra.mxu0 0.0
    %3888 = vmatprep.subr.mxu0 0.0
    %3889 = vmatpush1.msra.mxu0 0.0
    %3890 = vmatprep.subr.mxu0 0.0
    %3891 = vmatpush1.msra.mxu0 0.0
    %3892 = vmatprep.subr.mxu0 0.0
    %3893 = vmatpush1.msra.mxu0 0.0
    %3894 = vmatprep.subr.mxu0 0.0
    %3895 = vmatpush1.msra.mxu0 0.0
    %3896 = vmatprep.subr.mxu0 0.0
    %3897 = vmatpush1.msra.mxu0 0.0
    %3898 = vmatprep.subr.mxu0 0.0
    %3899 = vmatpush1.msra.mxu0 0.0
    %3900 = vmatprep.subr.mxu0 0.0
    %3901 = vmatpush1.msra.mxu0 0.0
    %3902 = vmatprep.subr.mxu0 0.0
    %3903 = vmatpush1.msra.mxu0 0.0
    %3904 = vmatprep.subr.mxu0 0.0
    %3905 = vmatpush1.msra.mxu0 0.0
    %3906 = vmatprep.subr.mxu0 0.0
    %3907 = vmatpush1.msra.mxu0 0.0
    %3908 = vmatprep.subr.mxu0 0.0
    %3909 = vmatpush1.msra.mxu0 0.0
    %3910 = vmatprep.subr.mxu0 0.0
    %3911 = vmatpush1.msra.mxu0 0.0
    %3912 = vmatprep.subr.mxu0 0.0
    %3913 = vmatpush1.msra.mxu0 0.0
    %3914 = vmatprep.subr.mxu0 0.0
    %3915 = vmatpush1.msra.mxu0 0.0
    %3916 = vmatprep.subr.mxu0 0.0
    %3917 = vmatpush1.msra.mxu0 0.0
    %3918 = vmatprep.subr.mxu0 0.0
    %3919 = vmatpush1.msra.mxu0 0.0
    %3920 = vmatprep.subr.mxu0 0.0
    %3921 = vmatpush1.msra.mxu0 0.0
    %3922 = vmatprep.subr.mxu0 0.0
    %3923 = vmatpush1.msra.mxu0 0.0
    %3924 = vmatprep.subr.mxu0 0.0
    %3925 = vmatpush1.msra.mxu0 0.0
    %3926 = vmatprep.subr.mxu0 0.0
    %3927 = vmatpush1.msra.mxu0 0.0
    %3928 = vmatprep.mubr.f32.mxu0 0.0
    %v3929 = vand.u32 %v3443, 4294901760
    %3930 = vmatmul.mubr.f32.gmra.mrb[0].mxu0 %v3929
    %v3931 = vpop.f32.mrb[0].mxu0
    %v3932 = vadd.f32 %v3856, %v3931
    %v3933 = vpop.f32.mrb[0].mxu0
    %v3934 = vadd.f32 %v3858, %v3933
    %3935 = vdwg.mxu0
    %vm3936 = vcmp.gt.f32.partialorder %v3932, 0.0
    %vm3937 = vcmp.gt.f32.partialorder %v3934, 0.0
    %v3938 = vmul.f32 %v3932, 0.01
    %v3939 = vmul.f32 %v3934, 0.01
    %v3940 = vsel %vm3936, %v3932, %v3938
    %v3941 = vsel %vm3937, %v3934, %v3939
    %3943 = vrot.lane.b32.xlu0 %v27, 120
    %v3944 = vpop.permute.xlu0 %3943
    %v3945 = vsel %vm2376, %v3944, 0
    %v3947 = vand.u32 %v2369, 4294901760
    %3948 = vmatprep.subr.mxu0 %v3947
    %v3949 = vand.u32 %v2368, 4294901760
    %3950 = vmatpush1.msra.mxu0 %v3949
    %3951 = vmatprep.subr.mxu0 0.0
    %3952 = vmatpush1.msra.mxu0 0.0
    %3953 = vmatprep.subr.mxu0 0.0
    %3954 = vmatpush1.msra.mxu0 0.0
    %3955 = vmatprep.subr.mxu0 0.0
    %3956 = vmatpush1.msra.mxu0 0.0
    %3957 = vmatprep.subr.mxu0 0.0
    %3958 = vmatpush1.msra.mxu0 0.0
    %3959 = vmatprep.subr.mxu0 0.0
    %3960 = vmatpush1.msra.mxu0 0.0
    %3961 = vmatprep.subr.mxu0 0.0
    %3962 = vmatpush1.msra.mxu0 0.0
    %3963 = vmatprep.subr.mxu0 0.0
    %3964 = vmatpush1.msra.mxu0 0.0
    %3965 = vmatprep.subr.mxu0 0.0
    %3966 = vmatpush1.msra.mxu0 0.0
    %3967 = vmatprep.subr.mxu0 0.0
    %3968 = vmatpush1.msra.mxu0 0.0
    %3969 = vmatprep.subr.mxu0 0.0
    %3970 = vmatpush1.msra.mxu0 0.0
    %3971 = vmatprep.subr.mxu0 0.0
    %3972 = vmatpush1.msra.mxu0 0.0
    %3973 = vmatprep.subr.mxu0 0.0
    %3974 = vmatpush1.msra.mxu0 0.0
    %3975 = vmatprep.subr.mxu0 0.0
    %3976 = vmatpush1.msra.mxu0 0.0
    %3977 = vmatprep.subr.mxu0 0.0
    %3978 = vmatpush1.msra.mxu0 0.0
    %3979 = vmatprep.subr.mxu0 0.0
    %3980 = vmatpush1.msra.mxu0 0.0
    %3981 = vmatprep.subr.mxu0 0.0
    %3982 = vmatpush1.msra.mxu0 0.0
    %3983 = vmatprep.subr.mxu0 0.0
    %3984 = vmatpush1.msra.mxu0 0.0
    %3985 = vmatprep.subr.mxu0 0.0
    %3986 = vmatpush1.msra.mxu0 0.0
    %3987 = vmatprep.subr.mxu0 0.0
    %3988 = vmatpush1.msra.mxu0 0.0
    %3989 = vmatprep.subr.mxu0 0.0
    %3990 = vmatpush1.msra.mxu0 0.0
    %3991 = vmatprep.subr.mxu0 0.0
    %3992 = vmatpush1.msra.mxu0 0.0
    %3993 = vmatprep.subr.mxu0 0.0
    %3994 = vmatpush1.msra.mxu0 0.0
    %3995 = vmatprep.subr.mxu0 0.0
    %3996 = vmatpush1.msra.mxu0 0.0
    %3997 = vmatprep.subr.mxu0 0.0
    %3998 = vmatpush1.msra.mxu0 0.0
    %3999 = vmatprep.subr.mxu0 0.0
    %4000 = vmatpush1.msra.mxu0 0.0
    %4001 = vmatprep.subr.mxu0 0.0
    %4002 = vmatpush1.msra.mxu0 0.0
    %4003 = vmatprep.subr.mxu0 0.0
    %4004 = vmatpush1.msra.mxu0 0.0
    %4005 = vmatprep.subr.mxu0 0.0
    %4006 = vmatpush1.msra.mxu0 0.0
    %4007 = vmatprep.subr.mxu0 0.0
    %4008 = vmatpush1.msra.mxu0 0.0
    %4009 = vmatprep.subr.mxu0 0.0
    %4010 = vmatpush1.msra.mxu0 0.0
    %4011 = vmatprep.subr.mxu0 0.0
    %4012 = vmatpush1.msra.mxu0 0.0
    %4013 = vmatprep.mubr.f32.mxu0 0.0
    %v4014 = vand.u32 %v3945, 4294901760
    %v4015 = vsub.f32 %v3945, %v4014
    %v4016 = vand.u32 %v4015, 4294901760
    %v4017 = vsub.f32 %v4015, %v4016
    %v4018 = vand.u32 %v4017, 4294901760
    %4019 = vmatmul.mubr.f32.gmra.mrb[0].mxu0 %v4018
    %v4020 = vpop.f32.mrb[0].mxu0
    %v4021 = vadd.f32 0.0, %v4020
    %v4022 = vpop.f32.mrb[0].mxu0
    %v4023 = vadd.f32 0.0, %v4022
    %4024 = vdwg.mxu0
    %v4025 = vand.u32 %v2369, 4294901760
    %v4026 = vsub.f32 %v2369, %v4025
    %v4027 = vand.u32 %v4026, 4294901760
    %v4028 = vsub.f32 %v4026, %v4027
    %v4029 = vand.u32 %v4028, 4294901760
    %4030 = vmatprep.subr.mxu0 %v4029
    %v4031 = vand.u32 %v2368, 4294901760
    %v4032 = vsub.f32 %v2368, %v4031
    %v4033 = vand.u32 %v4032, 4294901760
    %v4034 = vsub.f32 %v4032, %v4033
    %v4035 = vand.u32 %v4034, 4294901760
    %4036 = vmatpush1.msra.mxu0 %v4035
    %4037 = vmatprep.subr.mxu0 0.0
    %4038 = vmatpush1.msra.mxu0 0.0
    %4039 = vmatprep.subr.mxu0 0.0
    %4040 = vmatpush1.msra.mxu0 0.0
    %4041 = vmatprep.subr.mxu0 0.0
    %4042 = vmatpush1.msra.mxu0 0.0
    %4043 = vmatprep.subr.mxu0 0.0
    %4044 = vmatpush1.msra.mxu0 0.0
    %4045 = vmatprep.subr.mxu0 0.0
    %4046 = vmatpush1.msra.mxu0 0.0
    %4047 = vmatprep.subr.mxu0 0.0
    %4048 = vmatpush1.msra.mxu0 0.0
    %4049 = vmatprep.subr.mxu0 0.0
    %4050 = vmatpush1.msra.mxu0 0.0
    %4051 = vmatprep.subr.mxu0 0.0
    %4052 = vmatpush1.msra.mxu0 0.0
    %4053 = vmatprep.subr.mxu0 0.0
    %4054 = vmatpush1.msra.mxu0 0.0
    %4055 = vmatprep.subr.mxu0 0.0
    %4056 = vmatpush1.msra.mxu0 0.0
    %4057 = vmatprep.subr.mxu0 0.0
    %4058 = vmatpush1.msra.mxu0 0.0
    %4059 = vmatprep.subr.mxu0 0.0
    %4060 = vmatpush1.msra.mxu0 0.0
    %4061 = vmatprep.subr.mxu0 0.0
    %4062 = vmatpush1.msra.mxu0 0.0
    %4063 = vmatprep.subr.mxu0 0.0
    %4064 = vmatpush1.msra.mxu0 0.0
    %4065 = vmatprep.subr.mxu0 0.0
    %4066 = vmatpush1.msra.mxu0 0.0
    %4067 = vmatprep.subr.mxu0 0.0
    %4068 = vmatpush1.msra.mxu0 0.0
    %4069 = vmatprep.subr.mxu0 0.0
    %4070 = vmatpush1.msra.mxu0 0.0
    %4071 = vmatprep.subr.mxu0 0.0
    %4072 = vmatpush1.msra.mxu0 0.0
    %4073 = vmatprep.subr.mxu0 0.0
    %4074 = vmatpush1.msra.mxu0 0.0
    %4075 = vmatprep.subr.mxu0 0.0
    %4076 = vmatpush1.msra.mxu0 0.0
    %4077 = vmatprep.subr.mxu0 0.0
    %4078 = vmatpush1.msra.mxu0 0.0
    %4079 = vmatprep.subr.mxu0 0.0
    %4080 = vmatpush1.msra.mxu0 0.0
    %4081 = vmatprep.subr.mxu0 0.0
    %4082 = vmatpush1.msra.mxu0 0.0
    %4083 = vmatprep.subr.mxu0 0.0
    %4084 = vmatpush1.msra.mxu0 0.0
    %4085 = vmatprep.subr.mxu0 0.0
    %4086 = vmatpush1.msra.mxu0 0.0
    %4087 = vmatprep.subr.mxu0 0.0
    %4088 = vmatpush1.msra.mxu0 0.0
    %4089 = vmatprep.subr.mxu0 0.0
    %4090 = vmatpush1.msra.mxu0 0.0
    %4091 = vmatprep.subr.mxu0 0.0
    %4092 = vmatpush1.msra.mxu0 0.0
    %4093 = vmatprep.subr.mxu0 0.0
    %4094 = vmatpush1.msra.mxu0 0.0
    %4095 = vmatprep.subr.mxu0 0.0
    %4096 = vmatpush1.msra.mxu0 0.0
    %4097 = vmatprep.subr.mxu0 0.0
    %4098 = vmatpush1.msra.mxu0 0.0
    %4099 = vmatprep.mubr.f32.mxu0 0.0
    %v4100 = vand.u32 %v3945, 4294901760
    %4101 = vmatmul.mubr.f32.gmra.mrb[0].mxu0 %v4100
    %v4102 = vpop.f32.mrb[0].mxu0
    %v4103 = vadd.f32 %v4021, %v4102
    %v4104 = vpop.f32.mrb[0].mxu0
    %v4105 = vadd.f32 %v4023, %v4104
    %4106 = vdwg.mxu0
    %v4107 = vand.u32 %v2369, 4294901760
    %v4108 = vsub.f32 %v2369, %v4107
    %4109 = vmatprep.subr.mxu0 %v4108
    %v4110 = vand.u32 %v2368, 4294901760
    %v4111 = vsub.f32 %v2368, %v4110
    %4112 = vmatpush1.msra.mxu0 %v4111
    %4113 = vmatprep.subr.mxu0 0.0
    %4114 = vmatpush1.msra.mxu0 0.0
    %4115 = vmatprep.subr.mxu0 0.0
    %4116 = vmatpush1.msra.mxu0 0.0
    %4117 = vmatprep.subr.mxu0 0.0
    %4118 = vmatpush1.msra.mxu0 0.0
    %4119 = vmatprep.subr.mxu0 0.0
    %4120 = vmatpush1.msra.mxu0 0.0
    %4121 = vmatprep.subr.mxu0 0.0
    %4122 = vmatpush1.msra.mxu0 0.0
    %4123 = vmatprep.subr.mxu0 0.0
    %4124 = vmatpush1.msra.mxu0 0.0
    %4125 = vmatprep.subr.mxu0 0.0
    %4126 = vmatpush1.msra.mxu0 0.0
    %4127 = vmatprep.subr.mxu0 0.0
    %4128 = vmatpush1.msra.mxu0 0.0
    %4129 = vmatprep.subr.mxu0 0.0
    %4130 = vmatpush1.msra.mxu0 0.0
    %4131 = vmatprep.subr.mxu0 0.0
    %4132 = vmatpush1.msra.mxu0 0.0
    %4133 = vmatprep.subr.mxu0 0.0
    %4134 = vmatpush1.msra.mxu0 0.0
    %4135 = vmatprep.subr.mxu0 0.0
    %4136 = vmatpush1.msra.mxu0 0.0
    %4137 = vmatprep.subr.mxu0 0.0
    %4138 = vmatpush1.msra.mxu0 0.0
    %4139 = vmatprep.subr.mxu0 0.0
    %4140 = vmatpush1.msra.mxu0 0.0
    %4141 = vmatprep.subr.mxu0 0.0
    %4142 = vmatpush1.msra.mxu0 0.0
    %4143 = vmatprep.subr.mxu0 0.0
    %4144 = vmatpush1.msra.mxu0 0.0
    %4145 = vmatprep.subr.mxu0 0.0
    %4146 = vmatpush1.msra.mxu0 0.0
    %4147 = vmatprep.subr.mxu0 0.0
    %4148 = vmatpush1.msra.mxu0 0.0
    %4149 = vmatprep.subr.mxu0 0.0
    %4150 = vmatpush1.msra.mxu0 0.0
    %4151 = vmatprep.subr.mxu0 0.0
    %4152 = vmatpush1.msra.mxu0 0.0
    %4153 = vmatprep.subr.mxu0 0.0
    %4154 = vmatpush1.msra.mxu0 0.0
    %4155 = vmatprep.subr.mxu0 0.0
    %4156 = vmatpush1.msra.mxu0 0.0
    %4157 = vmatprep.subr.mxu0 0.0
    %4158 = vmatpush1.msra.mxu0 0.0
    %4159 = vmatprep.subr.mxu0 0.0
    %4160 = vmatpush1.msra.mxu0 0.0
    %4161 = vmatprep.subr.mxu0 0.0
    %4162 = vmatpush1.msra.mxu0 0.0
    %4163 = vmatprep.subr.mxu0 0.0
    %4164 = vmatpush1.msra.mxu0 0.0
    %4165 = vmatprep.subr.mxu0 0.0
    %4166 = vmatpush1.msra.mxu0 0.0
    %4167 = vmatprep.subr.mxu0 0.0
    %4168 = vmatpush1.msra.mxu0 0.0
    %4169 = vmatprep.subr.mxu0 0.0
    %4170 = vmatpush1.msra.mxu0 0.0
    %4171 = vmatprep.subr.mxu0 0.0
    %4172 = vmatpush1.msra.mxu0 0.0
    %4173 = vmatprep.subr.mxu0 0.0
    %4174 = vmatpush1.msra.mxu0 0.0
    %4175 = vmatprep.mubr.f32.mxu0 0.0
    %v4176 = vand.u32 %v3945, 4294901760
    %v4177 = vsub.f32 %v3945, %v4176
    %4178 = vmatmul.mubr.f32.gmra.mrb[0].mxu0 %v4177
    %v4179 = vpop.f32.mrb[0].mxu0
    %v4180 = vadd.f32 %v4103, %v4179
    %v4181 = vpop.f32.mrb[0].mxu0
    %v4182 = vadd.f32 %v4105, %v4181
    %4183 = vdwg.mxu0
    %v4184 = vand.u32 %v2369, 4294901760
    %4185 = vmatprep.subr.mxu0 %v4184
    %v4186 = vand.u32 %v2368, 4294901760
    %4187 = vmatpush1.msra.mxu0 %v4186
    %4188 = vmatprep.subr.mxu0 0.0
    %4189 = vmatpush1.msra.mxu0 0.0
    %4190 = vmatprep.subr.mxu0 0.0
    %4191 = vmatpush1.msra.mxu0 0.0
    %4192 = vmatprep.subr.mxu0 0.0
    %4193 = vmatpush1.msra.mxu0 0.0
    %4194 = vmatprep.subr.mxu0 0.0
    %4195 = vmatpush1.msra.mxu0 0.0
    %4196 = vmatprep.subr.mxu0 0.0
    %4197 = vmatpush1.msra.mxu0 0.0
    %4198 = vmatprep.subr.mxu0 0.0
    %4199 = vmatpush1.msra.mxu0 0.0
    %4200 = vmatprep.subr.mxu0 0.0
    %4201 = vmatpush1.msra.mxu0 0.0
    %4202 = vmatprep.subr.mxu0 0.0
    %4203 = vmatpush1.msra.mxu0 0.0
    %4204 = vmatprep.subr.mxu0 0.0
    %4205 = vmatpush1.msra.mxu0 0.0
    %4206 = vmatprep.subr.mxu0 0.0
    %4207 = vmatpush1.msra.mxu0 0.0
    %4208 = vmatprep.subr.mxu0 0.0
    %4209 = vmatpush1.msra.mxu0 0.0
    %4210 = vmatprep.subr.mxu0 0.0
    %4211 = vmatpush1.msra.mxu0 0.0
    %4212 = vmatprep.subr.mxu0 0.0
    %4213 = vmatpush1.msra.mxu0 0.0
    %4214 = vmatprep.subr.mxu0 0.0
    %4215 = vmatpush1.msra.mxu0 0.0
    %4216 = vmatprep.subr.mxu0 0.0
    %4217 = vmatpush1.msra.mxu0 0.0
    %4218 = vmatprep.subr.mxu0 0.0
    %4219 = vmatpush1.msra.mxu0 0.0
    %4220 = vmatprep.subr.mxu0 0.0
    %4221 = vmatpush1.msra.mxu0 0.0
    %4222 = vmatprep.subr.mxu0 0.0
    %4223 = vmatpush1.msra.mxu0 0.0
    %4224 = vmatprep.subr.mxu0 0.0
    %4225 = vmatpush1.msra.mxu0 0.0
    %4226 = vmatprep.subr.mxu0 0.0
    %4227 = vmatpush1.msra.mxu0 0.0
    %4228 = vmatprep.subr.mxu0 0.0
    %4229 = vmatpush1.msra.mxu0 0.0
    %4230 = vmatprep.subr.mxu0 0.0
    %4231 = vmatpush1.msra.mxu0 0.0
    %4232 = vmatprep.subr.mxu0 0.0
    %4233 = vmatpush1.msra.mxu0 0.0
    %4234 = vmatprep.subr.mxu0 0.0
    %4235 = vmatpush1.msra.mxu0 0.0
    %4236 = vmatprep.subr.mxu0 0.0
    %4237 = vmatpush1.msra.mxu0 0.0
    %4238 = vmatprep.subr.mxu0 0.0
    %4239 = vmatpush1.msra.mxu0 0.0
    %4240 = vmatprep.subr.mxu0 0.0
    %4241 = vmatpush1.msra.mxu0 0.0
    %4242 = vmatprep.subr.mxu0 0.0
    %4243 = vmatpush1.msra.mxu0 0.0
    %4244 = vmatprep.subr.mxu0 0.0
    %4245 = vmatpush1.msra.mxu0 0.0
    %4246 = vmatprep.subr.mxu0 0.0
    %4247 = vmatpush1.msra.mxu0 0.0
    %4248 = vmatprep.subr.mxu0 0.0
    %4249 = vmatpush1.msra.mxu0 0.0
    %4250 = vmatprep.mubr.f32.mxu0 0.0
    %v4251 = vand.u32 %v3945, 4294901760
    %v4252 = vsub.f32 %v3945, %v4251
    %v4253 = vand.u32 %v4252, 4294901760
    %4254 = vmatmul.mubr.f32.gmra.mrb[0].mxu0 %v4253
    %v4255 = vpop.f32.mrb[0].mxu0
    %v4256 = vadd.f32 %v4180, %v4255
    %v4257 = vpop.f32.mrb[0].mxu0
    %v4258 = vadd.f32 %v4182, %v4257
    %4259 = vdwg.mxu0
    %v4260 = vand.u32 %v2369, 4294901760
    %v4261 = vsub.f32 %v2369, %v4260
    %v4262 = vand.u32 %v4261, 4294901760
    %4263 = vmatprep.subr.mxu0 %v4262
    %v4264 = vand.u32 %v2368, 4294901760
    %v4265 = vsub.f32 %v2368, %v4264
    %v4266 = vand.u32 %v4265, 4294901760
    %4267 = vmatpush1.msra.mxu0 %v4266
    %4268 = vmatprep.subr.mxu0 0.0
    %4269 = vmatpush1.msra.mxu0 0.0
    %4270 = vmatprep.subr.mxu0 0.0
    %4271 = vmatpush1.msra.mxu0 0.0
    %4272 = vmatprep.subr.mxu0 0.0
    %4273 = vmatpush1.msra.mxu0 0.0
    %4274 = vmatprep.subr.mxu0 0.0
    %4275 = vmatpush1.msra.mxu0 0.0
    %4276 = vmatprep.subr.mxu0 0.0
    %4277 = vmatpush1.msra.mxu0 0.0
    %4278 = vmatprep.subr.mxu0 0.0
    %4279 = vmatpush1.msra.mxu0 0.0
    %4280 = vmatprep.subr.mxu0 0.0
    %4281 = vmatpush1.msra.mxu0 0.0
    %4282 = vmatprep.subr.mxu0 0.0
    %4283 = vmatpush1.msra.mxu0 0.0
    %4284 = vmatprep.subr.mxu0 0.0
    %4285 = vmatpush1.msra.mxu0 0.0
    %4286 = vmatprep.subr.mxu0 0.0
    %4287 = vmatpush1.msra.mxu0 0.0
    %4288 = vmatprep.subr.mxu0 0.0
    %4289 = vmatpush1.msra.mxu0 0.0
    %4290 = vmatprep.subr.mxu0 0.0
    %4291 = vmatpush1.msra.mxu0 0.0
    %4292 = vmatprep.subr.mxu0 0.0
    %4293 = vmatpush1.msra.mxu0 0.0
    %4294 = vmatprep.subr.mxu0 0.0
    %4295 = vmatpush1.msra.mxu0 0.0
    %4296 = vmatprep.subr.mxu0 0.0
    %4297 = vmatpush1.msra.mxu0 0.0
    %4298 = vmatprep.subr.mxu0 0.0
    %4299 = vmatpush1.msra.mxu0 0.0
    %4300 = vmatprep.subr.mxu0 0.0
    %4301 = vmatpush1.msra.mxu0 0.0
    %4302 = vmatprep.subr.mxu0 0.0
    %4303 = vmatpush1.msra.mxu0 0.0
    %4304 = vmatprep.subr.mxu0 0.0
    %4305 = vmatpush1.msra.mxu0 0.0
    %4306 = vmatprep.subr.mxu0 0.0
    %4307 = vmatpush1.msra.mxu0 0.0
    %4308 = vmatprep.subr.mxu0 0.0
    %4309 = vmatpush1.msra.mxu0 0.0
    %4310 = vmatprep.subr.mxu0 0.0
    %4311 = vmatpush1.msra.mxu0 0.0
    %4312 = vmatprep.subr.mxu0 0.0
    %4313 = vmatpush1.msra.mxu0 0.0
    %4314 = vmatprep.subr.mxu0 0.0
    %4315 = vmatpush1.msra.mxu0 0.0
    %4316 = vmatprep.subr.mxu0 0.0
    %4317 = vmatpush1.msra.mxu0 0.0
    %4318 = vmatprep.subr.mxu0 0.0
    %4319 = vmatpush1.msra.mxu0 0.0
    %4320 = vmatprep.subr.mxu0 0.0
    %4321 = vmatpush1.msra.mxu0 0.0
    %4322 = vmatprep.subr.mxu0 0.0
    %4323 = vmatpush1.msra.mxu0 0.0
    %4324 = vmatprep.subr.mxu0 0.0
    %4325 = vmatpush1.msra.mxu0 0.0
    %4326 = vmatprep.subr.mxu0 0.0
    %4327 = vmatpush1.msra.mxu0 0.0
    %4328 = vmatprep.subr.mxu0 0.0
    %4329 = vmatpush1.msra.mxu0 0.0
    %4330 = vmatprep.mubr.f32.mxu0 0.0
    %v4331 = vand.u32 %v3945, 4294901760
    %4332 = vmatmul.mubr.f32.gmra.mrb[0].mxu0 %v4331
    %v4333 = vpop.f32.mrb[0].mxu0
    %v4334 = vadd.f32 %v4256, %v4333
    %v4335 = vpop.f32.mrb[0].mxu0
    %v4336 = vadd.f32 %v4258, %v4335
    %4337 = vdwg.mxu0
    %v4338 = vand.u32 %v2369, 4294901760
    %4339 = vmatprep.subr.mxu0 %v4338
    %v4340 = vand.u32 %v2368, 4294901760
    %4341 = vmatpush1.msra.mxu0 %v4340
    %4342 = vmatprep.subr.mxu0 0.0
    %4343 = vmatpush1.msra.mxu0 0.0
    %4344 = vmatprep.subr.mxu0 0.0
    %4345 = vmatpush1.msra.mxu0 0.0
    %4346 = vmatprep.subr.mxu0 0.0
    %4347 = vmatpush1.msra.mxu0 0.0
    %4348 = vmatprep.subr.mxu0 0.0
    %4349 = vmatpush1.msra.mxu0 0.0
    %4350 = vmatprep.subr.mxu0 0.0
    %4351 = vmatpush1.msra.mxu0 0.0
    %4352 = vmatprep.subr.mxu0 0.0
    %4353 = vmatpush1.msra.mxu0 0.0
    %4354 = vmatprep.subr.mxu0 0.0
    %4355 = vmatpush1.msra.mxu0 0.0
    %4356 = vmatprep.subr.mxu0 0.0
    %4357 = vmatpush1.msra.mxu0 0.0
    %4358 = vmatprep.subr.mxu0 0.0
    %4359 = vmatpush1.msra.mxu0 0.0
    %4360 = vmatprep.subr.mxu0 0.0
    %4361 = vmatpush1.msra.mxu0 0.0
    %4362 = vmatprep.subr.mxu0 0.0
    %4363 = vmatpush1.msra.mxu0 0.0
    %4364 = vmatprep.subr.mxu0 0.0
    %4365 = vmatpush1.msra.mxu0 0.0
    %4366 = vmatprep.subr.mxu0 0.0
    %4367 = vmatpush1.msra.mxu0 0.0
    %4368 = vmatprep.subr.mxu0 0.0
    %4369 = vmatpush1.msra.mxu0 0.0
    %4370 = vmatprep.subr.mxu0 0.0
    %4371 = vmatpush1.msra.mxu0 0.0
    %4372 = vmatprep.subr.mxu0 0.0
    %4373 = vmatpush1.msra.mxu0 0.0
    %4374 = vmatprep.subr.mxu0 0.0
    %4375 = vmatpush1.msra.mxu0 0.0
    %4376 = vmatprep.subr.mxu0 0.0
    %4377 = vmatpush1.msra.mxu0 0.0
    %4378 = vmatprep.subr.mxu0 0.0
    %4379 = vmatpush1.msra.mxu0 0.0
    %4380 = vmatprep.subr.mxu0 0.0
    %4381 = vmatpush1.msra.mxu0 0.0
    %4382 = vmatprep.subr.mxu0 0.0
    %4383 = vmatpush1.msra.mxu0 0.0
    %4384 = vmatprep.subr.mxu0 0.0
    %4385 = vmatpush1.msra.mxu0 0.0
    %4386 = vmatprep.subr.mxu0 0.0
    %4387 = vmatpush1.msra.mxu0 0.0
    %4388 = vmatprep.subr.mxu0 0.0
    %4389 = vmatpush1.msra.mxu0 0.0
    %4390 = vmatprep.subr.mxu0 0.0
    %4391 = vmatpush1.msra.mxu0 0.0
    %4392 = vmatprep.subr.mxu0 0.0
    %4393 = vmatpush1.msra.mxu0 0.0
    %4394 = vmatprep.subr.mxu0 0.0
    %4395 = vmatpush1.msra.mxu0 0.0
    %4396 = vmatprep.subr.mxu0 0.0
    %4397 = vmatpush1.msra.mxu0 0.0
    %4398 = vmatprep.subr.mxu0 0.0
    %4399 = vmatpush1.msra.mxu0 0.0
    %4400 = vmatprep.subr.mxu0 0.0
    %4401 = vmatpush1.msra.mxu0 0.0
    %4402 = vmatprep.subr.mxu0 0.0
    %4403 = vmatpush1.msra.mxu0 0.0
    %4404 = vmatprep.mubr.f32.mxu0 0.0
    %v4405 = vand.u32 %v3945, 4294901760
    %4406 = vmatmul.mubr.f32.gmra.mrb[0].mxu0 %v4405
    %v4407 = vpop.f32.mrb[0].mxu0
    %v4408 = vadd.f32 %v4334, %v4407
    %v4409 = vpop.f32.mrb[0].mxu0
    %v4410 = vadd.f32 %v4336, %v4409
    %4411 = vdwg.mxu0
    %v4412 = vsel %vm2376, %v27, 0
    %v4414 = vand.u32 %v3941, 4294901760
    %4415 = vmatprep.subr.mxu0 %v4414
    %v4416 = vand.u32 %v3940, 4294901760
    %4417 = vmatpush1.msra.mxu0 %v4416
    %4418 = vmatprep.subr.mxu0 0.0
    %4419 = vmatpush1.msra.mxu0 0.0
    %4420 = vmatprep.subr.mxu0 0.0
    %4421 = vmatpush1.msra.mxu0 0.0
    %4422 = vmatprep.subr.mxu0 0.0
    %4423 = vmatpush1.msra.mxu0 0.0
    %4424 = vmatprep.subr.mxu0 0.0
    %4425 = vmatpush1.msra.mxu0 0.0
    %4426 = vmatprep.subr.mxu0 0.0
    %4427 = vmatpush1.msra.mxu0 0.0
    %4428 = vmatprep.subr.mxu0 0.0
    %4429 = vmatpush1.msra.mxu0 0.0
    %4430 = vmatprep.subr.mxu0 0.0
    %4431 = vmatpush1.msra.mxu0 0.0
    %4432 = vmatprep.subr.mxu0 0.0
    %4433 = vmatpush1.msra.mxu0 0.0
    %4434 = vmatprep.subr.mxu0 0.0
    %4435 = vmatpush1.msra.mxu0 0.0
    %4436 = vmatprep.subr.mxu0 0.0
    %4437 = vmatpush1.msra.mxu0 0.0
    %4438 = vmatprep.subr.mxu0 0.0
    %4439 = vmatpush1.msra.mxu0 0.0
    %4440 = vmatprep.subr.mxu0 0.0
    %4441 = vmatpush1.msra.mxu0 0.0
    %4442 = vmatprep.subr.mxu0 0.0
    %4443 = vmatpush1.msra.mxu0 0.0
    %4444 = vmatprep.subr.mxu0 0.0
    %4445 = vmatpush1.msra.mxu0 0.0
    %4446 = vmatprep.subr.mxu0 0.0
    %4447 = vmatpush1.msra.mxu0 0.0
    %4448 = vmatprep.subr.mxu0 0.0
    %4449 = vmatpush1.msra.mxu0 0.0
    %4450 = vmatprep.subr.mxu0 0.0
    %4451 = vmatpush1.msra.mxu0 0.0
    %4452 = vmatprep.subr.mxu0 0.0
    %4453 = vmatpush1.msra.mxu0 0.0
    %4454 = vmatprep.subr.mxu0 0.0
    %4455 = vmatpush1.msra.mxu0 0.0
    %4456 = vmatprep.subr.mxu0 0.0
    %4457 = vmatpush1.msra.mxu0 0.0
    %4458 = vmatprep.subr.mxu0 0.0
    %4459 = vmatpush1.msra.mxu0 0.0
    %4460 = vmatprep.subr.mxu0 0.0
    %4461 = vmatpush1.msra.mxu0 0.0
    %4462 = vmatprep.subr.mxu0 0.0
    %4463 = vmatpush1.msra.mxu0 0.0
    %4464 = vmatprep.subr.mxu0 0.0
    %4465 = vmatpush1.msra.mxu0 0.0
    %4466 = vmatprep.subr.mxu0 0.0
    %4467 = vmatpush1.msra.mxu0 0.0
    %4468 = vmatprep.subr.mxu0 0.0
    %4469 = vmatpush1.msra.mxu0 0.0
    %4470 = vmatprep.subr.mxu0 0.0
    %4471 = vmatpush1.msra.mxu0 0.0
    %4472 = vmatprep.subr.mxu0 0.0
    %4473 = vmatpush1.msra.mxu0 0.0
    %4474 = vmatprep.subr.mxu0 0.0
    %4475 = vmatpush1.msra.mxu0 0.0
    %4476 = vmatprep.subr.mxu0 0.0
    %4477 = vmatpush1.msra.mxu0 0.0
    %4478 = vmatprep.subr.mxu0 0.0
    %4479 = vmatpush1.msra.mxu0 0.0
    %4480 = vmatprep.mubr.f32.mxu0 0.0
    %v4481 = vand.u32 %v4412, 4294901760
    %v4482 = vsub.f32 %v4412, %v4481
    %v4483 = vand.u32 %v4482, 4294901760
    %v4484 = vsub.f32 %v4482, %v4483
    %v4485 = vand.u32 %v4484, 4294901760
    %4486 = vmatmul.mubr.f32.gmra.mrb[0].mxu0 %v4485
    %v4487 = vpop.f32.mrb[0].mxu0
    %v4488 = vadd.f32 %v4408, %v4487
    %v4489 = vpop.f32.mrb[0].mxu0
    %v4490 = vadd.f32 %v4410, %v4489
    %4491 = vdwg.mxu0
    %v4492 = vand.u32 %v3941, 4294901760
    %v4493 = vsub.f32 %v3941, %v4492
    %v4494 = vand.u32 %v4493, 4294901760
    %v4495 = vsub.f32 %v4493, %v4494
    %v4496 = vand.u32 %v4495, 4294901760
    %4497 = vmatprep.subr.mxu0 %v4496
    %v4498 = vand.u32 %v3940, 4294901760
    %v4499 = vsub.f32 %v3940, %v4498
    %v4500 = vand.u32 %v4499, 4294901760
    %v4501 = vsub.f32 %v4499, %v4500
    %v4502 = vand.u32 %v4501, 4294901760
    %4503 = vmatpush1.msra.mxu0 %v4502
    %4504 = vmatprep.subr.mxu0 0.0
    %4505 = vmatpush1.msra.mxu0 0.0
    %4506 = vmatprep.subr.mxu0 0.0
    %4507 = vmatpush1.msra.mxu0 0.0
    %4508 = vmatprep.subr.mxu0 0.0
    %4509 = vmatpush1.msra.mxu0 0.0
    %4510 = vmatprep.subr.mxu0 0.0
    %4511 = vmatpush1.msra.mxu0 0.0
    %4512 = vmatprep.subr.mxu0 0.0
    %4513 = vmatpush1.msra.mxu0 0.0
    %4514 = vmatprep.subr.mxu0 0.0
    %4515 = vmatpush1.msra.mxu0 0.0
    %4516 = vmatprep.subr.mxu0 0.0
    %4517 = vmatpush1.msra.mxu0 0.0
    %4518 = vmatprep.subr.mxu0 0.0
    %4519 = vmatpush1.msra.mxu0 0.0
    %4520 = vmatprep.subr.mxu0 0.0
    %4521 = vmatpush1.msra.mxu0 0.0
    %4522 = vmatprep.subr.mxu0 0.0
    %4523 = vmatpush1.msra.mxu0 0.0
    %4524 = vmatprep.subr.mxu0 0.0
    %4525 = vmatpush1.msra.mxu0 0.0
    %4526 = vmatprep.subr.mxu0 0.0
    %4527 = vmatpush1.msra.mxu0 0.0
    %4528 = vmatprep.subr.mxu0 0.0
    %4529 = vmatpush1.msra.mxu0 0.0
    %4530 = vmatprep.subr.mxu0 0.0
    %4531 = vmatpush1.msra.mxu0 0.0
    %4532 = vmatprep.subr.mxu0 0.0
    %4533 = vmatpush1.msra.mxu0 0.0
    %4534 = vmatprep.subr.mxu0 0.0
    %4535 = vmatpush1.msra.mxu0 0.0
    %4536 = vmatprep.subr.mxu0 0.0
    %4537 = vmatpush1.msra.mxu0 0.0
    %4538 = vmatprep.subr.mxu0 0.0
    %4539 = vmatpush1.msra.mxu0 0.0
    %4540 = vmatprep.subr.mxu0 0.0
    %4541 = vmatpush1.msra.mxu0 0.0
    %4542 = vmatprep.subr.mxu0 0.0
    %4543 = vmatpush1.msra.mxu0 0.0
    %4544 = vmatprep.subr.mxu0 0.0
    %4545 = vmatpush1.msra.mxu0 0.0
    %4546 = vmatprep.subr.mxu0 0.0
    %4547 = vmatpush1.msra.mxu0 0.0
    %4548 = vmatprep.subr.mxu0 0.0
    %4549 = vmatpush1.msra.mxu0 0.0
    %4550 = vmatprep.subr.mxu0 0.0
    %4551 = vmatpush1.msra.mxu0 0.0
    %4552 = vmatprep.subr.mxu0 0.0
    %4553 = vmatpush1.msra.mxu0 0.0
    %4554 = vmatprep.subr.mxu0 0.0
    %4555 = vmatpush1.msra.mxu0 0.0
    %4556 = vmatprep.subr.mxu0 0.0
    %4557 = vmatpush1.msra.mxu0 0.0
    %4558 = vmatprep.subr.mxu0 0.0
    %4559 = vmatpush1.msra.mxu0 0.0
    %4560 = vmatprep.subr.mxu0 0.0
    %4561 = vmatpush1.msra.mxu0 0.0
    %4562 = vmatprep.subr.mxu0 0.0
    %4563 = vmatpush1.msra.mxu0 0.0
    %4564 = vmatprep.subr.mxu0 0.0
    %4565 = vmatpush1.msra.mxu0 0.0
    %4566 = vmatprep.mubr.f32.mxu0 0.0
    %v4567 = vand.u32 %v4412, 4294901760
    %4568 = vmatmul.mubr.f32.gmra.mrb[0].mxu0 %v4567
    %v4569 = vpop.f32.mrb[0].mxu0
    %v4570 = vadd.f32 %v4488, %v4569
    %v4571 = vpop.f32.mrb[0].mxu0
    %v4572 = vadd.f32 %v4490, %v4571
    %4573 = vdwg.mxu0
    %v4574 = vand.u32 %v3941, 4294901760
    %v4575 = vsub.f32 %v3941, %v4574
    %4576 = vmatprep.subr.mxu0 %v4575
    %v4577 = vand.u32 %v3940, 4294901760
    %v4578 = vsub.f32 %v3940, %v4577
    %4579 = vmatpush1.msra.mxu0 %v4578
    %4580 = vmatprep.subr.mxu0 0.0
    %4581 = vmatpush1.msra.mxu0 0.0
    %4582 = vmatprep.subr.mxu0 0.0
    %4583 = vmatpush1.msra.mxu0 0.0
    %4584 = vmatprep.subr.mxu0 0.0
    %4585 = vmatpush1.msra.mxu0 0.0
    %4586 = vmatprep.subr.mxu0 0.0
    %4587 = vmatpush1.msra.mxu0 0.0
    %4588 = vmatprep.subr.mxu0 0.0
    %4589 = vmatpush1.msra.mxu0 0.0
    %4590 = vmatprep.subr.mxu0 0.0
    %4591 = vmatpush1.msra.mxu0 0.0
    %4592 = vmatprep.subr.mxu0 0.0
    %4593 = vmatpush1.msra.mxu0 0.0
    %4594 = vmatprep.subr.mxu0 0.0
    %4595 = vmatpush1.msra.mxu0 0.0
    %4596 = vmatprep.subr.mxu0 0.0
    %4597 = vmatpush1.msra.mxu0 0.0
    %4598 = vmatprep.subr.mxu0 0.0
    %4599 = vmatpush1.msra.mxu0 0.0
    %4600 = vmatprep.subr.mxu0 0.0
    %4601 = vmatpush1.msra.mxu0 0.0
    %4602 = vmatprep.subr.mxu0 0.0
    %4603 = vmatpush1.msra.mxu0 0.0
    %4604 = vmatprep.subr.mxu0 0.0
    %4605 = vmatpush1.msra.mxu0 0.0
    %4606 = vmatprep.subr.mxu0 0.0
    %4607 = vmatpush1.msra.mxu0 0.0
    %4608 = vmatprep.subr.mxu0 0.0
    %4609 = vmatpush1.msra.mxu0 0.0
    %4610 = vmatprep.subr.mxu0 0.0
    %4611 = vmatpush1.msra.mxu0 0.0
    %4612 = vmatprep.subr.mxu0 0.0
    %4613 = vmatpush1.msra.mxu0 0.0
    %4614 = vmatprep.subr.mxu0 0.0
    %4615 = vmatpush1.msra.mxu0 0.0
    %4616 = vmatprep.subr.mxu0 0.0
    %4617 = vmatpush1.msra.mxu0 0.0
    %4618 = vmatprep.subr.mxu0 0.0
    %4619 = vmatpush1.msra.mxu0 0.0
    %4620 = vmatprep.subr.mxu0 0.0
    %4621 = vmatpush1.msra.mxu0 0.0
    %4622 = vmatprep.subr.mxu0 0.0
    %4623 = vmatpush1.msra.mxu0 0.0
    %4624 = vmatprep.subr.mxu0 0.0
    %4625 = vmatpush1.msra.mxu0 0.0
    %4626 = vmatprep.subr.mxu0 0.0
    %4627 = vmatpush1.msra.mxu0 0.0
    %4628 = vmatprep.subr.mxu0 0.0
    %4629 = vmatpush1.msra.mxu0 0.0
    %4630 = vmatprep.subr.mxu0 0.0
    %4631 = vmatpush1.msra.mxu0 0.0
    %4632 = vmatprep.subr.mxu0 0.0
    %4633 = vmatpush1.msra.mxu0 0.0
    %4634 = vmatprep.subr.mxu0 0.0
    %4635 = vmatpush1.msra.mxu0 0.0
    %4636 = vmatprep.subr.mxu0 0.0
    %4637 = vmatpush1.msra.mxu0 0.0
    %4638 = vmatprep.subr.mxu0 0.0
    %4639 = vmatpush1.msra.mxu0 0.0
    %4640 = vmatprep.subr.mxu0 0.0
    %4641 = vmatpush1.msra.mxu0 0.0
    %4642 = vmatprep.mubr.f32.mxu0 0.0
    %v4643 = vand.u32 %v4412, 4294901760
    %v4644 = vsub.f32 %v4412, %v4643
    %4645 = vmatmul.mubr.f32.gmra.mrb[0].mxu0 %v4644
    %v4646 = vpop.f32.mrb[0].mxu0
    %v4647 = vadd.f32 %v4570, %v4646
    %v4648 = vpop.f32.mrb[0].mxu0
    %v4649 = vadd.f32 %v4572, %v4648
    %4650 = vdwg.mxu0
    %v4651 = vand.u32 %v3941, 4294901760
    %4652 = vmatprep.subr.mxu0 %v4651
    %v4653 = vand.u32 %v3940, 4294901760
    %4654 = vmatpush1.msra.mxu0 %v4653
    %4655 = vmatprep.subr.mxu0 0.0
    %4656 = vmatpush1.msra.mxu0 0.0
    %4657 = vmatprep.subr.mxu0 0.0
    %4658 = vmatpush1.msra.mxu0 0.0
    %4659 = vmatprep.subr.mxu0 0.0
    %4660 = vmatpush1.msra.mxu0 0.0
    %4661 = vmatprep.subr.mxu0 0.0
    %4662 = vmatpush1.msra.mxu0 0.0
    %4663 = vmatprep.subr.mxu0 0.0
    %4664 = vmatpush1.msra.mxu0 0.0
    %4665 = vmatprep.subr.mxu0 0.0
    %4666 = vmatpush1.msra.mxu0 0.0
    %4667 = vmatprep.subr.mxu0 0.0
    %4668 = vmatpush1.msra.mxu0 0.0
    %4669 = vmatprep.subr.mxu0 0.0
    %4670 = vmatpush1.msra.mxu0 0.0
    %4671 = vmatprep.subr.mxu0 0.0
    %4672 = vmatpush1.msra.mxu0 0.0
    %4673 = vmatprep.subr.mxu0 0.0
    %4674 = vmatpush1.msra.mxu0 0.0
    %4675 = vmatprep.subr.mxu0 0.0
    %4676 = vmatpush1.msra.mxu0 0.0
    %4677 = vmatprep.subr.mxu0 0.0
    %4678 = vmatpush1.msra.mxu0 0.0
    %4679 = vmatprep.subr.mxu0 0.0
    %4680 = vmatpush1.msra.mxu0 0.0
    %4681 = vmatprep.subr.mxu0 0.0
    %4682 = vmatpush1.msra.mxu0 0.0
    %4683 = vmatprep.subr.mxu0 0.0
    %4684 = vmatpush1.msra.mxu0 0.0
    %4685 = vmatprep.subr.mxu0 0.0
    %4686 = vmatpush1.msra.mxu0 0.0
    %4687 = vmatprep.subr.mxu0 0.0
    %4688 = vmatpush1.msra.mxu0 0.0
    %4689 = vmatprep.subr.mxu0 0.0
    %4690 = vmatpush1.msra.mxu0 0.0
    %4691 = vmatprep.subr.mxu0 0.0
    %4692 = vmatpush1.msra.mxu0 0.0
    %4693 = vmatprep.subr.mxu0 0.0
    %4694 = vmatpush1.msra.mxu0 0.0
    %4695 = vmatprep.subr.mxu0 0.0
    %4696 = vmatpush1.msra.mxu0 0.0
    %4697 = vmatprep.subr.mxu0 0.0
    %4698 = vmatpush1.msra.mxu0 0.0
    %4699 = vmatprep.subr.mxu0 0.0
    %4700 = vmatpush1.msra.mxu0 0.0
    %4701 = vmatprep.subr.mxu0 0.0
    %4702 = vmatpush1.msra.mxu0 0.0
    %4703 = vmatprep.subr.mxu0 0.0
    %4704 = vmatpush1.msra.mxu0 0.0
    %4705 = vmatprep.subr.mxu0 0.0
    %4706 = vmatpush1.msra.mxu0 0.0
    %4707 = vmatprep.subr.mxu0 0.0
    %4708 = vmatpush1.msra.mxu0 0.0
    %4709 = vmatprep.subr.mxu0 0.0
    %4710 = vmatpush1.msra.mxu0 0.0
    %4711 = vmatprep.subr.mxu0 0.0
    %4712 = vmatpush1.msra.mxu0 0.0
    %4713 = vmatprep.subr.mxu0 0.0
    %4714 = vmatpush1.msra.mxu0 0.0
    %4715 = vmatprep.subr.mxu0 0.0
    %4716 = vmatpush1.msra.mxu0 0.0
    %4717 = vmatprep.mubr.f32.mxu0 0.0
    %v4718 = vand.u32 %v4412, 4294901760
    %v4719 = vsub.f32 %v4412, %v4718
    %v4720 = vand.u32 %v4719, 4294901760
    %4721 = vmatmul.mubr.f32.gmra.mrb[0].mxu0 %v4720
    %v4722 = vpop.f32.mrb[0].mxu0
    %v4723 = vadd.f32 %v4647, %v4722
    %v4724 = vpop.f32.mrb[0].mxu0
    %v4725 = vadd.f32 %v4649, %v4724
    %4726 = vdwg.mxu0
    %v4727 = vand.u32 %v3941, 4294901760
    %v4728 = vsub.f32 %v3941, %v4727
    %v4729 = vand.u32 %v4728, 4294901760
    %4730 = vmatprep.subr.mxu0 %v4729
    %v4731 = vand.u32 %v3940, 4294901760
    %v4732 = vsub.f32 %v3940, %v4731
    %v4733 = vand.u32 %v4732, 4294901760
    %4734 = vmatpush1.msra.mxu0 %v4733
    %4735 = vmatprep.subr.mxu0 0.0
    %4736 = vmatpush1.msra.mxu0 0.0
    %4737 = vmatprep.subr.mxu0 0.0
    %4738 = vmatpush1.msra.mxu0 0.0
    %4739 = vmatprep.subr.mxu0 0.0
    %4740 = vmatpush1.msra.mxu0 0.0
    %4741 = vmatprep.subr.mxu0 0.0
    %4742 = vmatpush1.msra.mxu0 0.0
    %4743 = vmatprep.subr.mxu0 0.0
    %4744 = vmatpush1.msra.mxu0 0.0
    %4745 = vmatprep.subr.mxu0 0.0
    %4746 = vmatpush1.msra.mxu0 0.0
    %4747 = vmatprep.subr.mxu0 0.0
    %4748 = vmatpush1.msra.mxu0 0.0
    %4749 = vmatprep.subr.mxu0 0.0
    %4750 = vmatpush1.msra.mxu0 0.0
    %4751 = vmatprep.subr.mxu0 0.0
    %4752 = vmatpush1.msra.mxu0 0.0
    %4753 = vmatprep.subr.mxu0 0.0
    %4754 = vmatpush1.msra.mxu0 0.0
    %4755 = vmatprep.subr.mxu0 0.0
    %4756 = vmatpush1.msra.mxu0 0.0
    %4757 = vmatprep.subr.mxu0 0.0
    %4758 = vmatpush1.msra.mxu0 0.0
    %4759 = vmatprep.subr.mxu0 0.0
    %4760 = vmatpush1.msra.mxu0 0.0
    %4761 = vmatprep.subr.mxu0 0.0
    %4762 = vmatpush1.msra.mxu0 0.0
    %4763 = vmatprep.subr.mxu0 0.0
    %4764 = vmatpush1.msra.mxu0 0.0
    %4765 = vmatprep.subr.mxu0 0.0
    %4766 = vmatpush1.msra.mxu0 0.0
    %4767 = vmatprep.subr.mxu0 0.0
    %4768 = vmatpush1.msra.mxu0 0.0
    %4769 = vmatprep.subr.mxu0 0.0
    %4770 = vmatpush1.msra.mxu0 0.0
    %4771 = vmatprep.subr.mxu0 0.0
    %4772 = vmatpush1.msra.mxu0 0.0
    %4773 = vmatprep.subr.mxu0 0.0
    %4774 = vmatpush1.msra.mxu0 0.0
    %4775 = vmatprep.subr.mxu0 0.0
    %4776 = vmatpush1.msra.mxu0 0.0
    %4777 = vmatprep.subr.mxu0 0.0
    %4778 = vmatpush1.msra.mxu0 0.0
    %4779 = vmatprep.subr.mxu0 0.0
    %4780 = vmatpush1.msra.mxu0 0.0
    %4781 = vmatprep.subr.mxu0 0.0
    %4782 = vmatpush1.msra.mxu0 0.0
    %4783 = vmatprep.subr.mxu0 0.0
    %4784 = vmatpush1.msra.mxu0 0.0
    %4785 = vmatprep.subr.mxu0 0.0
    %4786 = vmatpush1.msra.mxu0 0.0
    %4787 = vmatprep.subr.mxu0 0.0
    %4788 = vmatpush1.msra.mxu0 0.0
    %4789 = vmatprep.subr.mxu0 0.0
    %4790 = vmatpush1.msra.mxu0 0.0
    %4791 = vmatprep.subr.mxu0 0.0
    %4792 = vmatpush1.msra.mxu0 0.0
    %4793 = vmatprep.subr.mxu0 0.0
    %4794 = vmatpush1.msra.mxu0 0.0
    %4795 = vmatprep.subr.mxu0 0.0
    %4796 = vmatpush1.msra.mxu0 0.0
    %4797 = vmatprep.mubr.f32.mxu0 0.0
    %v4798 = vand.u32 %v4412, 4294901760
    %4799 = vmatmul.mubr.f32.gmra.mrb[0].mxu0 %v4798
    %v4800 = vpop.f32.mrb[0].mxu0
    %v4801 = vadd.f32 %v4723, %v4800
    %v4802 = vpop.f32.mrb[0].mxu0
    %v4803 = vadd.f32 %v4725, %v4802
    %4804 = vdwg.mxu0
    %v4805 = vand.u32 %v3941, 4294901760
    %4806 = vmatprep.subr.mxu0 %v4805
    %v4807 = vand.u32 %v3940, 4294901760
    %4808 = vmatpush1.msra.mxu0 %v4807
    %4809 = vmatprep.subr.mxu0 0.0
    %4810 = vmatpush1.msra.mxu0 0.0
    %4811 = vmatprep.subr.mxu0 0.0
    %4812 = vmatpush1.msra.mxu0 0.0
    %4813 = vmatprep.subr.mxu0 0.0
    %4814 = vmatpush1.msra.mxu0 0.0
    %4815 = vmatprep.subr.mxu0 0.0
    %4816 = vmatpush1.msra.mxu0 0.0
    %4817 = vmatprep.subr.mxu0 0.0
    %4818 = vmatpush1.msra.mxu0 0.0
    %4819 = vmatprep.subr.mxu0 0.0
    %4820 = vmatpush1.msra.mxu0 0.0
    %4821 = vmatprep.subr.mxu0 0.0
    %4822 = vmatpush1.msra.mxu0 0.0
    %4823 = vmatprep.subr.mxu0 0.0
    %4824 = vmatpush1.msra.mxu0 0.0
    %4825 = vmatprep.subr.mxu0 0.0
    %4826 = vmatpush1.msra.mxu0 0.0
    %4827 = vmatprep.subr.mxu0 0.0
    %4828 = vmatpush1.msra.mxu0 0.0
    %4829 = vmatprep.subr.mxu0 0.0
    %4830 = vmatpush1.msra.mxu0 0.0
    %4831 = vmatprep.subr.mxu0 0.0
    %4832 = vmatpush1.msra.mxu0 0.0
    %4833 = vmatprep.subr.mxu0 0.0
    %4834 = vmatpush1.msra.mxu0 0.0
    %4835 = vmatprep.subr.mxu0 0.0
    %4836 = vmatpush1.msra.mxu0 0.0
    %4837 = vmatprep.subr.mxu0 0.0
    %4838 = vmatpush1.msra.mxu0 0.0
    %4839 = vmatprep.subr.mxu0 0.0
    %4840 = vmatpush1.msra.mxu0 0.0
    %4841 = vmatprep.subr.mxu0 0.0
    %4842 = vmatpush1.msra.mxu0 0.0
    %4843 = vmatprep.subr.mxu0 0.0
    %4844 = vmatpush1.msra.mxu0 0.0
    %4845 = vmatprep.subr.mxu0 0.0
    %4846 = vmatpush1.msra.mxu0 0.0
    %4847 = vmatprep.subr.mxu0 0.0
    %4848 = vmatpush1.msra.mxu0 0.0
    %4849 = vmatprep.subr.mxu0 0.0
    %4850 = vmatpush1.msra.mxu0 0.0
    %4851 = vmatprep.subr.mxu0 0.0
    %4852 = vmatpush1.msra.mxu0 0.0
    %4853 = vmatprep.subr.mxu0 0.0
    %4854 = vmatpush1.msra.mxu0 0.0
    %4855 = vmatprep.subr.mxu0 0.0
    %4856 = vmatpush1.msra.mxu0 0.0
    %4857 = vmatprep.subr.mxu0 0.0
    %4858 = vmatpush1.msra.mxu0 0.0
    %4859 = vmatprep.subr.mxu0 0.0
    %4860 = vmatpush1.msra.mxu0 0.0
    %4861 = vmatprep.subr.mxu0 0.0
    %4862 = vmatpush1.msra.mxu0 0.0
    %4863 = vmatprep.subr.mxu0 0.0
    %4864 = vmatpush1.msra.mxu0 0.0
    %4865 = vmatprep.subr.mxu0 0.0
    %4866 = vmatpush1.msra.mxu0 0.0
    %4867 = vmatprep.subr.mxu0 0.0
    %4868 = vmatpush1.msra.mxu0 0.0
    %4869 = vmatprep.subr.mxu0 0.0
    %4870 = vmatpush1.msra.mxu0 0.0
    %4871 = vmatprep.mubr.f32.mxu0 0.0
    %v4872 = vand.u32 %v4412, 4294901760
    %4873 = vmatmul.mubr.f32.gmra.mrb[0].mxu0 %v4872
    %v4874 = vpop.f32.mrb[0].mxu0
    %v4875 = vadd.f32 %v4801, %v4874
    %v4876 = vpop.f32.mrb[0].mxu0
    %v4877 = vadd.f32 %v4803, %v4876
    %4878 = vdwg.mxu0
    %4879 = vset.pattern.permute.xlu0 16
    %4880 = vperm.xlu0 %4879, %v27
    %v4881 = vpop.permute.xlu0 %4880
    %v4883 = vadd.f32 %v4875, %v4881
    %v4884 = vadd.f32 %v4877, %v4881
    %v4885 = vsub.f32 0.0, %v4883
    %v4886 = vsub.f32 0.0, %v4884
    %v4887 = vmul.f32 %v4885, 1.442695
    %v4888 = vpow.pop %v4887
    %v4889 = vmul.f32 %v4886, 1.442695
    %v4890 = vpow.pop %v4889
    %v4891 = vadd.f32 %v4888, 1.0
    %v4892 = vadd.f32 %v4890, 1.0
    %v4893 = vrcp.pop %v4891
    %v4894 = vmul.f32 1.0, %v4893
    %v4895 = vrcp.pop %v4892
    %v4896 = vmul.f32 1.0, %v4895
    %v4897 = vld [vmem:[%s2] sm:$0x3]
    %v4900 = vcombine.low %v4894, %v4896
    %v4902 = vunpack.c.l.s4 1966171168
    %v4903 = vunpack.c.0.s8 %v4902
    %v4904 = vlaneseq
    %v4905 = vshrl.u32 %v4904, 7
    %v4906 = vsub.s32 %v4903, %v4905
    %v4907 = vrot.slane %v4900, %v4906
    %v4909 = vunpack.c.l.s4 1966171168
    %v4910 = vunpack.c.0.s8 %v4909
    %v4911 = vlaneseq
    %v4912 = vshrl.u32 %v4911, 7
    %v4913 = vsub.s32 %v4910, %v4912
    %v4914 = vrot.slane %v4907, %v4913
    %v4916 = vsub.f32 %v4897, %v4914
    %4918 = vset.pattern.permute.xlu0 1
    %4919 = vperm.xlu0 %4918, %v28
    %v4920 = vpop.permute.xlu0 %4919
    %v4923 = vlaneseq
    %v4924 = vshrl.u32 %v4923, 7
    %v4925 = vsub.s32 0, %v4924
    %v4926 = vrot.slane %v4916, %v4925
    %v4927 = vlaneseq
    %v4928 = vshrl.u32 %v4927, 7
    %v4929 = vsub.s32 1, %v4928
    %v4930 = vrot.slane %v4916, %v4929
    %vm4931 = vcmask 7168
    %v4932 = vsel %vm4931, %v28, 0
    %vm4934 = vcmask 1040384
    %v4935 = vsel %vm4934, %v4926, 0
    %v4937 = vsel %vm4934, %v4930, 0
    %v4939 = vand.u32 %v4937, 4294901760
    %4940 = vmatprep.subr.mxu0 %v4939
    %v4941 = vand.u32 %v4935, 4294901760
    %4942 = vmatpush1.msra.mxu0 %v4941
    %4943 = vmatprep.subr.mxu0 0.0
    %4944 = vmatpush1.msra.mxu0 0.0
    %4945 = vmatprep.subr.mxu0 0.0
    %4946 = vmatpush1.msra.mxu0 0.0
    %4947 = vmatprep.subr.mxu0 0.0
    %4948 = vmatpush1.msra.mxu0 0.0
    %4949 = vmatprep.subr.mxu0 0.0
    %4950 = vmatpush1.msra.mxu0 0.0
    %4951 = vmatprep.subr.mxu0 0.0
    %4952 = vmatpush1.msra.mxu0 0.0
    %4953 = vmatprep.subr.mxu0 0.0
    %4954 = vmatpush1.msra.mxu0 0.0
    %4955 = vmatprep.subr.mxu0 0.0
    %4956 = vmatpush1.msra.mxu0 0.0
    %4957 = vmatprep.subr.mxu0 0.0
    %4958 = vmatpush1.msra.mxu0 0.0
    %4959 = vmatprep.subr.mxu0 0.0
    %4960 = vmatpush1.msra.mxu0 0.0
    %4961 = vmatprep.subr.mxu0 0.0
    %4962 = vmatpush1.msra.mxu0 0.0
    %4963 = vmatprep.subr.mxu0 0.0
    %4964 = vmatpush1.msra.mxu0 0.0
    %4965 = vmatprep.subr.mxu0 0.0
    %4966 = vmatpush1.msra.mxu0 0.0
    %4967 = vmatprep.subr.mxu0 0.0
    %4968 = vmatpush1.msra.mxu0 0.0
    %4969 = vmatprep.subr.mxu0 0.0
    %4970 = vmatpush1.msra.mxu0 0.0
    %4971 = vmatprep.subr.mxu0 0.0
    %4972 = vmatpush1.msra.mxu0 0.0
    %4973 = vmatprep.subr.mxu0 0.0
    %4974 = vmatpush1.msra.mxu0 0.0
    %4975 = vmatprep.subr.mxu0 0.0
    %4976 = vmatpush1.msra.mxu0 0.0
    %4977 = vmatprep.subr.mxu0 0.0
    %4978 = vmatpush1.msra.mxu0 0.0
    %4979 = vmatprep.subr.mxu0 0.0
    %4980 = vmatpush1.msra.mxu0 0.0
    %4981 = vmatprep.subr.mxu0 0.0
    %4982 = vmatpush1.msra.mxu0 0.0
    %4983 = vmatprep.subr.mxu0 0.0
    %4984 = vmatpush1.msra.mxu0 0.0
    %4985 = vmatprep.subr.mxu0 0.0
    %4986 = vmatpush1.msra.mxu0 0.0
    %4987 = vmatprep.subr.mxu0 0.0
    %4988 = vmatpush1.msra.mxu0 0.0
    %4989 = vmatprep.subr.mxu0 0.0
    %4990 = vmatpush1.msra.mxu0 0.0
    %4991 = vmatprep.subr.mxu0 0.0
    %4992 = vmatpush1.msra.mxu0 0.0
    %4993 = vmatprep.subr.mxu0 0.0
    %4994 = vmatpush1.msra.mxu0 0.0
    %4995 = vmatprep.subr.mxu0 0.0
    %4996 = vmatpush1.msra.mxu0 0.0
    %4997 = vmatprep.subr.mxu0 0.0
    %4998 = vmatpush1.msra.mxu0 0.0
    %4999 = vmatprep.subr.mxu0 0.0
    %5000 = vmatpush1.msra.mxu0 0.0
    %5001 = vmatprep.subr.mxu0 0.0
    %5002 = vmatpush1.msra.mxu0 0.0
    %5003 = vmatprep.subr.mxu0 0.0
    %5004 = vmatpush1.msra.mxu0 0.0
    %5005 = vmatprep.mubr.f32.mxu0 0.0
    %v5006 = vand.u32 %v4932, 4294901760
    %v5007 = vsub.f32 %v4932, %v5006
    %v5008 = vand.u32 %v5007, 4294901760
    %v5009 = vsub.f32 %v5007, %v5008
    %v5010 = vand.u32 %v5009, 4294901760
    %5011 = vmatmul.mubr.f32.gmra.mrb[0].mxu0 %v5010
    %v5012 = vpop.f32.mrb[0].mxu0
    %v5013 = vadd.f32 %v4920, %v5012
    %v5014 = vpop.f32.mrb[0].mxu0
    %v5015 = vadd.f32 %v4920, %v5014
    %5016 = vdwg.mxu0
    %v5017 = vand.u32 %v4937, 4294901760
    %v5018 = vsub.f32 %v4937, %v5017
    %v5019 = vand.u32 %v5018, 4294901760
    %v5020 = vsub.f32 %v5018, %v5019
    %v5021 = vand.u32 %v5020, 4294901760
    %5022 = vmatprep.subr.mxu0 %v5021
    %v5023 = vand.u32 %v4935, 4294901760
    %v5024 = vsub.f32 %v4935, %v5023
    %v5025 = vand.u32 %v5024, 4294901760
    %v5026 = vsub.f32 %v5024, %v5025
    %v5027 = vand.u32 %v5026, 4294901760
    %5028 = vmatpush1.msra.mxu0 %v5027
    %5029 = vmatprep.subr.mxu0 0.0
    %5030 = vmatpush1.msra.mxu0 0.0
    %5031 = vmatprep.subr.mxu0 0.0
    %5032 = vmatpush1.msra.mxu0 0.0
    %5033 = vmatprep.subr.mxu0 0.0
    %5034 = vmatpush1.msra.mxu0 0.0
    %5035 = vmatprep.subr.mxu0 0.0
    %5036 = vmatpush1.msra.mxu0 0.0
    %5037 = vmatprep.subr.mxu0 0.0
    %5038 = vmatpush1.msra.mxu0 0.0
    %5039 = vmatprep.subr.mxu0 0.0
    %5040 = vmatpush1.msra.mxu0 0.0
    %5041 = vmatprep.subr.mxu0 0.0
    %5042 = vmatpush1.msra.mxu0 0.0
    %5043 = vmatprep.subr.mxu0 0.0
    %5044 = vmatpush1.msra.mxu0 0.0
    %5045 = vmatprep.subr.mxu0 0.0
    %5046 = vmatpush1.msra.mxu0 0.0
    %5047 = vmatprep.subr.mxu0 0.0
    %5048 = vmatpush1.msra.mxu0 0.0
    %5049 = vmatprep.subr.mxu0 0.0
    %5050 = vmatpush1.msra.mxu0 0.0
    %5051 = vmatprep.subr.mxu0 0.0
    %5052 = vmatpush1.msra.mxu0 0.0
    %5053 = vmatprep.subr.mxu0 0.0
    %5054 = vmatpush1.msra.mxu0 0.0
    %5055 = vmatprep.subr.mxu0 0.0
    %5056 = vmatpush1.msra.mxu0 0.0
    %5057 = vmatprep.subr.mxu0 0.0
    %5058 = vmatpush1.msra.mxu0 0.0
    %5059 = vmatprep.subr.mxu0 0.0
    %5060 = vmatpush1.msra.mxu0 0.0
    %5061 = vmatprep.subr.mxu0 0.0
    %5062 = vmatpush1.msra.mxu0 0.0
    %5063 = vmatprep.subr.mxu0 0.0
    %5064 = vmatpush1.msra.mxu0 0.0
    %5065 = vmatprep.subr.mxu0 0.0
    %5066 = vmatpush1.msra.mxu0 0.0
    %5067 = vmatprep.subr.mxu0 0.0
    %5068 = vmatpush1.msra.mxu0 0.0
    %5069 = vmatprep.subr.mxu0 0.0
    %5070 = vmatpush1.msra.mxu0 0.0
    %5071 = vmatprep.subr.mxu0 0.0
    %5072 = vmatpush1.msra.mxu0 0.0
    %5073 = vmatprep.subr.mxu0 0.0
    %5074 = vmatpush1.msra.mxu0 0.0
    %5075 = vmatprep.subr.mxu0 0.0
    %5076 = vmatpush1.msra.mxu0 0.0
    %5077 = vmatprep.subr.mxu0 0.0
    %5078 = vmatpush1.msra.mxu0 0.0
    %5079 = vmatprep.subr.mxu0 0.0
    %5080 = vmatpush1.msra.mxu0 0.0
    %5081 = vmatprep.subr.mxu0 0.0
    %5082 = vmatpush1.msra.mxu0 0.0
    %5083 = vmatprep.subr.mxu0 0.0
    %5084 = vmatpush1.msra.mxu0 0.0
    %5085 = vmatprep.subr.mxu0 0.0
    %5086 = vmatpush1.msra.mxu0 0.0
    %5087 = vmatprep.subr.mxu0 0.0
    %5088 = vmatpush1.msra.mxu0 0.0
    %5089 = vmatprep.subr.mxu0 0.0
    %5090 = vmatpush1.msra.mxu0 0.0
    %5091 = vmatprep.mubr.f32.mxu0 0.0
    %v5092 = vand.u32 %v4932, 4294901760
    %5093 = vmatmul.mubr.f32.gmra.mrb[0].mxu0 %v5092
    %v5094 = vpop.f32.mrb[0].mxu0
    %v5095 = vadd.f32 %v5013, %v5094
    %v5096 = vpop.f32.mrb[0].mxu0
    %v5097 = vadd.f32 %v5015, %v5096
    %5098 = vdwg.mxu0
    %v5099 = vand.u32 %v4937, 4294901760
    %v5100 = vsub.f32 %v4937, %v5099
    %5101 = vmatprep.subr.mxu0 %v5100
    %v5102 = vand.u32 %v4935, 4294901760
    %v5103 = vsub.f32 %v4935, %v5102
    %5104 = vmatpush1.msra.mxu0 %v5103
    %5105 = vmatprep.subr.mxu0 0.0
    %5106 = vmatpush1.msra.mxu0 0.0
    %5107 = vmatprep.subr.mxu0 0.0
    %5108 = vmatpush1.msra.mxu0 0.0
    %5109 = vmatprep.subr.mxu0 0.0
    %5110 = vmatpush1.msra.mxu0 0.0
    %5111 = vmatprep.subr.mxu0 0.0
    %5112 = vmatpush1.msra.mxu0 0.0
    %5113 = vmatprep.subr.mxu0 0.0
    %5114 = vmatpush1.msra.mxu0 0.0
    %5115 = vmatprep.subr.mxu0 0.0
    %5116 = vmatpush1.msra.mxu0 0.0
    %5117 = vmatprep.subr.mxu0 0.0
    %5118 = vmatpush1.msra.mxu0 0.0
    %5119 = vmatprep.subr.mxu0 0.0
    %5120 = vmatpush1.msra.mxu0 0.0
    %5121 = vmatprep.subr.mxu0 0.0
    %5122 = vmatpush1.msra.mxu0 0.0
    %5123 = vmatprep.subr.mxu0 0.0
    %5124 = vmatpush1.msra.mxu0 0.0
    %5125 = vmatprep.subr.mxu0 0.0
    %5126 = vmatpush1.msra.mxu0 0.0
    %5127 = vmatprep.subr.mxu0 0.0
    %5128 = vmatpush1.msra.mxu0 0.0
    %5129 = vmatprep.subr.mxu0 0.0
    %5130 = vmatpush1.msra.mxu0 0.0
    %5131 = vmatprep.subr.mxu0 0.0
    %5132 = vmatpush1.msra.mxu0 0.0
    %5133 = vmatprep.subr.mxu0 0.0
    %5134 = vmatpush1.msra.mxu0 0.0
    %5135 = vmatprep.subr.mxu0 0.0
    %5136 = vmatpush1.msra.mxu0 0.0
    %5137 = vmatprep.subr.mxu0 0.0
    %5138 = vmatpush1.msra.mxu0 0.0
    %5139 = vmatprep.subr.mxu0 0.0
    %5140 = vmatpush1.msra.mxu0 0.0
    %5141 = vmatprep.subr.mxu0 0.0
    %5142 = vmatpush1.msra.mxu0 0.0
    %5143 = vmatprep.subr.mxu0 0.0
    %5144 = vmatpush1.msra.mxu0 0.0
    %5145 = vmatprep.subr.mxu0 0.0
    %5146 = vmatpush1.msra.mxu0 0.0
    %5147 = vmatprep.subr.mxu0 0.0
    %5148 = vmatpush1.msra.mxu0 0.0
    %5149 = vmatprep.subr.mxu0 0.0
    %5150 = vmatpush1.msra.mxu0 0.0
    %5151 = vmatprep.subr.mxu0 0.0
    %5152 = vmatpush1.msra.mxu0 0.0
    %5153 = vmatprep.subr.mxu0 0.0
    %5154 = vmatpush1.msra.mxu0 0.0
    %5155 = vmatprep.subr.mxu0 0.0
    %5156 = vmatpush1.msra.mxu0 0.0
    %5157 = vmatprep.subr.mxu0 0.0
    %5158 = vmatpush1.msra.mxu0 0.0
    %5159 = vmatprep.subr.mxu0 0.0
    %5160 = vmatpush1.msra.mxu0 0.0
    %5161 = vmatprep.subr.mxu0 0.0
    %5162 = vmatpush1.msra.mxu0 0.0
    %5163 = vmatprep.subr.mxu0 0.0
    %5164 = vmatpush1.msra.mxu0 0.0
    %5165 = vmatprep.subr.mxu0 0.0
    %5166 = vmatpush1.msra.mxu0 0.0
    %5167 = vmatprep.mubr.f32.mxu0 0.0
    %v5168 = vand.u32 %v4932, 4294901760
    %v5169 = vsub.f32 %v4932, %v5168
    %5170 = vmatmul.mubr.f32.gmra.mrb[0].mxu0 %v5169
    %v5171 = vpop.f32.mrb[0].mxu0
    %v5172 = vadd.f32 %v5095, %v5171
    %v5173 = vpop.f32.mrb[0].mxu0
    %v5174 = vadd.f32 %v5097, %v5173
    %5175 = vdwg.mxu0
    %v5176 = vand.u32 %v4937, 4294901760
    %5177 = vmatprep.subr.mxu0 %v5176
    %v5178 = vand.u32 %v4935, 4294901760
    %5179 = vmatpush1.msra.mxu0 %v5178
    %5180 = vmatprep.subr.mxu0 0.0
    %5181 = vmatpush1.msra.mxu0 0.0
    %5182 = vmatprep.subr.mxu0 0.0
    %5183 = vmatpush1.msra.mxu0 0.0
    %5184 = vmatprep.subr.mxu0 0.0
    %5185 = vmatpush1.msra.mxu0 0.0
    %5186 = vmatprep.subr.mxu0 0.0
    %5187 = vmatpush1.msra.mxu0 0.0
    %5188 = vmatprep.subr.mxu0 0.0
    %5189 = vmatpush1.msra.mxu0 0.0
    %5190 = vmatprep.subr.mxu0 0.0
    %5191 = vmatpush1.msra.mxu0 0.0
    %5192 = vmatprep.subr.mxu0 0.0
    %5193 = vmatpush1.msra.mxu0 0.0
    %5194 = vmatprep.subr.mxu0 0.0
    %5195 = vmatpush1.msra.mxu0 0.0
    %5196 = vmatprep.subr.mxu0 0.0
    %5197 = vmatpush1.msra.mxu0 0.0
    %5198 = vmatprep.subr.mxu0 0.0
    %5199 = vmatpush1.msra.mxu0 0.0
    %5200 = vmatprep.subr.mxu0 0.0
    %5201 = vmatpush1.msra.mxu0 0.0
    %5202 = vmatprep.subr.mxu0 0.0
    %5203 = vmatpush1.msra.mxu0 0.0
    %5204 = vmatprep.subr.mxu0 0.0
    %5205 = vmatpush1.msra.mxu0 0.0
    %5206 = vmatprep.subr.mxu0 0.0
    %5207 = vmatpush1.msra.mxu0 0.0
    %5208 = vmatprep.subr.mxu0 0.0
    %5209 = vmatpush1.msra.mxu0 0.0
    %5210 = vmatprep.subr.mxu0 0.0
    %5211 = vmatpush1.msra.mxu0 0.0
    %5212 = vmatprep.subr.mxu0 0.0
    %5213 = vmatpush1.msra.mxu0 0.0
    %5214 = vmatprep.subr.mxu0 0.0
    %5215 = vmatpush1.msra.mxu0 0.0
    %5216 = vmatprep.subr.mxu0 0.0
    %5217 = vmatpush1.msra.mxu0 0.0
    %5218 = vmatprep.subr.mxu0 0.0
    %5219 = vmatpush1.msra.mxu0 0.0
    %5220 = vmatprep.subr.mxu0 0.0
    %5221 = vmatpush1.msra.mxu0 0.0
    %5222 = vmatprep.subr.mxu0 0.0
    %5223 = vmatpush1.msra.mxu0 0.0
    %5224 = vmatprep.subr.mxu0 0.0
    %5225 = vmatpush1.msra.mxu0 0.0
    %5226 = vmatprep.subr.mxu0 0.0
    %5227 = vmatpush1.msra.mxu0 0.0
    %5228 = vmatprep.subr.mxu0 0.0
    %5229 = vmatpush1.msra.mxu0 0.0
    %5230 = vmatprep.subr.mxu0 0.0
    %5231 = vmatpush1.msra.mxu0 0.0
    %5232 = vmatprep.subr.mxu0 0.0
    %5233 = vmatpush1.msra.mxu0 0.0
    %5234 = vmatprep.subr.mxu0 0.0
    %5235 = vmatpush1.msra.mxu0 0.0
    %5236 = vmatprep.subr.mxu0 0.0
    %5237 = vmatpush1.msra.mxu0 0.0
    %5238 = vmatprep.subr.mxu0 0.0
    %5239 = vmatpush1.msra.mxu0 0.0
    %5240 = vmatprep.subr.mxu0 0.0
    %5241 = vmatpush1.msra.mxu0 0.0
    %5242 = vmatprep.mubr.f32.mxu0 0.0
    %v5243 = vand.u32 %v4932, 4294901760
    %v5244 = vsub.f32 %v4932, %v5243
    %v5245 = vand.u32 %v5244, 4294901760
    %5246 = vmatmul.mubr.f32.gmra.mrb[0].mxu0 %v5245
    %v5247 = vpop.f32.mrb[0].mxu0
    %v5248 = vadd.f32 %v5172, %v5247
    %v5249 = vpop.f32.mrb[0].mxu0
    %v5250 = vadd.f32 %v5174, %v5249
    %5251 = vdwg.mxu0
    %v5252 = vand.u32 %v4937, 4294901760
    %v5253 = vsub.f32 %v4937, %v5252
    %v5254 = vand.u32 %v5253, 4294901760
    %5255 = vmatprep.subr.mxu0 %v5254
    %v5256 = vand.u32 %v4935, 4294901760
    %v5257 = vsub.f32 %v4935, %v5256
    %v5258 = vand.u32 %v5257, 4294901760
    %5259 = vmatpush1.msra.mxu0 %v5258
    %5260 = vmatprep.subr.mxu0 0.0
    %5261 = vmatpush1.msra.mxu0 0.0
    %5262 = vmatprep.subr.mxu0 0.0
    %5263 = vmatpush1.msra.mxu0 0.0
    %5264 = vmatprep.subr.mxu0 0.0
    %5265 = vmatpush1.msra.mxu0 0.0
    %5266 = vmatprep.subr.mxu0 0.0
    %5267 = vmatpush1.msra.mxu0 0.0
    %5268 = vmatprep.subr.mxu0 0.0
    %5269 = vmatpush1.msra.mxu0 0.0
    %5270 = vmatprep.subr.mxu0 0.0
    %5271 = vmatpush1.msra.mxu0 0.0
    %5272 = vmatprep.subr.mxu0 0.0
    %5273 = vmatpush1.msra.mxu0 0.0
    %5274 = vmatprep.subr.mxu0 0.0
    %5275 = vmatpush1.msra.mxu0 0.0
    %5276 = vmatprep.subr.mxu0 0.0
    %5277 = vmatpush1.msra.mxu0 0.0
    %5278 = vmatprep.subr.mxu0 0.0
    %5279 = vmatpush1.msra.mxu0 0.0
    %5280 = vmatprep.subr.mxu0 0.0
    %5281 = vmatpush1.msra.mxu0 0.0
    %5282 = vmatprep.subr.mxu0 0.0
    %5283 = vmatpush1.msra.mxu0 0.0
    %5284 = vmatprep.subr.mxu0 0.0
    %5285 = vmatpush1.msra.mxu0 0.0
    %5286 = vmatprep.subr.mxu0 0.0
    %5287 = vmatpush1.msra.mxu0 0.0
    %5288 = vmatprep.subr.mxu0 0.0
    %5289 = vmatpush1.msra.mxu0 0.0
    %5290 = vmatprep.subr.mxu0 0.0
    %5291 = vmatpush1.msra.mxu0 0.0
    %5292 = vmatprep.subr.mxu0 0.0
    %5293 = vmatpush1.msra.mxu0 0.0
    %5294 = vmatprep.subr.mxu0 0.0
    %5295 = vmatpush1.msra.mxu0 0.0
    %5296 = vmatprep.subr.mxu0 0.0
    %5297 = vmatpush1.msra.mxu0 0.0
    %5298 = vmatprep.subr.mxu0 0.0
    %5299 = vmatpush1.msra.mxu0 0.0
    %5300 = vmatprep.subr.mxu0 0.0
    %5301 = vmatpush1.msra.mxu0 0.0
    %5302 = vmatprep.subr.mxu0 0.0
    %5303 = vmatpush1.msra.mxu0 0.0
    %5304 = vmatprep.subr.mxu0 0.0
    %5305 = vmatpush1.msra.mxu0 0.0
    %5306 = vmatprep.subr.mxu0 0.0
    %5307 = vmatpush1.msra.mxu0 0.0
    %5308 = vmatprep.subr.mxu0 0.0
    %5309 = vmatpush1.msra.mxu0 0.0
    %5310 = vmatprep.subr.mxu0 0.0
    %5311 = vmatpush1.msra.mxu0 0.0
    %5312 = vmatprep.subr.mxu0 0.0
    %5313 = vmatpush1.msra.mxu0 0.0
    %5314 = vmatprep.subr.mxu0 0.0
    %5315 = vmatpush1.msra.mxu0 0.0
    %5316 = vmatprep.subr.mxu0 0.0
    %5317 = vmatpush1.msra.mxu0 0.0
    %5318 = vmatprep.subr.mxu0 0.0
    %5319 = vmatpush1.msra.mxu0 0.0
    %5320 = vmatprep.subr.mxu0 0.0
    %5321 = vmatpush1.msra.mxu0 0.0
    %5322 = vmatprep.mubr.f32.mxu0 0.0
    %v5323 = vand.u32 %v4932, 4294901760
    %5324 = vmatmul.mubr.f32.gmra.mrb[0].mxu0 %v5323
    %v5325 = vpop.f32.mrb[0].mxu0
    %v5326 = vadd.f32 %v5248, %v5325
    %v5327 = vpop.f32.mrb[0].mxu0
    %v5328 = vadd.f32 %v5250, %v5327
    %5329 = vdwg.mxu0
    %v5330 = vand.u32 %v4937, 4294901760
    %5331 = vmatprep.subr.mxu0 %v5330
    %v5332 = vand.u32 %v4935, 4294901760
    %5333 = vmatpush1.msra.mxu0 %v5332
    %5334 = vmatprep.subr.mxu0 0.0
    %5335 = vmatpush1.msra.mxu0 0.0
    %5336 = vmatprep.subr.mxu0 0.0
    %5337 = vmatpush1.msra.mxu0 0.0
    %5338 = vmatprep.subr.mxu0 0.0
    %5339 = vmatpush1.msra.mxu0 0.0
    %5340 = vmatprep.subr.mxu0 0.0
    %5341 = vmatpush1.msra.mxu0 0.0
    %5342 = vmatprep.subr.mxu0 0.0
    %5343 = vmatpush1.msra.mxu0 0.0
    %5344 = vmatprep.subr.mxu0 0.0
    %5345 = vmatpush1.msra.mxu0 0.0
    %5346 = vmatprep.subr.mxu0 0.0
    %5347 = vmatpush1.msra.mxu0 0.0
    %5348 = vmatprep.subr.mxu0 0.0
    %5349 = vmatpush1.msra.mxu0 0.0
    %5350 = vmatprep.subr.mxu0 0.0
    %5351 = vmatpush1.msra.mxu0 0.0
    %5352 = vmatprep.subr.mxu0 0.0
    %5353 = vmatpush1.msra.mxu0 0.0
    %5354 = vmatprep.subr.mxu0 0.0
    %5355 = vmatpush1.msra.mxu0 0.0
    %5356 = vmatprep.subr.mxu0 0.0
    %5357 = vmatpush1.msra.mxu0 0.0
    %5358 = vmatprep.subr.mxu0 0.0
    %5359 = vmatpush1.msra.mxu0 0.0
    %5360 = vmatprep.subr.mxu0 0.0
    %5361 = vmatpush1.msra.mxu0 0.0
    %5362 = vmatprep.subr.mxu0 0.0
    %5363 = vmatpush1.msra.mxu0 0.0
    %5364 = vmatprep.subr.mxu0 0.0
    %5365 = vmatpush1.msra.mxu0 0.0
    %5366 = vmatprep.subr.mxu0 0.0
    %5367 = vmatpush1.msra.mxu0 0.0
    %5368 = vmatprep.subr.mxu0 0.0
    %5369 = vmatpush1.msra.mxu0 0.0
    %5370 = vmatprep.subr.mxu0 0.0
    %5371 = vmatpush1.msra.mxu0 0.0
    %5372 = vmatprep.subr.mxu0 0.0
    %5373 = vmatpush1.msra.mxu0 0.0
    %5374 = vmatprep.subr.mxu0 0.0
    %5375 = vmatpush1.msra.mxu0 0.0
    %5376 = vmatprep.subr.mxu0 0.0
    %5377 = vmatpush1.msra.mxu0 0.0
    %5378 = vmatprep.subr.mxu0 0.0
    %5379 = vmatpush1.msra.mxu0 0.0
    %5380 = vmatprep.subr.mxu0 0.0
    %5381 = vmatpush1.msra.mxu0 0.0
    %5382 = vmatprep.subr.mxu0 0.0
    %5383 = vmatpush1.msra.mxu0 0.0
    %5384 = vmatprep.subr.mxu0 0.0
    %5385 = vmatpush1.msra.mxu0 0.0
    %5386 = vmatprep.subr.mxu0 0.0
    %5387 = vmatpush1.msra.mxu0 0.0
    %5388 = vmatprep.subr.mxu0 0.0
    %5389 = vmatpush1.msra.mxu0 0.0
    %5390 = vmatprep.subr.mxu0 0.0
    %5391 = vmatpush1.msra.mxu0 0.0
    %5392 = vmatprep.subr.mxu0 0.0
    %5393 = vmatpush1.msra.mxu0 0.0
    %5394 = vmatprep.subr.mxu0 0.0
    %5395 = vmatpush1.msra.mxu0 0.0
    %5396 = vmatprep.mubr.f32.mxu0 0.0
    %v5397 = vand.u32 %v4932, 4294901760
    %5398 = vmatmul.mubr.f32.gmra.mrb[0].mxu0 %v5397
    %v5399 = vpop.f32.mrb[0].mxu0
    %v5400 = vadd.f32 %v5326, %v5399
    %v5401 = vpop.f32.mrb[0].mxu0
    %v5402 = vadd.f32 %v5328, %v5401
    %5403 = vdwg.mxu0
    %v5404 = vmax.f32 %v5400, 0.0
    %v5405 = vmax.f32 %v5402, 0.0
    %5407 = vset.pattern.permute.xlu0 4
    %5408 = vperm.xlu0 %5407, %v29
    %v5409 = vpop.permute.xlu0 %5408
    %vm5411 = vcmask 31744
    %v5412 = vsel %vm5411, %v29, 0
    %vm5414 = vcmask 1043456
    %v5416 = vsel %vm5414, %v5404, 0
    %v5419 = vsel %vm5414, %v5405, 0
    %v5421 = vand.u32 %v5419, 4294901760
    %5422 = vmatprep.subr.mxu0 %v5421
    %v5423 = vand.u32 %v5416, 4294901760
    %5424 = vmatpush1.msra.mxu0 %v5423
    %5425 = vmatprep.subr.mxu0 0.0
    %5426 = vmatpush1.msra.mxu0 0.0
    %5427 = vmatprep.subr.mxu0 0.0
    %5428 = vmatpush1.msra.mxu0 0.0
    %5429 = vmatprep.subr.mxu0 0.0
    %5430 = vmatpush1.msra.mxu0 0.0
    %5431 = vmatprep.subr.mxu0 0.0
    %5432 = vmatpush1.msra.mxu0 0.0
    %5433 = vmatprep.subr.mxu0 0.0
    %5434 = vmatpush1.msra.mxu0 0.0
    %5435 = vmatprep.subr.mxu0 0.0
    %5436 = vmatpush1.msra.mxu0 0.0
    %5437 = vmatprep.subr.mxu0 0.0
    %5438 = vmatpush1.msra.mxu0 0.0
    %5439 = vmatprep.subr.mxu0 0.0
    %5440 = vmatpush1.msra.mxu0 0.0
    %5441 = vmatprep.subr.mxu0 0.0
    %5442 = vmatpush1.msra.mxu0 0.0
    %5443 = vmatprep.subr.mxu0 0.0
    %5444 = vmatpush1.msra.mxu0 0.0
    %5445 = vmatprep.subr.mxu0 0.0
    %5446 = vmatpush1.msra.mxu0 0.0
    %5447 = vmatprep.subr.mxu0 0.0
    %5448 = vmatpush1.msra.mxu0 0.0
    %5449 = vmatprep.subr.mxu0 0.0
    %5450 = vmatpush1.msra.mxu0 0.0
    %5451 = vmatprep.subr.mxu0 0.0
    %5452 = vmatpush1.msra.mxu0 0.0
    %5453 = vmatprep.subr.mxu0 0.0
    %5454 = vmatpush1.msra.mxu0 0.0
    %5455 = vmatprep.subr.mxu0 0.0
    %5456 = vmatpush1.msra.mxu0 0.0
    %5457 = vmatprep.subr.mxu0 0.0
    %5458 = vmatpush1.msra.mxu0 0.0
    %5459 = vmatprep.subr.mxu0 0.0
    %5460 = vmatpush1.msra.mxu0 0.0
    %5461 = vmatprep.subr.mxu0 0.0
    %5462 = vmatpush1.msra.mxu0 0.0
    %5463 = vmatprep.subr.mxu0 0.0
    %5464 = vmatpush1.msra.mxu0 0.0
    %5465 = vmatprep.subr.mxu0 0.0
    %5466 = vmatpush1.msra.mxu0 0.0
    %5467 = vmatprep.subr.mxu0 0.0
    %5468 = vmatpush1.msra.mxu0 0.0
    %5469 = vmatprep.subr.mxu0 0.0
    %5470 = vmatpush1.msra.mxu0 0.0
    %5471 = vmatprep.subr.mxu0 0.0
    %5472 = vmatpush1.msra.mxu0 0.0
    %5473 = vmatprep.subr.mxu0 0.0
    %5474 = vmatpush1.msra.mxu0 0.0
    %5475 = vmatprep.subr.mxu0 0.0
    %5476 = vmatpush1.msra.mxu0 0.0
    %5477 = vmatprep.subr.mxu0 0.0
    %5478 = vmatpush1.msra.mxu0 0.0
    %5479 = vmatprep.subr.mxu0 0.0
    %5480 = vmatpush1.msra.mxu0 0.0
    %5481 = vmatprep.subr.mxu0 0.0
    %5482 = vmatpush1.msra.mxu0 0.0
    %5483 = vmatprep.subr.mxu0 0.0
    %5484 = vmatpush1.msra.mxu0 0.0
    %5485 = vmatprep.subr.mxu0 0.0
    %5486 = vmatpush1.msra.mxu0 0.0
    %5487 = vmatprep.mubr.f32.mxu0 0.0
    %v5488 = vand.u32 %v5412, 4294901760
    %v5489 = vsub.f32 %v5412, %v5488
    %v5490 = vand.u32 %v5489, 4294901760
    %v5491 = vsub.f32 %v5489, %v5490
    %v5492 = vand.u32 %v5491, 4294901760
    %5493 = vmatmul.mubr.f32.gmra.mrb[0].mxu0 %v5492
    %v5494 = vpop.f32.mrb[0].mxu0
    %v5495 = vadd.f32 %v5409, %v5494
    %v5496 = vpop.f32.mrb[0].mxu0
    %v5497 = vadd.f32 %v5409, %v5496
    %5498 = vdwg.mxu0
    %v5499 = vand.u32 %v5419, 4294901760
    %v5500 = vsub.f32 %v5419, %v5499
    %v5501 = vand.u32 %v5500, 4294901760
    %v5502 = vsub.f32 %v5500, %v5501
    %v5503 = vand.u32 %v5502, 4294901760
    %5504 = vmatprep.subr.mxu0 %v5503
    %v5505 = vand.u32 %v5416, 4294901760
    %v5506 = vsub.f32 %v5416, %v5505
    %v5507 = vand.u32 %v5506, 4294901760
    %v5508 = vsub.f32 %v5506, %v5507
    %v5509 = vand.u32 %v5508, 4294901760
    %5510 = vmatpush1.msra.mxu0 %v5509
    %5511 = vmatprep.subr.mxu0 0.0
    %5512 = vmatpush1.msra.mxu0 0.0
    %5513 = vmatprep.subr.mxu0 0.0
    %5514 = vmatpush1.msra.mxu0 0.0
    %5515 = vmatprep.subr.mxu0 0.0
    %5516 = vmatpush1.msra.mxu0 0.0
    %5517 = vmatprep.subr.mxu0 0.0
    %5518 = vmatpush1.msra.mxu0 0.0
    %5519 = vmatprep.subr.mxu0 0.0
    %5520 = vmatpush1.msra.mxu0 0.0
    %5521 = vmatprep.subr.mxu0 0.0
    %5522 = vmatpush1.msra.mxu0 0.0
    %5523 = vmatprep.subr.mxu0 0.0
    %5524 = vmatpush1.msra.mxu0 0.0
    %5525 = vmatprep.subr.mxu0 0.0
    %5526 = vmatpush1.msra.mxu0 0.0
    %5527 = vmatprep.subr.mxu0 0.0
    %5528 = vmatpush1.msra.mxu0 0.0
    %5529 = vmatprep.subr.mxu0 0.0
    %5530 = vmatpush1.msra.mxu0 0.0
    %5531 = vmatprep.subr.mxu0 0.0
    %5532 = vmatpush1.msra.mxu0 0.0
    %5533 = vmatprep.subr.mxu0 0.0
    %5534 = vmatpush1.msra.mxu0 0.0
    %5535 = vmatprep.subr.mxu0 0.0
    %5536 = vmatpush1.msra.mxu0 0.0
    %5537 = vmatprep.subr.mxu0 0.0
    %5538 = vmatpush1.msra.mxu0 0.0
    %5539 = vmatprep.subr.mxu0 0.0
    %5540 = vmatpush1.msra.mxu0 0.0
    %5541 = vmatprep.subr.mxu0 0.0
    %5542 = vmatpush1.msra.mxu0 0.0
    %5543 = vmatprep.subr.mxu0 0.0
    %5544 = vmatpush1.msra.mxu0 0.0
    %5545 = vmatprep.subr.mxu0 0.0
    %5546 = vmatpush1.msra.mxu0 0.0
    %5547 = vmatprep.subr.mxu0 0.0
    %5548 = vmatpush1.msra.mxu0 0.0
    %5549 = vmatprep.subr.mxu0 0.0
    %5550 = vmatpush1.msra.mxu0 0.0
    %5551 = vmatprep.subr.mxu0 0.0
    %5552 = vmatpush1.msra.mxu0 0.0
    %5553 = vmatprep.subr.mxu0 0.0
    %5554 = vmatpush1.msra.mxu0 0.0
    %5555 = vmatprep.subr.mxu0 0.0
    %5556 = vmatpush1.msra.mxu0 0.0
    %5557 = vmatprep.subr.mxu0 0.0
    %5558 = vmatpush1.msra.mxu0 0.0
    %5559 = vmatprep.subr.mxu0 0.0
    %5560 = vmatpush1.msra.mxu0 0.0
    %5561 = vmatprep.subr.mxu0 0.0
    %5562 = vmatpush1.msra.mxu0 0.0
    %5563 = vmatprep.subr.mxu0 0.0
    %5564 = vmatpush1.msra.mxu0 0.0
    %5565 = vmatprep.subr.mxu0 0.0
    %5566 = vmatpush1.msra.mxu0 0.0
    %5567 = vmatprep.subr.mxu0 0.0
    %5568 = vmatpush1.msra.mxu0 0.0
    %5569 = vmatprep.subr.mxu0 0.0
    %5570 = vmatpush1.msra.mxu0 0.0
    %5571 = vmatprep.subr.mxu0 0.0
    %5572 = vmatpush1.msra.mxu0 0.0
    %5573 = vmatprep.mubr.f32.mxu0 0.0
    %v5574 = vand.u32 %v5412, 4294901760
    %5575 = vmatmul.mubr.f32.gmra.mrb[0].mxu0 %v5574
    %v5576 = vpop.f32.mrb[0].mxu0
    %v5577 = vadd.f32 %v5495, %v5576
    %v5578 = vpop.f32.mrb[0].mxu0
    %v5579 = vadd.f32 %v5497, %v5578
    %5580 = vdwg.mxu0
    %v5581 = vand.u32 %v5419, 4294901760
    %v5582 = vsub.f32 %v5419, %v5581
    %5583 = vmatprep.subr.mxu0 %v5582
    %v5584 = vand.u32 %v5416, 4294901760
    %v5585 = vsub.f32 %v5416, %v5584
    %5586 = vmatpush1.msra.mxu0 %v5585
    %5587 = vmatprep.subr.mxu0 0.0
    %5588 = vmatpush1.msra.mxu0 0.0
    %5589 = vmatprep.subr.mxu0 0.0
    %5590 = vmatpush1.msra.mxu0 0.0
    %5591 = vmatprep.subr.mxu0 0.0
    %5592 = vmatpush1.msra.mxu0 0.0
    %5593 = vmatprep.subr.mxu0 0.0
    %5594 = vmatpush1.msra.mxu0 0.0
    %5595 = vmatprep.subr.mxu0 0.0
    %5596 = vmatpush1.msra.mxu0 0.0
    %5597 = vmatprep.subr.mxu0 0.0
    %5598 = vmatpush1.msra.mxu0 0.0
    %5599 = vmatprep.subr.mxu0 0.0
    %5600 = vmatpush1.msra.mxu0 0.0
    %5601 = vmatprep.subr.mxu0 0.0
    %5602 = vmatpush1.msra.mxu0 0.0
    %5603 = vmatprep.subr.mxu0 0.0
    %5604 = vmatpush1.msra.mxu0 0.0
    %5605 = vmatprep.subr.mxu0 0.0
    %5606 = vmatpush1.msra.mxu0 0.0
    %5607 = vmatprep.subr.mxu0 0.0
    %5608 = vmatpush1.msra.mxu0 0.0
    %5609 = vmatprep.subr.mxu0 0.0
    %5610 = vmatpush1.msra.mxu0 0.0
    %5611 = vmatprep.subr.mxu0 0.0
    %5612 = vmatpush1.msra.mxu0 0.0
    %5613 = vmatprep.subr.mxu0 0.0
    %5614 = vmatpush1.msra.mxu0 0.0
    %5615 = vmatprep.subr.mxu0 0.0
    %5616 = vmatpush1.msra.mxu0 0.0
    %5617 = vmatprep.subr.mxu0 0.0
    %5618 = vmatpush1.msra.mxu0 0.0
    %5619 = vmatprep.subr.mxu0 0.0
    %5620 = vmatpush1.msra.mxu0 0.0
    %5621 = vmatprep.subr.mxu0 0.0
    %5622 = vmatpush1.msra.mxu0 0.0
    %5623 = vmatprep.subr.mxu0 0.0
    %5624 = vmatpush1.msra.mxu0 0.0
    %5625 = vmatprep.subr.mxu0 0.0
    %5626 = vmatpush1.msra.mxu0 0.0
    %5627 = vmatprep.subr.mxu0 0.0
    %5628 = vmatpush1.msra.mxu0 0.0
    %5629 = vmatprep.subr.mxu0 0.0
    %5630 = vmatpush1.msra.mxu0 0.0
    %5631 = vmatprep.subr.mxu0 0.0
    %5632 = vmatpush1.msra.mxu0 0.0
    %5633 = vmatprep.subr.mxu0 0.0
    %5634 = vmatpush1.msra.mxu0 0.0
    %5635 = vmatprep.subr.mxu0 0.0
    %5636 = vmatpush1.msra.mxu0 0.0
    %5637 = vmatprep.subr.mxu0 0.0
    %5638 = vmatpush1.msra.mxu0 0.0
    %5639 = vmatprep.subr.mxu0 0.0
    %5640 = vmatpush1.msra.mxu0 0.0
    %5641 = vmatprep.subr.mxu0 0.0
    %5642 = vmatpush1.msra.mxu0 0.0
    %5643 = vmatprep.subr.mxu0 0.0
    %5644 = vmatpush1.msra.mxu0 0.0
    %5645 = vmatprep.subr.mxu0 0.0
    %5646 = vmatpush1.msra.mxu0 0.0
    %5647 = vmatprep.subr.mxu0 0.0
    %5648 = vmatpush1.msra.mxu0 0.0
    %5649 = vmatprep.mubr.f32.mxu0 0.0
    %v5650 = vand.u32 %v5412, 4294901760
    %v5651 = vsub.f32 %v5412, %v5650
    %5652 = vmatmul.mubr.f32.gmra.mrb[0].mxu0 %v5651
    %v5653 = vpop.f32.mrb[0].mxu0
    %v5654 = vadd.f32 %v5577, %v5653
    %v5655 = vpop.f32.mrb[0].mxu0
    %v5656 = vadd.f32 %v5579, %v5655
    %5657 = vdwg.mxu0
    %v5658 = vand.u32 %v5419, 4294901760
    %5659 = vmatprep.subr.mxu0 %v5658
    %v5660 = vand.u32 %v5416, 4294901760
    %5661 = vmatpush1.msra.mxu0 %v5660
    %5662 = vmatprep.subr.mxu0 0.0
    %5663 = vmatpush1.msra.mxu0 0.0
    %5664 = vmatprep.subr.mxu0 0.0
    %5665 = vmatpush1.msra.mxu0 0.0
    %5666 = vmatprep.subr.mxu0 0.0
    %5667 = vmatpush1.msra.mxu0 0.0
    %5668 = vmatprep.subr.mxu0 0.0
    %5669 = vmatpush1.msra.mxu0 0.0
    %5670 = vmatprep.subr.mxu0 0.0
    %5671 = vmatpush1.msra.mxu0 0.0
    %5672 = vmatprep.subr.mxu0 0.0
    %5673 = vmatpush1.msra.mxu0 0.0
    %5674 = vmatprep.subr.mxu0 0.0
    %5675 = vmatpush1.msra.mxu0 0.0
    %5676 = vmatprep.subr.mxu0 0.0
    %5677 = vmatpush1.msra.mxu0 0.0
    %5678 = vmatprep.subr.mxu0 0.0
    %5679 = vmatpush1.msra.mxu0 0.0
    %5680 = vmatprep.subr.mxu0 0.0
    %5681 = vmatpush1.msra.mxu0 0.0
    %5682 = vmatprep.subr.mxu0 0.0
    %5683 = vmatpush1.msra.mxu0 0.0
    %5684 = vmatprep.subr.mxu0 0.0
    %5685 = vmatpush1.msra.mxu0 0.0
    %5686 = vmatprep.subr.mxu0 0.0
    %5687 = vmatpush1.msra.mxu0 0.0
    %5688 = vmatprep.subr.mxu0 0.0
    %5689 = vmatpush1.msra.mxu0 0.0
    %5690 = vmatprep.subr.mxu0 0.0
    %5691 = vmatpush1.msra.mxu0 0.0
    %5692 = vmatprep.subr.mxu0 0.0
    %5693 = vmatpush1.msra.mxu0 0.0
    %5694 = vmatprep.subr.mxu0 0.0
    %5695 = vmatpush1.msra.mxu0 0.0
    %5696 = vmatprep.subr.mxu0 0.0
    %5697 = vmatpush1.msra.mxu0 0.0
    %5698 = vmatprep.subr.mxu0 0.0
    %5699 = vmatpush1.msra.mxu0 0.0
    %5700 = vmatprep.subr.mxu0 0.0
    %5701 = vmatpush1.msra.mxu0 0.0
    %5702 = vmatprep.subr.mxu0 0.0
    %5703 = vmatpush1.msra.mxu0 0.0
    %5704 = vmatprep.subr.mxu0 0.0
    %5705 = vmatpush1.msra.mxu0 0.0
    %5706 = vmatprep.subr.mxu0 0.0
    %5707 = vmatpush1.msra.mxu0 0.0
    %5708 = vmatprep.subr.mxu0 0.0
    %5709 = vmatpush1.msra.mxu0 0.0
    %5710 = vmatprep.subr.mxu0 0.0
    %5711 = vmatpush1.msra.mxu0 0.0
    %5712 = vmatprep.subr.mxu0 0.0
    %5713 = vmatpush1.msra.mxu0 0.0
    %5714 = vmatprep.subr.mxu0 0.0
    %5715 = vmatpush1.msra.mxu0 0.0
    %5716 = vmatprep.subr.mxu0 0.0
    %5717 = vmatpush1.msra.mxu0 0.0
    %5718 = vmatprep.subr.mxu0 0.0
    %5719 = vmatpush1.msra.mxu0 0.0
    %5720 = vmatprep.subr.mxu0 0.0
    %5721 = vmatpush1.msra.mxu0 0.0
    %5722 = vmatprep.subr.mxu0 0.0
    %5723 = vmatpush1.msra.mxu0 0.0
    %5724 = vmatprep.mubr.f32.mxu0 0.0
    %v5725 = vand.u32 %v5412, 4294901760
    %v5726 = vsub.f32 %v5412, %v5725
    %v5727 = vand.u32 %v5726, 4294901760
    %5728 = vmatmul.mubr.f32.gmra.mrb[0].mxu0 %v5727
    %v5729 = vpop.f32.mrb[0].mxu0
    %v5730 = vadd.f32 %v5654, %v5729
    %v5731 = vpop.f32.mrb[0].mxu0
    %v5732 = vadd.f32 %v5656, %v5731
    %5733 = vdwg.mxu0
    %v5734 = vand.u32 %v5419, 4294901760
    %v5735 = vsub.f32 %v5419, %v5734
    %v5736 = vand.u32 %v5735, 4294901760
    %5737 = vmatprep.subr.mxu0 %v5736
    %v5738 = vand.u32 %v5416, 4294901760
    %v5739 = vsub.f32 %v5416, %v5738
    %v5740 = vand.u32 %v5739, 4294901760
    %5741 = vmatpush1.msra.mxu0 %v5740
    %5742 = vmatprep.subr.mxu0 0.0
    %5743 = vmatpush1.msra.mxu0 0.0
    %5744 = vmatprep.subr.mxu0 0.0
    %5745 = vmatpush1.msra.mxu0 0.0
    %5746 = vmatprep.subr.mxu0 0.0
    %5747 = vmatpush1.msra.mxu0 0.0
    %5748 = vmatprep.subr.mxu0 0.0
    %5749 = vmatpush1.msra.mxu0 0.0
    %5750 = vmatprep.subr.mxu0 0.0
    %5751 = vmatpush1.msra.mxu0 0.0
    %5752 = vmatprep.subr.mxu0 0.0
    %5753 = vmatpush1.msra.mxu0 0.0
    %5754 = vmatprep.subr.mxu0 0.0
    %5755 = vmatpush1.msra.mxu0 0.0
    %5756 = vmatprep.subr.mxu0 0.0
    %5757 = vmatpush1.msra.mxu0 0.0
    %5758 = vmatprep.subr.mxu0 0.0
    %5759 = vmatpush1.msra.mxu0 0.0
    %5760 = vmatprep.subr.mxu0 0.0
    %5761 = vmatpush1.msra.mxu0 0.0
    %5762 = vmatprep.subr.mxu0 0.0
    %5763 = vmatpush1.msra.mxu0 0.0
    %5764 = vmatprep.subr.mxu0 0.0
    %5765 = vmatpush1.msra.mxu0 0.0
    %5766 = vmatprep.subr.mxu0 0.0
    %5767 = vmatpush1.msra.mxu0 0.0
    %5768 = vmatprep.subr.mxu0 0.0
    %5769 = vmatpush1.msra.mxu0 0.0
    %5770 = vmatprep.subr.mxu0 0.0
    %5771 = vmatpush1.msra.mxu0 0.0
    %5772 = vmatprep.subr.mxu0 0.0
    %5773 = vmatpush1.msra.mxu0 0.0
    %5774 = vmatprep.subr.mxu0 0.0
    %5775 = vmatpush1.msra.mxu0 0.0
    %5776 = vmatprep.subr.mxu0 0.0
    %5777 = vmatpush1.msra.mxu0 0.0
    %5778 = vmatprep.subr.mxu0 0.0
    %5779 = vmatpush1.msra.mxu0 0.0
    %5780 = vmatprep.subr.mxu0 0.0
    %5781 = vmatpush1.msra.mxu0 0.0
    %5782 = vmatprep.subr.mxu0 0.0
    %5783 = vmatpush1.msra.mxu0 0.0
    %5784 = vmatprep.subr.mxu0 0.0
    %5785 = vmatpush1.msra.mxu0 0.0
    %5786 = vmatprep.subr.mxu0 0.0
    %5787 = vmatpush1.msra.mxu0 0.0
    %5788 = vmatprep.subr.mxu0 0.0
    %5789 = vmatpush1.msra.mxu0 0.0
    %5790 = vmatprep.subr.mxu0 0.0
    %5791 = vmatpush1.msra.mxu0 0.0
    %5792 = vmatprep.subr.mxu0 0.0
    %5793 = vmatpush1.msra.mxu0 0.0
    %5794 = vmatprep.subr.mxu0 0.0
    %5795 = vmatpush1.msra.mxu0 0.0
    %5796 = vmatprep.subr.mxu0 0.0
    %5797 = vmatpush1.msra.mxu0 0.0
    %5798 = vmatprep.subr.mxu0 0.0
    %5799 = vmatpush1.msra.mxu0 0.0
    %5800 = vmatprep.subr.mxu0 0.0
    %5801 = vmatpush1.msra.mxu0 0.0
    %5802 = vmatprep.subr.mxu0 0.0
    %5803 = vmatpush1.msra.mxu0 0.0
    %5804 = vmatprep.mubr.f32.mxu0 0.0
    %v5805 = vand.u32 %v5412, 4294901760
    %5806 = vmatmul.mubr.f32.gmra.mrb[0].mxu0 %v5805
    %v5807 = vpop.f32.mrb[0].mxu0
    %v5808 = vadd.f32 %v5730, %v5807
    %v5809 = vpop.f32.mrb[0].mxu0
    %v5810 = vadd.f32 %v5732, %v5809
    %5811 = vdwg.mxu0
    %v5812 = vand.u32 %v5419, 4294901760
    %5813 = vmatprep.subr.mxu0 %v5812
    %v5814 = vand.u32 %v5416, 4294901760
    %5815 = vmatpush1.msra.mxu0 %v5814
    %5816 = vmatprep.subr.mxu0 0.0
    %5817 = vmatpush1.msra.mxu0 0.0
    %5818 = vmatprep.subr.mxu0 0.0
    %5819 = vmatpush1.msra.mxu0 0.0
    %5820 = vmatprep.subr.mxu0 0.0
    %5821 = vmatpush1.msra.mxu0 0.0
    %5822 = vmatprep.subr.mxu0 0.0
    %5823 = vmatpush1.msra.mxu0 0.0
    %5824 = vmatprep.subr.mxu0 0.0
    %5825 = vmatpush1.msra.mxu0 0.0
    %5826 = vmatprep.subr.mxu0 0.0
    %5827 = vmatpush1.msra.mxu0 0.0
    %5828 = vmatprep.subr.mxu0 0.0
    %5829 = vmatpush1.msra.mxu0 0.0
    %5830 = vmatprep.subr.mxu0 0.0
    %5831 = vmatpush1.msra.mxu0 0.0
    %5832 = vmatprep.subr.mxu0 0.0
    %5833 = vmatpush1.msra.mxu0 0.0
    %5834 = vmatprep.subr.mxu0 0.0
    %5835 = vmatpush1.msra.mxu0 0.0
    %5836 = vmatprep.subr.mxu0 0.0
    %5837 = vmatpush1.msra.mxu0 0.0
    %5838 = vmatprep.subr.mxu0 0.0
    %5839 = vmatpush1.msra.mxu0 0.0
    %5840 = vmatprep.subr.mxu0 0.0
    %5841 = vmatpush1.msra.mxu0 0.0
    %5842 = vmatprep.subr.mxu0 0.0
    %5843 = vmatpush1.msra.mxu0 0.0
    %5844 = vmatprep.subr.mxu0 0.0
    %5845 = vmatpush1.msra.mxu0 0.0
    %5846 = vmatprep.subr.mxu0 0.0
    %5847 = vmatpush1.msra.mxu0 0.0
    %5848 = vmatprep.subr.mxu0 0.0
    %5849 = vmatpush1.msra.mxu0 0.0
    %5850 = vmatprep.subr.mxu0 0.0
    %5851 = vmatpush1.msra.mxu0 0.0
    %5852 = vmatprep.subr.mxu0 0.0
    %5853 = vmatpush1.msra.mxu0 0.0
    %5854 = vmatprep.subr.mxu0 0.0
    %5855 = vmatpush1.msra.mxu0 0.0
    %5856 = vmatprep.subr.mxu0 0.0
    %5857 = vmatpush1.msra.mxu0 0.0
    %5858 = vmatprep.subr.mxu0 0.0
    %5859 = vmatpush1.msra.mxu0 0.0
    %5860 = vmatprep.subr.mxu0 0.0
    %5861 = vmatpush1.msra.mxu0 0.0
    %5862 = vmatprep.subr.mxu0 0.0
    %5863 = vmatpush1.msra.mxu0 0.0
    %5864 = vmatprep.subr.mxu0 0.0
    %5865 = vmatpush1.msra.mxu0 0.0
    %5866 = vmatprep.subr.mxu0 0.0
    %5867 = vmatpush1.msra.mxu0 0.0
    %5868 = vmatprep.subr.mxu0 0.0
    %5869 = vmatpush1.msra.mxu0 0.0
    %5870 = vmatprep.subr.mxu0 0.0
    %5871 = vmatpush1.msra.mxu0 0.0
    %5872 = vmatprep.subr.mxu0 0.0
    %5873 = vmatpush1.msra.mxu0 0.0
    %5874 = vmatprep.subr.mxu0 0.0
    %5875 = vmatpush1.msra.mxu0 0.0
    %5876 = vmatprep.subr.mxu0 0.0
    %5877 = vmatpush1.msra.mxu0 0.0
    %5878 = vmatprep.mubr.f32.mxu0 0.0
    %v5879 = vand.u32 %v5412, 4294901760
    %5880 = vmatmul.mubr.f32.gmra.mrb[0].mxu0 %v5879
    %v5881 = vpop.f32.mrb[0].mxu0
    %v5882 = vadd.f32 %v5808, %v5881
    %v5883 = vpop.f32.mrb[0].mxu0
    %v5884 = vadd.f32 %v5810, %v5883
    %5885 = vdwg.mxu0
    %v5886 = vmax.f32 %v5882, 0.0
    %v5887 = vmax.f32 %v5884, 0.0
    %v5890 = vrot.slane %v5886, 7
    %v5891 = vrot.slane %v5887, 7
    %v5894 = vsel %vm4934, %v4894, %v5890
    %v5895 = vsel %vm4934, %v4896, %v5891
    %vm5896 = vcmask 1044480
    %v5897 = vsel %vm5896, %v5894, 0.0
    %v5898 = vsel %vm5896, %v5895, 0.0
    %5899 = vst [vmem:[#allocation2] sm:$0xff] %v5897
    %5900 = vst [vmem:[#allocation2 + $0x8] sm:$0xff] %v5898
    // Predicated region
    $region26: #{tpu_custom_call.1} parent=1 // pred_check
      _
    $region27: #{tpu_custom_call.1} parent=1 // pred_check_branch
      %5902 = sbr.rel (0) target = $region29
    $region28: #{tpu_custom_call.1} parent=1 // pred_region
      %s5904 = ssub.s32 256, 256
      %5905 = vsyncadd [#allocation3], %s5904
      %s5907 = sshll.u32 [#allocation2], 4
      %s5908 = int_to_ptr.vmem [resolvable:$true] %s5907
      %5910 = dma.vmem_to_hbm [thread:$0]  %s5908, 256, %s6, [#allocation3]
    $region29: #{tpu_custom_call.1} parent=1 // pred_fallthru
      _
    // Predicated region
    $region30: #{tpu_custom_call.1} parent=1 // pred_check
      _
    $region31: #{tpu_custom_call.1} parent=1 // pred_check_branch
      %5912 = sbr.rel (0) target = $region33
    $region32: #{tpu_custom_call.1} parent=1 // pred_region
      %5913 = dma.done [#allocation3], 256
    $region33: #{tpu_custom_call.1} parent=1 // pred_fallthru
      _
    %5914 = vsyncpa [#allocation3], 1

</llo_original>
